<compile_context>
chip_gen: v7x
topology: tpu7x:2x2x1
jax: 0.10.0
libtpu: 0.0.40
codegen_flags: <defaults>
</compile_context>

<pallas_src>
import functools

import jax
import jax.numpy as jnp
from jax.experimental import pallas as pl
from jax.experimental.pallas import tpu as pltpu


def _reflection_pad3d_kernel(x_ref, o_ref, *, pads):
    """x_ref: (Bt, D, H, W) VMEM block ; o_ref: (Bt, Do, Ho, Wo) VMEM block.

    Output is assembled in place with static-slice loads/stores only:
      1) bulk interior store
      2) W (lane) borders inside the D/H interior band, copied from x_ref
      3) H (sublane) borders across full padded W, read back from o_ref
      4) D borders as whole already-padded (Ho, Wo) planes, read back from o_ref
    Reflection map (torch / canonical): left plane j <- input plane (1+j),
    right plane j <- input plane (size-2-j).
    """
    _, D, H, W = x_ref.shape
    (pdl, pdr), (phl, phr), (pwl, pwr) = pads

    # 1) interior: one bulk store.
    o_ref[:, pdl:pdl + D, phl:phl + H, pwl:pwl + W] = x_ref[...]

    # 2) W (lane) borders within the D/H interior band.
    for j in range(pwl):
        o_ref[:, pdl:pdl + D, phl:phl + H, pwl - 1 - j:pwl - j] = \
            x_ref[:, :, :, 1 + j:2 + j]
    for j in range(pwr):
        o_ref[:, pdl:pdl + D, phl:phl + H, pwl + W + j:pwl + W + j + 1] = \
            x_ref[:, :, :, W - 2 - j:W - 1 - j]

    # 3) H (sublane) borders across the full padded width — source rows are
    #    already fully W-padded interior rows of the output block.
    for j in range(phl):
        o_ref[:, pdl:pdl + D, phl - 1 - j:phl - j, :] = \
            o_ref[:, pdl:pdl + D, phl + 1 + j:phl + 2 + j, :]
    for j in range(phr):
        o_ref[:, pdl:pdl + D, phl + H + j:phl + H + j + 1, :] = \
            o_ref[:, pdl:pdl + D, phl + H - 2 - j:phl + H - 1 - j, :]

    # 4) D borders: whole already-padded (Ho, Wo) planes.
    for j in range(pdl):
        o_ref[:, pdl - 1 - j:pdl - j, :, :] = \
            o_ref[:, pdl + 1 + j:pdl + 2 + j, :, :]
    for j in range(pdr):
        o_ref[:, pdl + D + j:pdl + D + j + 1, :, :] = \
            o_ref[:, pdl + D - 2 - j:pdl + D - 1 - j, :, :]


def _choose_batch_tile(B, bytes_per_volume):
    """Largest divisor of B whose (in+out) block fits a ~12 MiB budget, so the
    double-buffered working set stays under the 32 MiB VMEM limit we request
    (safe on v7x's 64 MiB physical VMEM as well). Prefer >=2 grid steps (two
    TensorCores on v7x) only when each step would still move >= ~1 MiB."""
    budget = 12 * 1024 * 1024
    target = 1 * 1024 * 1024
    divisors = sorted({d for i in range(1, int(B ** 0.5) + 1) if B % i == 0
                       for d in (i, B // i)})
    fit = [d for d in divisors if d * bytes_per_volume <= budget] or [1]
    bt = fit[-1]
    if bt == B and B > 1:
        smaller = [d for d in fit if d < B]
        if smaller and smaller[-1] * bytes_per_volume >= target:
            bt = smaller[-1]
    return bt


def reflection_pad3d(x, padding, *, batch_tile=None):
    """ReflectionPad3d forward. x: (N, C, D, H, W). padding: int or 6-tuple
    ordered (W_l, W_r, H_l, H_r, D_l, D_r) — torch's _ntuple(6) convention."""
    if isinstance(padding, int):
        pad = (padding,) * 6
    else:
        pad = tuple(padding)
        assert len(pad) == 6
    # pad pairs in (D, H, W) order, i.e. pad_tup[::-1] from the torch code.
    pads = ((pad[4], pad[5]), (pad[2], pad[3]), (pad[0], pad[1]))

    N, C, D, H, W = x.shape
    # Reflection requires pad < size on every padded axis.
    for (lo, hi), size, name in zip(pads, (D, H, W), "DHW"):
        assert lo >= 0 and hi >= 0, f"negative pad on axis {name}"
        assert lo < size and hi < size, (
            f"reflection pad must be < input size on axis {name}: "
            f"pad=({lo},{hi}), size={size}")

    Do = D + pads[0][0] + pads[0][1]
    Ho = H + pads[1][0] + pads[1][1]
    Wo = W + pads[2][0] + pads[2][1]
    B = N * C
    x_flat = x.reshape(B, D, H, W)

    itemsize = jnp.dtype(x.dtype).itemsize
    bytes_per_volume = (D * H * W + Do * Ho * Wo) * itemsize
    if batch_tile is None:
        Bt = _choose_batch_tile(B, bytes_per_volume)
    else:
        Bt = int(batch_tile)
        assert B % Bt == 0, "batch_tile must divide N*C"
    grid = (B // Bt,)

    # 32 MiB raises v5e's 16 MiB scoped default and matches v6e/v7x defaults;
    # only exceed it if a single volume is so large that Bt=1 needs more.
    tile_bytes = Bt * bytes_per_volume
    vmem_limit = max(32 * 1024 * 1024, int(2.5 * tile_bytes))

    kernel = functools.partial(_reflection_pad3d_kernel, pads=pads)
    out = pl.pallas_call(
        kernel,
        out_shape=jax.ShapeDtypeStruct((B, Do, Ho, Wo), x.dtype),
        grid=grid,
        # Last two block dims equal the full array dims -> (8,128) rule holds.
        in_specs=[pl.BlockSpec((Bt, D, H, W), lambda b: (b, 0, 0, 0))],
        out_specs=pl.BlockSpec((Bt, Do, Ho, Wo), lambda b: (b, 0, 0, 0)),
        compiler_params=pltpu.CompilerParams(
            dimension_semantics=("parallel",),
            vmem_limit_bytes=vmem_limit),
        cost_estimate=pl.CostEstimate(
            flops=0, transcendentals=0,
            bytes_accessed=B * bytes_per_volume),
    )(x_flat)
    return out.reshape(N, C, Do, Ho, Wo)


if __name__ == "__main__":
    key = jax.random.PRNGKey(0)

    def check(x, padding, **kw):
        out = jax.block_until_ready(reflection_pad3d(x, padding, **kw))
        p = (padding,) * 6 if isinstance(padding, int) else tuple(padding)
        ref = jnp.pad(
            x,
            ((0, 0), (0, 0), (p[4], p[5]), (p[2], p[3]), (p[0], p[1])),
            mode="reflect")
        assert out.shape == ref.shape, (out.shape, ref.shape)
        assert out.dtype == x.dtype
        assert jnp.allclose(out, ref), "mismatch vs reference reflection pad"

    # Case 1: EdgeGenerator-style ReflectionPad3d(3) on a small NCDHW input.
    N, C, D, H, W = 2, 4, 8, 8, 8
    x = jax.random.normal(key, (N, C, D, H, W), dtype=jnp.float32)
    check(x, 3)                    # auto batch tile (single large block)
    check(x, 1, batch_tile=2)      # forced multi-step grid (4 steps)

    # Case 2: non-cubic volume, ResnetBlock-style ReflectionPad3d(2).
    x2 = jax.random.normal(jax.random.PRNGKey(0), (1, 3, 6, 8, 10),
                           dtype=jnp.float32)
    check(x2, 2, batch_tile=1)     # 3 grid steps

    print("KERNEL_OK")
</pallas_src>

<mosaic_0001>
module attributes {stable_mosaic.version = 11 : i64} {
  func.func @_reflection_pad3d_kernel(%arg0: i32, %arg1: memref<8x8x8x8xf32, #tpu.memory_space<vmem>>, %arg2: memref<8x14x14x14xf32, #tpu.memory_space<vmem>>) attributes {dimension_semantics = [#tpu.dimension_semantics<parallel>], iteration_bounds = array<i64: 1>, scalar_prefetch = 0 : i64, scratch_operands = 0 : i64, tpu.core_type = #tpu.core_type<tc>, window_params = [{transform_indices = @transform_0, window_bounds = array<i64: 8, 8, 8, 8>}, {transform_indices = @transform_1, window_bounds = array<i64: 8, 14, 14, 14>}]} {
    %c0 = arith.constant 0 : index
    %c0_0 = arith.constant 0 : index
    %c0_1 = arith.constant 0 : index
    %c0_2 = arith.constant 0 : index
    %0 = vector.load %arg1[%c0, %c0_0, %c0_1, %c0_2] : memref<8x8x8x8xf32, #tpu.memory_space<vmem>>, vector<8x8x8x8xf32>
    %c0_3 = arith.constant 0 : index
    %c3 = arith.constant 3 : index
    %c3_4 = arith.constant 3 : index
    %c3_5 = arith.constant 3 : index
    %1 = vector.load %arg2[%c0_3, %c3, %c3_4, %c3_5] : memref<8x14x14x14xf32, #tpu.memory_space<vmem>>, vector<8x8x8x8xf32>
    tpu.vector_store %arg2[%c0_3, %c3, %c3_4, %c3_5], %0 {strides = array<i32>} : memref<8x14x14x14xf32, #tpu.memory_space<vmem>>, vector<8x8x8x8xf32>,
    %c0_6 = arith.constant 0 : index
    %c0_7 = arith.constant 0 : index
    %c0_8 = arith.constant 0 : index
    %c1 = arith.constant 1 : index
    %2 = vector.load %arg1[%c0_6, %c0_7, %c0_8, %c1] : memref<8x8x8x8xf32, #tpu.memory_space<vmem>>, vector<8x8x8x1xf32>
    %c0_9 = arith.constant 0 : index
    %c3_10 = arith.constant 3 : index
    %c3_11 = arith.constant 3 : index
    %c2 = arith.constant 2 : index
    %3 = vector.load %arg2[%c0_9, %c3_10, %c3_11, %c2] : memref<8x14x14x14xf32, #tpu.memory_space<vmem>>, vector<8x8x8x1xf32>
    tpu.vector_store %arg2[%c0_9, %c3_10, %c3_11, %c2], %2 {strides = array<i32>} : memref<8x14x14x14xf32, #tpu.memory_space<vmem>>, vector<8x8x8x1xf32>,
    %c0_12 = arith.constant 0 : index
    %c0_13 = arith.constant 0 : index
    %c0_14 = arith.constant 0 : index
    %c2_15 = arith.constant 2 : index
    %4 = vector.load %arg1[%c0_12, %c0_13, %c0_14, %c2_15] : memref<8x8x8x8xf32, #tpu.memory_space<vmem>>, vector<8x8x8x1xf32>
    %c0_16 = arith.constant 0 : index
    %c3_17 = arith.constant 3 : index
    %c3_18 = arith.constant 3 : index
    %c1_19 = arith.constant 1 : index
    %5 = vector.load %arg2[%c0_16, %c3_17, %c3_18, %c1_19] : memref<8x14x14x14xf32, #tpu.memory_space<vmem>>, vector<8x8x8x1xf32>
    tpu.vector_store %arg2[%c0_16, %c3_17, %c3_18, %c1_19], %4 {strides = array<i32>} : memref<8x14x14x14xf32, #tpu.memory_space<vmem>>, vector<8x8x8x1xf32>,
    %c0_20 = arith.constant 0 : index
    %c0_21 = arith.constant 0 : index
    %c0_22 = arith.constant 0 : index
    %c3_23 = arith.constant 3 : index
    %6 = vector.load %arg1[%c0_20, %c0_21, %c0_22, %c3_23] : memref<8x8x8x8xf32, #tpu.memory_space<vmem>>, vector<8x8x8x1xf32>
    %c0_24 = arith.constant 0 : index
    %c3_25 = arith.constant 3 : index
    %c3_26 = arith.constant 3 : index
    %c0_27 = arith.constant 0 : index
    %7 = vector.load %arg2[%c0_24, %c3_25, %c3_26, %c0_27] : memref<8x14x14x14xf32, #tpu.memory_space<vmem>>, vector<8x8x8x1xf32>
    tpu.vector_store %arg2[%c0_24, %c3_25, %c3_26, %c0_27], %6 {strides = array<i32>} : memref<8x14x14x14xf32, #tpu.memory_space<vmem>>, vector<8x8x8x1xf32>,
    %c0_28 = arith.constant 0 : index
    %c0_29 = arith.constant 0 : index
    %c0_30 = arith.constant 0 : index
    %c6 = arith.constant 6 : index
    %8 = vector.load %arg1[%c0_28, %c0_29, %c0_30, %c6] : memref<8x8x8x8xf32, #tpu.memory_space<vmem>>, vector<8x8x8x1xf32>
    %c0_31 = arith.constant 0 : index
    %c3_32 = arith.constant 3 : index
    %c3_33 = arith.constant 3 : index
    %c11 = arith.constant 11 : index
    %9 = vector.load %arg2[%c0_31, %c3_32, %c3_33, %c11] : memref<8x14x14x14xf32, #tpu.memory_space<vmem>>, vector<8x8x8x1xf32>
    tpu.vector_store %arg2[%c0_31, %c3_32, %c3_33, %c11], %8 {strides = array<i32>} : memref<8x14x14x14xf32, #tpu.memory_space<vmem>>, vector<8x8x8x1xf32>,
    %c0_34 = arith.constant 0 : index
    %c0_35 = arith.constant 0 : index
    %c0_36 = arith.constant 0 : index
    %c5 = arith.constant 5 : index
    %10 = vector.load %arg1[%c0_34, %c0_35, %c0_36, %c5] : memref<8x8x8x8xf32, #tpu.memory_space<vmem>>, vector<8x8x8x1xf32>
    %c0_37 = arith.constant 0 : index
    %c3_38 = arith.constant 3 : index
    %c3_39 = arith.constant 3 : index
    %c12 = arith.constant 12 : index
    %11 = vector.load %arg2[%c0_37, %c3_38, %c3_39, %c12] : memref<8x14x14x14xf32, #tpu.memory_space<vmem>>, vector<8x8x8x1xf32>
    tpu.vector_store %arg2[%c0_37, %c3_38, %c3_39, %c12], %10 {strides = array<i32>} : memref<8x14x14x14xf32, #tpu.memory_space<vmem>>, vector<8x8x8x1xf32>,
    %c0_40 = arith.constant 0 : index
    %c0_41 = arith.constant 0 : index
    %c0_42 = arith.constant 0 : index
    %c4 = arith.constant 4 : index
    %12 = vector.load %arg1[%c0_40, %c0_41, %c0_42, %c4] : memref<8x8x8x8xf32, #tpu.memory_space<vmem>>, vector<8x8x8x1xf32>
    %c0_43 = arith.constant 0 : index
    %c3_44 = arith.constant 3 : index
    %c3_45 = arith.constant 3 : index
    %c13 = arith.constant 13 : index
    %13 = vector.load %arg2[%c0_43, %c3_44, %c3_45, %c13] : memref<8x14x14x14xf32, #tpu.memory_space<vmem>>, vector<8x8x8x1xf32>
    tpu.vector_store %arg2[%c0_43, %c3_44, %c3_45, %c13], %12 {strides = array<i32>} : memref<8x14x14x14xf32, #tpu.memory_space<vmem>>, vector<8x8x8x1xf32>,
    %c0_46 = arith.constant 0 : index
    %c3_47 = arith.constant 3 : index
    %c4_48 = arith.constant 4 : index
    %c0_49 = arith.constant 0 : index
    %14 = vector.load %arg2[%c0_46, %c3_47, %c4_48, %c0_49] : memref<8x14x14x14xf32, #tpu.memory_space<vmem>>, vector<8x8x1x14xf32>
    %c0_50 = arith.constant 0 : index
    %c3_51 = arith.constant 3 : index
    %c2_52 = arith.constant 2 : index
    %c0_53 = arith.constant 0 : index
    %15 = vector.load %arg2[%c0_50, %c3_51, %c2_52, %c0_53] : memref<8x14x14x14xf32, #tpu.memory_space<vmem>>, vector<8x8x1x14xf32>
    tpu.vector_store %arg2[%c0_50, %c3_51, %c2_52, %c0_53], %14 {strides = array<i32>} : memref<8x14x14x14xf32, #tpu.memory_space<vmem>>, vector<8x8x1x14xf32>,
    %c0_54 = arith.constant 0 : index
    %c3_55 = arith.constant 3 : index
    %c5_56 = arith.constant 5 : index
    %c0_57 = arith.constant 0 : index
    %16 = vector.load %arg2[%c0_54, %c3_55, %c5_56, %c0_57] : memref<8x14x14x14xf32, #tpu.memory_space<vmem>>, vector<8x8x1x14xf32>
    %c0_58 = arith.constant 0 : index
    %c3_59 = arith.constant 3 : index
    %c1_60 = arith.constant 1 : index
    %c0_61 = arith.constant 0 : index
    %17 = vector.load %arg2[%c0_58, %c3_59, %c1_60, %c0_61] : memref<8x14x14x14xf32, #tpu.memory_space<vmem>>, vector<8x8x1x14xf32>
    tpu.vector_store %arg2[%c0_58, %c3_59, %c1_60, %c0_61], %16 {strides = array<i32>} : memref<8x14x14x14xf32, #tpu.memory_space<vmem>>, vector<8x8x1x14xf32>,
    %c0_62 = arith.constant 0 : index
    %c3_63 = arith.constant 3 : index
    %c6_64 = arith.constant 6 : index
    %c0_65 = arith.constant 0 : index
    %18 = vector.load %arg2[%c0_62, %c3_63, %c6_64, %c0_65] : memref<8x14x14x14xf32, #tpu.memory_space<vmem>>, vector<8x8x1x14xf32>
    %c0_66 = arith.constant 0 : index
    %c3_67 = arith.constant 3 : index
    %c0_68 = arith.constant 0 : index
    %c0_69 = arith.constant 0 : index
    %19 = vector.load %arg2[%c0_66, %c3_67, %c0_68, %c0_69] : memref<8x14x14x14xf32, #tpu.memory_space<vmem>>, vector<8x8x1x14xf32>
    tpu.vector_store %arg2[%c0_66, %c3_67, %c0_68, %c0_69], %18 {strides = array<i32>} : memref<8x14x14x14xf32, #tpu.memory_space<vmem>>, vector<8x8x1x14xf32>,
    %c0_70 = arith.constant 0 : index
    %c3_71 = arith.constant 3 : index
    %c9 = arith.constant 9 : index
    %c0_72 = arith.constant 0 : index
    %20 = vector.load %arg2[%c0_70, %c3_71, %c9, %c0_72] : memref<8x14x14x14xf32, #tpu.memory_space<vmem>>, vector<8x8x1x14xf32>
    %c0_73 = arith.constant 0 : index
    %c3_74 = arith.constant 3 : index
    %c11_75 = arith.constant 11 : index
    %c0_76 = arith.constant 0 : index
    %21 = vector.load %arg2[%c0_73, %c3_74, %c11_75, %c0_76] : memref<8x14x14x14xf32, #tpu.memory_space<vmem>>, vector<8x8x1x14xf32>
    tpu.vector_store %arg2[%c0_73, %c3_74, %c11_75, %c0_76], %20 {strides = array<i32>} : memref<8x14x14x14xf32, #tpu.memory_space<vmem>>, vector<8x8x1x14xf32>,
    %c0_77 = arith.constant 0 : index
    %c3_78 = arith.constant 3 : index
    %c8 = arith.constant 8 : index
    %c0_79 = arith.constant 0 : index
    %22 = vector.load %arg2[%c0_77, %c3_78, %c8, %c0_79] : memref<8x14x14x14xf32, #tpu.memory_space<vmem>>, vector<8x8x1x14xf32>
    %c0_80 = arith.constant 0 : index
    %c3_81 = arith.constant 3 : index
    %c12_82 = arith.constant 12 : index
    %c0_83 = arith.constant 0 : index
    %23 = vector.load %arg2[%c0_80, %c3_81, %c12_82, %c0_83] : memref<8x14x14x14xf32, #tpu.memory_space<vmem>>, vector<8x8x1x14xf32>
    tpu.vector_store %arg2[%c0_80, %c3_81, %c12_82, %c0_83], %22 {strides = array<i32>} : memref<8x14x14x14xf32, #tpu.memory_space<vmem>>, vector<8x8x1x14xf32>,
    %c0_84 = arith.constant 0 : index
    %c3_85 = arith.constant 3 : index
    %c7 = arith.constant 7 : index
    %c0_86 = arith.constant 0 : index
    %24 = vector.load %arg2[%c0_84, %c3_85, %c7, %c0_86] : memref<8x14x14x14xf32, #tpu.memory_space<vmem>>, vector<8x8x1x14xf32>
    %c0_87 = arith.constant 0 : index
    %c3_88 = arith.constant 3 : index
    %c13_89 = arith.constant 13 : index
    %c0_90 = arith.constant 0 : index
    %25 = vector.load %arg2[%c0_87, %c3_88, %c13_89, %c0_90] : memref<8x14x14x14xf32, #tpu.memory_space<vmem>>, vector<8x8x1x14xf32>
    tpu.vector_store %arg2[%c0_87, %c3_88, %c13_89, %c0_90], %24 {strides = array<i32>} : memref<8x14x14x14xf32, #tpu.memory_space<vmem>>, vector<8x8x1x14xf32>,
    %c0_91 = arith.constant 0 : index
    %c4_92 = arith.constant 4 : index
    %c0_93 = arith.constant 0 : index
    %c0_94 = arith.constant 0 : index
    %26 = vector.load %arg2[%c0_91, %c4_92, %c0_93, %c0_94] : memref<8x14x14x14xf32, #tpu.memory_space<vmem>>, vector<8x1x14x14xf32>
    %c0_95 = arith.constant 0 : index
    %c2_96 = arith.constant 2 : index
    %c0_97 = arith.constant 0 : index
    %c0_98 = arith.constant 0 : index
    %27 = vector.load %arg2[%c0_95, %c2_96, %c0_97, %c0_98] : memref<8x14x14x14xf32, #tpu.memory_space<vmem>>, vector<8x1x14x14xf32>
    tpu.vector_store %arg2[%c0_95, %c2_96, %c0_97, %c0_98], %26 {strides = array<i32>} : memref<8x14x14x14xf32, #tpu.memory_space<vmem>>, vector<8x1x14x14xf32>,
    %c0_99 = arith.constant 0 : index
    %c5_100 = arith.constant 5 : index
    %c0_101 = arith.constant 0 : index
    %c0_102 = arith.constant 0 : index
    %28 = vector.load %arg2[%c0_99, %c5_100, %c0_101, %c0_102] : memref<8x14x14x14xf32, #tpu.memory_space<vmem>>, vector<8x1x14x14xf32>
    %c0_103 = arith.constant 0 : index
    %c1_104 = arith.constant 1 : index
    %c0_105 = arith.constant 0 : index
    %c0_106 = arith.constant 0 : index
    %29 = vector.load %arg2[%c0_103, %c1_104, %c0_105, %c0_106] : memref<8x14x14x14xf32, #tpu.memory_space<vmem>>, vector<8x1x14x14xf32>
    tpu.vector_store %arg2[%c0_103, %c1_104, %c0_105, %c0_106], %28 {strides = array<i32>} : memref<8x14x14x14xf32, #tpu.memory_space<vmem>>, vector<8x1x14x14xf32>,
    %c0_107 = arith.constant 0 : index
    %c6_108 = arith.constant 6 : index
    %c0_109 = arith.constant 0 : index
    %c0_110 = arith.constant 0 : index
    %30 = vector.load %arg2[%c0_107, %c6_108, %c0_109, %c0_110] : memref<8x14x14x14xf32, #tpu.memory_space<vmem>>, vector<8x1x14x14xf32>
    %c0_111 = arith.constant 0 : index
    %c0_112 = arith.constant 0 : index
    %c0_113 = arith.constant 0 : index
    %c0_114 = arith.constant 0 : index
    %31 = vector.load %arg2[%c0_111, %c0_112, %c0_113, %c0_114] : memref<8x14x14x14xf32, #tpu.memory_space<vmem>>, vector<8x1x14x14xf32>
    tpu.vector_store %arg2[%c0_111, %c0_112, %c0_113, %c0_114], %30 {strides = array<i32>} : memref<8x14x14x14xf32, #tpu.memory_space<vmem>>, vector<8x1x14x14xf32>,
    %c0_115 = arith.constant 0 : index
    %c9_116 = arith.constant 9 : index
    %c0_117 = arith.constant 0 : index
    %c0_118 = arith.constant 0 : index
    %32 = vector.load %arg2[%c0_115, %c9_116, %c0_117, %c0_118] : memref<8x14x14x14xf32, #tpu.memory_space<vmem>>, vector<8x1x14x14xf32>
    %c0_119 = arith.constant 0 : index
    %c11_120 = arith.constant 11 : index
    %c0_121 = arith.constant 0 : index
    %c0_122 = arith.constant 0 : index
    %33 = vector.load %arg2[%c0_119, %c11_120, %c0_121, %c0_122] : memref<8x14x14x14xf32, #tpu.memory_space<vmem>>, vector<8x1x14x14xf32>
    tpu.vector_store %arg2[%c0_119, %c11_120, %c0_121, %c0_122], %32 {strides = array<i32>} : memref<8x14x14x14xf32, #tpu.memory_space<vmem>>, vector<8x1x14x14xf32>,
    %c0_123 = arith.constant 0 : index
    %c8_124 = arith.constant 8 : index
    %c0_125 = arith.constant 0 : index
    %c0_126 = arith.constant 0 : index
    %34 = vector.load %arg2[%c0_123, %c8_124, %c0_125, %c0_126] : memref<8x14x14x14xf32, #tpu.memory_space<vmem>>, vector<8x1x14x14xf32>
    %c0_127 = arith.constant 0 : index
    %c12_128 = arith.constant 12 : index
    %c0_129 = arith.constant 0 : index
    %c0_130 = arith.constant 0 : index
    %35 = vector.load %arg2[%c0_127, %c12_128, %c0_129, %c0_130] : memref<8x14x14x14xf32, #tpu.memory_space<vmem>>, vector<8x1x14x14xf32>
    tpu.vector_store %arg2[%c0_127, %c12_128, %c0_129, %c0_130], %34 {strides = array<i32>} : memref<8x14x14x14xf32, #tpu.memory_space<vmem>>, vector<8x1x14x14xf32>,
    %c0_131 = arith.constant 0 : index
    %c7_132 = arith.constant 7 : index
    %c0_133 = arith.constant 0 : index
    %c0_134 = arith.constant 0 : index
    %36 = vector.load %arg2[%c0_131, %c7_132, %c0_133, %c0_134] : memref<8x14x14x14xf32, #tpu.memory_space<vmem>>, vector<8x1x14x14xf32>
    %c0_135 = arith.constant 0 : index
    %c13_136 = arith.constant 13 : index
    %c0_137 = arith.constant 0 : index
    %c0_138 = arith.constant 0 : index
    %37 = vector.load %arg2[%c0_135, %c13_136, %c0_137, %c0_138] : memref<8x14x14x14xf32, #tpu.memory_space<vmem>>, vector<8x1x14x14xf32>
    tpu.vector_store %arg2[%c0_135, %c13_136, %c0_137, %c0_138], %36 {strides = array<i32>} : memref<8x14x14x14xf32, #tpu.memory_space<vmem>>, vector<8x1x14x14xf32>,
    return
  }
  func.func @transform_0(%arg0: i32) -> (i32, i32, i32, i32) {
    %c0_i32 = arith.constant 0 : i32
    %c0_i32_0 = arith.constant 0 : i32
    %c0_i32_1 = arith.constant 0 : i32
    %c0_i32_2 = arith.constant 0 : i32
    return %arg0, %c0_i32, %c0_i32_0, %c0_i32_1 : i32, i32, i32, i32
  }
  func.func @transform_1(%arg0: i32) -> (i32, i32, i32, i32) {
    %c0_i32 = arith.constant 0 : i32
    %c0_i32_0 = arith.constant 0 : i32
    %c0_i32_1 = arith.constant 0 : i32
    %c0_i32_2 = arith.constant 0 : i32
    return %arg0, %c0_i32, %c0_i32_0, %c0_i32_1 : i32, i32, i32, i32
  }
}

</mosaic_0001>

<llo_original>
// kernel: tpu_custom_call.1
$region0: #{tpu_custom_call.1}
  #allocation0 [shape = 'u32[]', space=smem, size = 0x4, offset = 0x4, fixed_abs, tag = 'smem constant byte address 0x4 - core index']
  #allocation1 [shape = 'u32[144,128]{1,0:T(1,128)}', space=vmem, size = 0x12000, scoped, tag = 'internal scratch']
  %s0 = inlined_call_operand.hbm [shape: f32[8,8,8,8], index: 0, kind: input, shape index: {}]
  %s1 = inlined_call_operand.vmem [shape: f32[8,14,14,14], index: 1, kind: output, shape index: {}]
  %s2 = sld [smem:[#allocation0]]
  $region18: #{tpu_custom_call.1} parent=0
    _
  %s4 = ssub.s32 1, %s2
  %s5 = scalar_select 0, %s4, %s2
  $region1: #{tpu_custom_call.1} parent=0
    #allocation2 [shape = 'u8[262144]{0}', space=vmem, size = 0x40000, scoped, tag = 'input window, operand 0, single buffered']
    #allocation3 [shape = 's32[1]{0}', space=sflag, size = 0x4, scoped, tag = 'scoped memory for tpu_custom_call.1']
    %6 = vsyncpa [#allocation3], 0
    // Predicated region
    $region2: #{tpu_custom_call.1} parent=1 // pred_check
      _
    $region3: #{tpu_custom_call.1} parent=1 // pred_check_branch
      %8 = sbr.rel (0) target = $region5
    $region4: #{tpu_custom_call.1} parent=1 // pred_region
      %s10 = ssub.s32 8192, 8192
      %11 = vsyncadd [#allocation3], %s10
      %s12 = sshll.u32 [#allocation2], 4
      %s13 = int_to_ptr.vmem [resolvable:$true] %s12
      %18 = dma.hbm_to_vmem [thread:$0]  %s0, 8192, %s13, [#allocation3], 128, 128, 8
    $region5: #{tpu_custom_call.1} parent=1 // pred_fallthru
      _
    // Predicated region
    $region6: #{tpu_custom_call.1} parent=1 // pred_check
      _
    $region7: #{tpu_custom_call.1} parent=1 // pred_check_branch
      %20 = sbr.rel (0) target = $region9
    $region8: #{tpu_custom_call.1} parent=1 // pred_region
      %21 = dma.done [#allocation3], 8192
    $region9: #{tpu_custom_call.1} parent=1 // pred_fallthru
      _
    %v22 = vld [vmem:[#allocation2] sm:$0xff]
    %v23 = vld [vmem:[#allocation2 + $0x8] sm:$0xff]
    %v24 = vld [vmem:[#allocation2 + $0x10] sm:$0xff]
    %v25 = vld [vmem:[#allocation2 + $0x18] sm:$0xff]
    %v26 = vld [vmem:[#allocation2 + $0x20] sm:$0xff]
    %v27 = vld [vmem:[#allocation2 + $0x28] sm:$0xff]
    %v28 = vld [vmem:[#allocation2 + $0x30] sm:$0xff]
    %v29 = vld [vmem:[#allocation2 + $0x38] sm:$0xff]
    %v30 = vld [vmem:[#allocation2 + $0x40] sm:$0xff]
    %v31 = vld [vmem:[#allocation2 + $0x48] sm:$0xff]
    %v32 = vld [vmem:[#allocation2 + $0x50] sm:$0xff]
    %v33 = vld [vmem:[#allocation2 + $0x58] sm:$0xff]
    %v34 = vld [vmem:[#allocation2 + $0x60] sm:$0xff]
    %v35 = vld [vmem:[#allocation2 + $0x68] sm:$0xff]
    %v36 = vld [vmem:[#allocation2 + $0x70] sm:$0xff]
    %v37 = vld [vmem:[#allocation2 + $0x78] sm:$0xff]
    %v38 = vld [vmem:[#allocation2 + $0x80] sm:$0xff]
    %v39 = vld [vmem:[#allocation2 + $0x88] sm:$0xff]
    %v40 = vld [vmem:[#allocation2 + $0x90] sm:$0xff]
    %v41 = vld [vmem:[#allocation2 + $0x98] sm:$0xff]
    %v42 = vld [vmem:[#allocation2 + $0xa0] sm:$0xff]
    %v43 = vld [vmem:[#allocation2 + $0xa8] sm:$0xff]
    %v44 = vld [vmem:[#allocation2 + $0xb0] sm:$0xff]
    %v45 = vld [vmem:[#allocation2 + $0xb8] sm:$0xff]
    %v46 = vld [vmem:[#allocation2 + $0xc0] sm:$0xff]
    %v47 = vld [vmem:[#allocation2 + $0xc8] sm:$0xff]
    %v48 = vld [vmem:[#allocation2 + $0xd0] sm:$0xff]
    %v49 = vld [vmem:[#allocation2 + $0xd8] sm:$0xff]
    %v50 = vld [vmem:[#allocation2 + $0xe0] sm:$0xff]
    %v51 = vld [vmem:[#allocation2 + $0xe8] sm:$0xff]
    %v52 = vld [vmem:[#allocation2 + $0xf0] sm:$0xff]
    %v53 = vld [vmem:[#allocation2 + $0xf8] sm:$0xff]
    %v54 = vld [vmem:[#allocation2 + $0x100] sm:$0xff]
    %v55 = vld [vmem:[#allocation2 + $0x108] sm:$0xff]
    %v56 = vld [vmem:[#allocation2 + $0x110] sm:$0xff]
    %v57 = vld [vmem:[#allocation2 + $0x118] sm:$0xff]
    %v58 = vld [vmem:[#allocation2 + $0x120] sm:$0xff]
    %v59 = vld [vmem:[#allocation2 + $0x128] sm:$0xff]
    %v60 = vld [vmem:[#allocation2 + $0x130] sm:$0xff]
    %v61 = vld [vmem:[#allocation2 + $0x138] sm:$0xff]
    %v62 = vld [vmem:[#allocation2 + $0x140] sm:$0xff]
    %v63 = vld [vmem:[#allocation2 + $0x148] sm:$0xff]
    %v64 = vld [vmem:[#allocation2 + $0x150] sm:$0xff]
    %v65 = vld [vmem:[#allocation2 + $0x158] sm:$0xff]
    %v66 = vld [vmem:[#allocation2 + $0x160] sm:$0xff]
    %v67 = vld [vmem:[#allocation2 + $0x168] sm:$0xff]
    %v68 = vld [vmem:[#allocation2 + $0x170] sm:$0xff]
    %v69 = vld [vmem:[#allocation2 + $0x178] sm:$0xff]
    %v70 = vld [vmem:[#allocation2 + $0x180] sm:$0xff]
    %v71 = vld [vmem:[#allocation2 + $0x188] sm:$0xff]
    %v72 = vld [vmem:[#allocation2 + $0x190] sm:$0xff]
    %v73 = vld [vmem:[#allocation2 + $0x198] sm:$0xff]
    %v74 = vld [vmem:[#allocation2 + $0x1a0] sm:$0xff]
    %v75 = vld [vmem:[#allocation2 + $0x1a8] sm:$0xff]
    %v76 = vld [vmem:[#allocation2 + $0x1b0] sm:$0xff]
    %v77 = vld [vmem:[#allocation2 + $0x1b8] sm:$0xff]
    %v78 = vld [vmem:[#allocation2 + $0x1c0] sm:$0xff]
    %v79 = vld [vmem:[#allocation2 + $0x1c8] sm:$0xff]
    %v80 = vld [vmem:[#allocation2 + $0x1d0] sm:$0xff]
    %v81 = vld [vmem:[#allocation2 + $0x1d8] sm:$0xff]
    %v82 = vld [vmem:[#allocation2 + $0x1e0] sm:$0xff]
    %v83 = vld [vmem:[#allocation2 + $0x1e8] sm:$0xff]
    %v84 = vld [vmem:[#allocation2 + $0x1f0] sm:$0xff]
    %v85 = vld [vmem:[#allocation2 + $0x1f8] sm:$0xff]
    %150 = vrot.lane.b32.xlu0 %v22, 3
    %v151 = vpop.permute.xlu0 %150
    %152 = vrot.lane.b32.xlu0 %v23, 3
    %v153 = vpop.permute.xlu0 %152
    %154 = vrot.lane.b32.xlu0 %v24, 3
    %v155 = vpop.permute.xlu0 %154
    %156 = vrot.lane.b32.xlu0 %v25, 3
    %v157 = vpop.permute.xlu0 %156
    %158 = vrot.lane.b32.xlu0 %v26, 3
    %v159 = vpop.permute.xlu0 %158
    %160 = vrot.lane.b32.xlu0 %v27, 3
    %v161 = vpop.permute.xlu0 %160
    %162 = vrot.lane.b32.xlu0 %v28, 3
    %v163 = vpop.permute.xlu0 %162
    %164 = vrot.lane.b32.xlu0 %v29, 3
    %v165 = vpop.permute.xlu0 %164
    %166 = vrot.lane.b32.xlu0 %v30, 3
    %v167 = vpop.permute.xlu0 %166
    %168 = vrot.lane.b32.xlu0 %v31, 3
    %v169 = vpop.permute.xlu0 %168
    %170 = vrot.lane.b32.xlu0 %v32, 3
    %v171 = vpop.permute.xlu0 %170
    %172 = vrot.lane.b32.xlu0 %v33, 3
    %v173 = vpop.permute.xlu0 %172
    %174 = vrot.lane.b32.xlu0 %v34, 3
    %v175 = vpop.permute.xlu0 %174
    %176 = vrot.lane.b32.xlu0 %v35, 3
    %v177 = vpop.permute.xlu0 %176
    %178 = vrot.lane.b32.xlu0 %v36, 3
    %v179 = vpop.permute.xlu0 %178
    %180 = vrot.lane.b32.xlu0 %v37, 3
    %v181 = vpop.permute.xlu0 %180
    %182 = vrot.lane.b32.xlu0 %v38, 3
    %v183 = vpop.permute.xlu0 %182
    %184 = vrot.lane.b32.xlu0 %v39, 3
    %v185 = vpop.permute.xlu0 %184
    %186 = vrot.lane.b32.xlu0 %v40, 3
    %v187 = vpop.permute.xlu0 %186
    %188 = vrot.lane.b32.xlu0 %v41, 3
    %v189 = vpop.permute.xlu0 %188
    %190 = vrot.lane.b32.xlu0 %v42, 3
    %v191 = vpop.permute.xlu0 %190
    %192 = vrot.lane.b32.xlu0 %v43, 3
    %v193 = vpop.permute.xlu0 %192
    %194 = vrot.lane.b32.xlu0 %v44, 3
    %v195 = vpop.permute.xlu0 %194
    %196 = vrot.lane.b32.xlu0 %v45, 3
    %v197 = vpop.permute.xlu0 %196
    %198 = vrot.lane.b32.xlu0 %v46, 3
    %v199 = vpop.permute.xlu0 %198
    %200 = vrot.lane.b32.xlu0 %v47, 3
    %v201 = vpop.permute.xlu0 %200
    %202 = vrot.lane.b32.xlu0 %v48, 3
    %v203 = vpop.permute.xlu0 %202
    %204 = vrot.lane.b32.xlu0 %v49, 3
    %v205 = vpop.permute.xlu0 %204
    %206 = vrot.lane.b32.xlu0 %v50, 3
    %v207 = vpop.permute.xlu0 %206
    %208 = vrot.lane.b32.xlu0 %v51, 3
    %v209 = vpop.permute.xlu0 %208
    %210 = vrot.lane.b32.xlu0 %v52, 3
    %v211 = vpop.permute.xlu0 %210
    %212 = vrot.lane.b32.xlu0 %v53, 3
    %v213 = vpop.permute.xlu0 %212
    %214 = vrot.lane.b32.xlu0 %v54, 3
    %v215 = vpop.permute.xlu0 %214
    %216 = vrot.lane.b32.xlu0 %v55, 3
    %v217 = vpop.permute.xlu0 %216
    %218 = vrot.lane.b32.xlu0 %v56, 3
    %v219 = vpop.permute.xlu0 %218
    %220 = vrot.lane.b32.xlu0 %v57, 3
    %v221 = vpop.permute.xlu0 %220
    %222 = vrot.lane.b32.xlu0 %v58, 3
    %v223 = vpop.permute.xlu0 %222
    %224 = vrot.lane.b32.xlu0 %v59, 3
    %v225 = vpop.permute.xlu0 %224
    %226 = vrot.lane.b32.xlu0 %v60, 3
    %v227 = vpop.permute.xlu0 %226
    %228 = vrot.lane.b32.xlu0 %v61, 3
    %v229 = vpop.permute.xlu0 %228
    %230 = vrot.lane.b32.xlu0 %v62, 3
    %v231 = vpop.permute.xlu0 %230
    %232 = vrot.lane.b32.xlu0 %v63, 3
    %v233 = vpop.permute.xlu0 %232
    %234 = vrot.lane.b32.xlu0 %v64, 3
    %v235 = vpop.permute.xlu0 %234
    %236 = vrot.lane.b32.xlu0 %v65, 3
    %v237 = vpop.permute.xlu0 %236
    %238 = vrot.lane.b32.xlu0 %v66, 3
    %v239 = vpop.permute.xlu0 %238
    %240 = vrot.lane.b32.xlu0 %v67, 3
    %v241 = vpop.permute.xlu0 %240
    %242 = vrot.lane.b32.xlu0 %v68, 3
    %v243 = vpop.permute.xlu0 %242
    %244 = vrot.lane.b32.xlu0 %v69, 3
    %v245 = vpop.permute.xlu0 %244
    %246 = vrot.lane.b32.xlu0 %v70, 3
    %v247 = vpop.permute.xlu0 %246
    %248 = vrot.lane.b32.xlu0 %v71, 3
    %v249 = vpop.permute.xlu0 %248
    %250 = vrot.lane.b32.xlu0 %v72, 3
    %v251 = vpop.permute.xlu0 %250
    %252 = vrot.lane.b32.xlu0 %v73, 3
    %v253 = vpop.permute.xlu0 %252
    %254 = vrot.lane.b32.xlu0 %v74, 3
    %v255 = vpop.permute.xlu0 %254
    %256 = vrot.lane.b32.xlu0 %v75, 3
    %v257 = vpop.permute.xlu0 %256
    %258 = vrot.lane.b32.xlu0 %v76, 3
    %v259 = vpop.permute.xlu0 %258
    %260 = vrot.lane.b32.xlu0 %v77, 3
    %v261 = vpop.permute.xlu0 %260
    %262 = vrot.lane.b32.xlu0 %v78, 3
    %v263 = vpop.permute.xlu0 %262
    %264 = vrot.lane.b32.xlu0 %v79, 3
    %v265 = vpop.permute.xlu0 %264
    %266 = vrot.lane.b32.xlu0 %v80, 3
    %v267 = vpop.permute.xlu0 %266
    %268 = vrot.lane.b32.xlu0 %v81, 3
    %v269 = vpop.permute.xlu0 %268
    %270 = vrot.lane.b32.xlu0 %v82, 3
    %v271 = vpop.permute.xlu0 %270
    %272 = vrot.lane.b32.xlu0 %v83, 3
    %v273 = vpop.permute.xlu0 %272
    %274 = vrot.lane.b32.xlu0 %v84, 3
    %v275 = vpop.permute.xlu0 %274
    %276 = vrot.lane.b32.xlu0 %v85, 3
    %v277 = vpop.permute.xlu0 %276
    %s342 = scalar_lea.vmem %s1, 48
    %vm343 = vcmask 89112
    %344 = vst.msk [vmem:[%s342 + $0x3] sm:$0xff] %vm343, %v151
    %345 = vst.msk [vmem:[%s342 + $0x13] sm:$0xff] %vm343, %v153
    %346 = vst.msk [vmem:[%s342 + $0x23] sm:$0xff] %vm343, %v155
    %347 = vst.msk [vmem:[%s342 + $0x33] sm:$0xff] %vm343, %v157
    %348 = vst.msk [vmem:[%s342 + $0x43] sm:$0xff] %vm343, %v159
    %349 = vst.msk [vmem:[%s342 + $0x53] sm:$0xff] %vm343, %v161
    %350 = vst.msk [vmem:[%s342 + $0x63] sm:$0xff] %vm343, %v163
    %351 = vst.msk [vmem:[%s342 + $0x73] sm:$0xff] %vm343, %v165
    %352 = vst.msk [vmem:[%s342 + $0xe3] sm:$0xff] %vm343, %v167
    %353 = vst.msk [vmem:[%s342 + $0xf3] sm:$0xff] %vm343, %v169
    %354 = vst.msk [vmem:[%s342 + $0x103] sm:$0xff] %vm343, %v171
    %355 = vst.msk [vmem:[%s342 + $0x113] sm:$0xff] %vm343, %v173
    %356 = vst.msk [vmem:[%s342 + $0x123] sm:$0xff] %vm343, %v175
    %357 = vst.msk [vmem:[%s342 + $0x133] sm:$0xff] %vm343, %v177
    %358 = vst.msk [vmem:[%s342 + $0x143] sm:$0xff] %vm343, %v179
    %359 = vst.msk [vmem:[%s342 + $0x153] sm:$0xff] %vm343, %v181
    %360 = vst.msk [vmem:[%s342 + $0x1c3] sm:$0xff] %vm343, %v183
    %361 = vst.msk [vmem:[%s342 + $0x1d3] sm:$0xff] %vm343, %v185
    %362 = vst.msk [vmem:[%s342 + $0x1e3] sm:$0xff] %vm343, %v187
    %363 = vst.msk [vmem:[%s342 + $0x1f3] sm:$0xff] %vm343, %v189
    %364 = vst.msk [vmem:[%s342 + $0x203] sm:$0xff] %vm343, %v191
    %365 = vst.msk [vmem:[%s342 + $0x213] sm:$0xff] %vm343, %v193
    %366 = vst.msk [vmem:[%s342 + $0x223] sm:$0xff] %vm343, %v195
    %367 = vst.msk [vmem:[%s342 + $0x233] sm:$0xff] %vm343, %v197
    %368 = vst.msk [vmem:[%s342 + $0x2a3] sm:$0xff] %vm343, %v199
    %369 = vst.msk [vmem:[%s342 + $0x2b3] sm:$0xff] %vm343, %v201
    %370 = vst.msk [vmem:[%s342 + $0x2c3] sm:$0xff] %vm343, %v203
    %371 = vst.msk [vmem:[%s342 + $0x2d3] sm:$0xff] %vm343, %v205
    %372 = vst.msk [vmem:[%s342 + $0x2e3] sm:$0xff] %vm343, %v207
    %373 = vst.msk [vmem:[%s342 + $0x2f3] sm:$0xff] %vm343, %v209
    %374 = vst.msk [vmem:[%s342 + $0x303] sm:$0xff] %vm343, %v211
    %375 = vst.msk [vmem:[%s342 + $0x313] sm:$0xff] %vm343, %v213
    %376 = vst.msk [vmem:[%s342 + $0x383] sm:$0xff] %vm343, %v215
    %377 = vst.msk [vmem:[%s342 + $0x393] sm:$0xff] %vm343, %v217
    %378 = vst.msk [vmem:[%s342 + $0x3a3] sm:$0xff] %vm343, %v219
    %379 = vst.msk [vmem:[%s342 + $0x3b3] sm:$0xff] %vm343, %v221
    %380 = vst.msk [vmem:[%s342 + $0x3c3] sm:$0xff] %vm343, %v223
    %381 = vst.msk [vmem:[%s342 + $0x3d3] sm:$0xff] %vm343, %v225
    %382 = vst.msk [vmem:[%s342 + $0x3e3] sm:$0xff] %vm343, %v227
    %383 = vst.msk [vmem:[%s342 + $0x3f3] sm:$0xff] %vm343, %v229
    %384 = vst.msk [vmem:[%s342 + $0x463] sm:$0xff] %vm343, %v231
    %385 = vst.msk [vmem:[%s342 + $0x473] sm:$0xff] %vm343, %v233
    %386 = vst.msk [vmem:[%s342 + $0x483] sm:$0xff] %vm343, %v235
    %387 = vst.msk [vmem:[%s342 + $0x493] sm:$0xff] %vm343, %v237
    %388 = vst.msk [vmem:[%s342 + $0x4a3] sm:$0xff] %vm343, %v239
    %389 = vst.msk [vmem:[%s342 + $0x4b3] sm:$0xff] %vm343, %v241
    %390 = vst.msk [vmem:[%s342 + $0x4c3] sm:$0xff] %vm343, %v243
    %391 = vst.msk [vmem:[%s342 + $0x4d3] sm:$0xff] %vm343, %v245
    %392 = vst.msk [vmem:[%s342 + $0x543] sm:$0xff] %vm343, %v247
    %393 = vst.msk [vmem:[%s342 + $0x553] sm:$0xff] %vm343, %v249
    %394 = vst.msk [vmem:[%s342 + $0x563] sm:$0xff] %vm343, %v251
    %395 = vst.msk [vmem:[%s342 + $0x573] sm:$0xff] %vm343, %v253
    %396 = vst.msk [vmem:[%s342 + $0x583] sm:$0xff] %vm343, %v255
    %397 = vst.msk [vmem:[%s342 + $0x593] sm:$0xff] %vm343, %v257
    %398 = vst.msk [vmem:[%s342 + $0x5a3] sm:$0xff] %vm343, %v259
    %399 = vst.msk [vmem:[%s342 + $0x5b3] sm:$0xff] %vm343, %v261
    %400 = vst.msk [vmem:[%s342 + $0x623] sm:$0xff] %vm343, %v263
    %401 = vst.msk [vmem:[%s342 + $0x633] sm:$0xff] %vm343, %v265
    %402 = vst.msk [vmem:[%s342 + $0x643] sm:$0xff] %vm343, %v267
    %403 = vst.msk [vmem:[%s342 + $0x653] sm:$0xff] %vm343, %v269
    %404 = vst.msk [vmem:[%s342 + $0x663] sm:$0xff] %vm343, %v271
    %405 = vst.msk [vmem:[%s342 + $0x673] sm:$0xff] %vm343, %v273
    %406 = vst.msk [vmem:[%s342 + $0x683] sm:$0xff] %vm343, %v275
    %407 = vst.msk [vmem:[%s342 + $0x693] sm:$0xff] %vm343, %v277
    %v408 = vld [vmem:[#allocation2] sm:$0xff]
    %v409 = vld [vmem:[#allocation2 + $0x8] sm:$0xff]
    %v410 = vld [vmem:[#allocation2 + $0x10] sm:$0xff]
    %v411 = vld [vmem:[#allocation2 + $0x18] sm:$0xff]
    %v412 = vld [vmem:[#allocation2 + $0x20] sm:$0xff]
    %v413 = vld [vmem:[#allocation2 + $0x28] sm:$0xff]
    %v414 = vld [vmem:[#allocation2 + $0x30] sm:$0xff]
    %v415 = vld [vmem:[#allocation2 + $0x38] sm:$0xff]
    %v416 = vld [vmem:[#allocation2 + $0x40] sm:$0xff]
    %v417 = vld [vmem:[#allocation2 + $0x48] sm:$0xff]
    %v418 = vld [vmem:[#allocation2 + $0x50] sm:$0xff]
    %v419 = vld [vmem:[#allocation2 + $0x58] sm:$0xff]
    %v420 = vld [vmem:[#allocation2 + $0x60] sm:$0xff]
    %v421 = vld [vmem:[#allocation2 + $0x68] sm:$0xff]
    %v422 = vld [vmem:[#allocation2 + $0x70] sm:$0xff]
    %v423 = vld [vmem:[#allocation2 + $0x78] sm:$0xff]
    %v424 = vld [vmem:[#allocation2 + $0x80] sm:$0xff]
    %v425 = vld [vmem:[#allocation2 + $0x88] sm:$0xff]
    %v426 = vld [vmem:[#allocation2 + $0x90] sm:$0xff]
    %v427 = vld [vmem:[#allocation2 + $0x98] sm:$0xff]
    %v428 = vld [vmem:[#allocation2 + $0xa0] sm:$0xff]
    %v429 = vld [vmem:[#allocation2 + $0xa8] sm:$0xff]
    %v430 = vld [vmem:[#allocation2 + $0xb0] sm:$0xff]
    %v431 = vld [vmem:[#allocation2 + $0xb8] sm:$0xff]
    %v432 = vld [vmem:[#allocation2 + $0xc0] sm:$0xff]
    %v433 = vld [vmem:[#allocation2 + $0xc8] sm:$0xff]
    %v434 = vld [vmem:[#allocation2 + $0xd0] sm:$0xff]
    %v435 = vld [vmem:[#allocation2 + $0xd8] sm:$0xff]
    %v436 = vld [vmem:[#allocation2 + $0xe0] sm:$0xff]
    %v437 = vld [vmem:[#allocation2 + $0xe8] sm:$0xff]
    %v438 = vld [vmem:[#allocation2 + $0xf0] sm:$0xff]
    %v439 = vld [vmem:[#allocation2 + $0xf8] sm:$0xff]
    %v440 = vld [vmem:[#allocation2 + $0x100] sm:$0xff]
    %v441 = vld [vmem:[#allocation2 + $0x108] sm:$0xff]
    %v442 = vld [vmem:[#allocation2 + $0x110] sm:$0xff]
    %v443 = vld [vmem:[#allocation2 + $0x118] sm:$0xff]
    %v444 = vld [vmem:[#allocation2 + $0x120] sm:$0xff]
    %v445 = vld [vmem:[#allocation2 + $0x128] sm:$0xff]
    %v446 = vld [vmem:[#allocation2 + $0x130] sm:$0xff]
    %v447 = vld [vmem:[#allocation2 + $0x138] sm:$0xff]
    %v448 = vld [vmem:[#allocation2 + $0x140] sm:$0xff]
    %v449 = vld [vmem:[#allocation2 + $0x148] sm:$0xff]
    %v450 = vld [vmem:[#allocation2 + $0x150] sm:$0xff]
    %v451 = vld [vmem:[#allocation2 + $0x158] sm:$0xff]
    %v452 = vld [vmem:[#allocation2 + $0x160] sm:$0xff]
    %v453 = vld [vmem:[#allocation2 + $0x168] sm:$0xff]
    %v454 = vld [vmem:[#allocation2 + $0x170] sm:$0xff]
    %v455 = vld [vmem:[#allocation2 + $0x178] sm:$0xff]
    %v456 = vld [vmem:[#allocation2 + $0x180] sm:$0xff]
    %v457 = vld [vmem:[#allocation2 + $0x188] sm:$0xff]
    %v458 = vld [vmem:[#allocation2 + $0x190] sm:$0xff]
    %v459 = vld [vmem:[#allocation2 + $0x198] sm:$0xff]
    %v460 = vld [vmem:[#allocation2 + $0x1a0] sm:$0xff]
    %v461 = vld [vmem:[#allocation2 + $0x1a8] sm:$0xff]
    %v462 = vld [vmem:[#allocation2 + $0x1b0] sm:$0xff]
    %v463 = vld [vmem:[#allocation2 + $0x1b8] sm:$0xff]
    %v464 = vld [vmem:[#allocation2 + $0x1c0] sm:$0xff]
    %v465 = vld [vmem:[#allocation2 + $0x1c8] sm:$0xff]
    %v466 = vld [vmem:[#allocation2 + $0x1d0] sm:$0xff]
    %v467 = vld [vmem:[#allocation2 + $0x1d8] sm:$0xff]
    %v468 = vld [vmem:[#allocation2 + $0x1e0] sm:$0xff]
    %v469 = vld [vmem:[#allocation2 + $0x1e8] sm:$0xff]
    %v470 = vld [vmem:[#allocation2 + $0x1f0] sm:$0xff]
    %v471 = vld [vmem:[#allocation2 + $0x1f8] sm:$0xff]
    %536 = vrot.lane.b32.xlu0 %v408, 1
    %v537 = vpop.permute.xlu0 %536
    %538 = vrot.lane.b32.xlu0 %v409, 1
    %v539 = vpop.permute.xlu0 %538
    %540 = vrot.lane.b32.xlu0 %v410, 1
    %v541 = vpop.permute.xlu0 %540
    %542 = vrot.lane.b32.xlu0 %v411, 1
    %v543 = vpop.permute.xlu0 %542
    %544 = vrot.lane.b32.xlu0 %v412, 1
    %v545 = vpop.permute.xlu0 %544
    %546 = vrot.lane.b32.xlu0 %v413, 1
    %v547 = vpop.permute.xlu0 %546
    %548 = vrot.lane.b32.xlu0 %v414, 1
    %v549 = vpop.permute.xlu0 %548
    %550 = vrot.lane.b32.xlu0 %v415, 1
    %v551 = vpop.permute.xlu0 %550
    %552 = vrot.lane.b32.xlu0 %v416, 1
    %v553 = vpop.permute.xlu0 %552
    %554 = vrot.lane.b32.xlu0 %v417, 1
    %v555 = vpop.permute.xlu0 %554
    %556 = vrot.lane.b32.xlu0 %v418, 1
    %v557 = vpop.permute.xlu0 %556
    %558 = vrot.lane.b32.xlu0 %v419, 1
    %v559 = vpop.permute.xlu0 %558
    %560 = vrot.lane.b32.xlu0 %v420, 1
    %v561 = vpop.permute.xlu0 %560
    %562 = vrot.lane.b32.xlu0 %v421, 1
    %v563 = vpop.permute.xlu0 %562
    %564 = vrot.lane.b32.xlu0 %v422, 1
    %v565 = vpop.permute.xlu0 %564
    %566 = vrot.lane.b32.xlu0 %v423, 1
    %v567 = vpop.permute.xlu0 %566
    %568 = vrot.lane.b32.xlu0 %v424, 1
    %v569 = vpop.permute.xlu0 %568
    %570 = vrot.lane.b32.xlu0 %v425, 1
    %v571 = vpop.permute.xlu0 %570
    %572 = vrot.lane.b32.xlu0 %v426, 1
    %v573 = vpop.permute.xlu0 %572
    %574 = vrot.lane.b32.xlu0 %v427, 1
    %v575 = vpop.permute.xlu0 %574
    %576 = vrot.lane.b32.xlu0 %v428, 1
    %v577 = vpop.permute.xlu0 %576
    %578 = vrot.lane.b32.xlu0 %v429, 1
    %v579 = vpop.permute.xlu0 %578
    %580 = vrot.lane.b32.xlu0 %v430, 1
    %v581 = vpop.permute.xlu0 %580
    %582 = vrot.lane.b32.xlu0 %v431, 1
    %v583 = vpop.permute.xlu0 %582
    %584 = vrot.lane.b32.xlu0 %v432, 1
    %v585 = vpop.permute.xlu0 %584
    %586 = vrot.lane.b32.xlu0 %v433, 1
    %v587 = vpop.permute.xlu0 %586
    %588 = vrot.lane.b32.xlu0 %v434, 1
    %v589 = vpop.permute.xlu0 %588
    %590 = vrot.lane.b32.xlu0 %v435, 1
    %v591 = vpop.permute.xlu0 %590
    %592 = vrot.lane.b32.xlu0 %v436, 1
    %v593 = vpop.permute.xlu0 %592
    %594 = vrot.lane.b32.xlu0 %v437, 1
    %v595 = vpop.permute.xlu0 %594
    %596 = vrot.lane.b32.xlu0 %v438, 1
    %v597 = vpop.permute.xlu0 %596
    %598 = vrot.lane.b32.xlu0 %v439, 1
    %v599 = vpop.permute.xlu0 %598
    %600 = vrot.lane.b32.xlu0 %v440, 1
    %v601 = vpop.permute.xlu0 %600
    %602 = vrot.lane.b32.xlu0 %v441, 1
    %v603 = vpop.permute.xlu0 %602
    %604 = vrot.lane.b32.xlu0 %v442, 1
    %v605 = vpop.permute.xlu0 %604
    %606 = vrot.lane.b32.xlu0 %v443, 1
    %v607 = vpop.permute.xlu0 %606
    %608 = vrot.lane.b32.xlu0 %v444, 1
    %v609 = vpop.permute.xlu0 %608
    %610 = vrot.lane.b32.xlu0 %v445, 1
    %v611 = vpop.permute.xlu0 %610
    %612 = vrot.lane.b32.xlu0 %v446, 1
    %v613 = vpop.permute.xlu0 %612
    %614 = vrot.lane.b32.xlu0 %v447, 1
    %v615 = vpop.permute.xlu0 %614
    %616 = vrot.lane.b32.xlu0 %v448, 1
    %v617 = vpop.permute.xlu0 %616
    %618 = vrot.lane.b32.xlu0 %v449, 1
    %v619 = vpop.permute.xlu0 %618
    %620 = vrot.lane.b32.xlu0 %v450, 1
    %v621 = vpop.permute.xlu0 %620
    %622 = vrot.lane.b32.xlu0 %v451, 1
    %v623 = vpop.permute.xlu0 %622
    %624 = vrot.lane.b32.xlu0 %v452, 1
    %v625 = vpop.permute.xlu0 %624
    %626 = vrot.lane.b32.xlu0 %v453, 1
    %v627 = vpop.permute.xlu0 %626
    %628 = vrot.lane.b32.xlu0 %v454, 1
    %v629 = vpop.permute.xlu0 %628
    %630 = vrot.lane.b32.xlu0 %v455, 1
    %v631 = vpop.permute.xlu0 %630
    %632 = vrot.lane.b32.xlu0 %v456, 1
    %v633 = vpop.permute.xlu0 %632
    %634 = vrot.lane.b32.xlu0 %v457, 1
    %v635 = vpop.permute.xlu0 %634
    %636 = vrot.lane.b32.xlu0 %v458, 1
    %v637 = vpop.permute.xlu0 %636
    %638 = vrot.lane.b32.xlu0 %v459, 1
    %v639 = vpop.permute.xlu0 %638
    %640 = vrot.lane.b32.xlu0 %v460, 1
    %v641 = vpop.permute.xlu0 %640
    %642 = vrot.lane.b32.xlu0 %v461, 1
    %v643 = vpop.permute.xlu0 %642
    %644 = vrot.lane.b32.xlu0 %v462, 1
    %v645 = vpop.permute.xlu0 %644
    %646 = vrot.lane.b32.xlu0 %v463, 1
    %v647 = vpop.permute.xlu0 %646
    %648 = vrot.lane.b32.xlu0 %v464, 1
    %v649 = vpop.permute.xlu0 %648
    %650 = vrot.lane.b32.xlu0 %v465, 1
    %v651 = vpop.permute.xlu0 %650
    %652 = vrot.lane.b32.xlu0 %v466, 1
    %v653 = vpop.permute.xlu0 %652
    %654 = vrot.lane.b32.xlu0 %v467, 1
    %v655 = vpop.permute.xlu0 %654
    %656 = vrot.lane.b32.xlu0 %v468, 1
    %v657 = vpop.permute.xlu0 %656
    %658 = vrot.lane.b32.xlu0 %v469, 1
    %v659 = vpop.permute.xlu0 %658
    %660 = vrot.lane.b32.xlu0 %v470, 1
    %v661 = vpop.permute.xlu0 %660
    %662 = vrot.lane.b32.xlu0 %v471, 1
    %v663 = vpop.permute.xlu0 %662
    %vm728 = vcmask 23568
    %729 = vst.msk [vmem:[%s342 + $0x3] sm:$0xff] %vm728, %v537
    %730 = vst.msk [vmem:[%s342 + $0x13] sm:$0xff] %vm728, %v539
    %731 = vst.msk [vmem:[%s342 + $0x23] sm:$0xff] %vm728, %v541
    %732 = vst.msk [vmem:[%s342 + $0x33] sm:$0xff] %vm728, %v543
    %733 = vst.msk [vmem:[%s342 + $0x43] sm:$0xff] %vm728, %v545
    %734 = vst.msk [vmem:[%s342 + $0x53] sm:$0xff] %vm728, %v547
    %735 = vst.msk [vmem:[%s342 + $0x63] sm:$0xff] %vm728, %v549
    %736 = vst.msk [vmem:[%s342 + $0x73] sm:$0xff] %vm728, %v551
    %737 = vst.msk [vmem:[%s342 + $0xe3] sm:$0xff] %vm728, %v553
    %738 = vst.msk [vmem:[%s342 + $0xf3] sm:$0xff] %vm728, %v555
    %739 = vst.msk [vmem:[%s342 + $0x103] sm:$0xff] %vm728, %v557
    %740 = vst.msk [vmem:[%s342 + $0x113] sm:$0xff] %vm728, %v559
    %741 = vst.msk [vmem:[%s342 + $0x123] sm:$0xff] %vm728, %v561
    %742 = vst.msk [vmem:[%s342 + $0x133] sm:$0xff] %vm728, %v563
    %743 = vst.msk [vmem:[%s342 + $0x143] sm:$0xff] %vm728, %v565
    %744 = vst.msk [vmem:[%s342 + $0x153] sm:$0xff] %vm728, %v567
    %745 = vst.msk [vmem:[%s342 + $0x1c3] sm:$0xff] %vm728, %v569
    %746 = vst.msk [vmem:[%s342 + $0x1d3] sm:$0xff] %vm728, %v571
    %747 = vst.msk [vmem:[%s342 + $0x1e3] sm:$0xff] %vm728, %v573
    %748 = vst.msk [vmem:[%s342 + $0x1f3] sm:$0xff] %vm728, %v575
    %749 = vst.msk [vmem:[%s342 + $0x203] sm:$0xff] %vm728, %v577
    %750 = vst.msk [vmem:[%s342 + $0x213] sm:$0xff] %vm728, %v579
    %751 = vst.msk [vmem:[%s342 + $0x223] sm:$0xff] %vm728, %v581
    %752 = vst.msk [vmem:[%s342 + $0x233] sm:$0xff] %vm728, %v583
    %753 = vst.msk [vmem:[%s342 + $0x2a3] sm:$0xff] %vm728, %v585
    %754 = vst.msk [vmem:[%s342 + $0x2b3] sm:$0xff] %vm728, %v587
    %755 = vst.msk [vmem:[%s342 + $0x2c3] sm:$0xff] %vm728, %v589
    %756 = vst.msk [vmem:[%s342 + $0x2d3] sm:$0xff] %vm728, %v591
    %757 = vst.msk [vmem:[%s342 + $0x2e3] sm:$0xff] %vm728, %v593
    %758 = vst.msk [vmem:[%s342 + $0x2f3] sm:$0xff] %vm728, %v595
    %759 = vst.msk [vmem:[%s342 + $0x303] sm:$0xff] %vm728, %v597
    %760 = vst.msk [vmem:[%s342 + $0x313] sm:$0xff] %vm728, %v599
    %761 = vst.msk [vmem:[%s342 + $0x383] sm:$0xff] %vm728, %v601
    %762 = vst.msk [vmem:[%s342 + $0x393] sm:$0xff] %vm728, %v603
    %763 = vst.msk [vmem:[%s342 + $0x3a3] sm:$0xff] %vm728, %v605
    %764 = vst.msk [vmem:[%s342 + $0x3b3] sm:$0xff] %vm728, %v607
    %765 = vst.msk [vmem:[%s342 + $0x3c3] sm:$0xff] %vm728, %v609
    %766 = vst.msk [vmem:[%s342 + $0x3d3] sm:$0xff] %vm728, %v611
    %767 = vst.msk [vmem:[%s342 + $0x3e3] sm:$0xff] %vm728, %v613
    %768 = vst.msk [vmem:[%s342 + $0x3f3] sm:$0xff] %vm728, %v615
    %769 = vst.msk [vmem:[%s342 + $0x463] sm:$0xff] %vm728, %v617
    %770 = vst.msk [vmem:[%s342 + $0x473] sm:$0xff] %vm728, %v619
    %771 = vst.msk [vmem:[%s342 + $0x483] sm:$0xff] %vm728, %v621
    %772 = vst.msk [vmem:[%s342 + $0x493] sm:$0xff] %vm728, %v623
    %773 = vst.msk [vmem:[%s342 + $0x4a3] sm:$0xff] %vm728, %v625
    %774 = vst.msk [vmem:[%s342 + $0x4b3] sm:$0xff] %vm728, %v627
    %775 = vst.msk [vmem:[%s342 + $0x4c3] sm:$0xff] %vm728, %v629
    %776 = vst.msk [vmem:[%s342 + $0x4d3] sm:$0xff] %vm728, %v631
    %777 = vst.msk [vmem:[%s342 + $0x543] sm:$0xff] %vm728, %v633
    %778 = vst.msk [vmem:[%s342 + $0x553] sm:$0xff] %vm728, %v635
    %779 = vst.msk [vmem:[%s342 + $0x563] sm:$0xff] %vm728, %v637
    %780 = vst.msk [vmem:[%s342 + $0x573] sm:$0xff] %vm728, %v639
    %781 = vst.msk [vmem:[%s342 + $0x583] sm:$0xff] %vm728, %v641
    %782 = vst.msk [vmem:[%s342 + $0x593] sm:$0xff] %vm728, %v643
    %783 = vst.msk [vmem:[%s342 + $0x5a3] sm:$0xff] %vm728, %v645
    %784 = vst.msk [vmem:[%s342 + $0x5b3] sm:$0xff] %vm728, %v647
    %785 = vst.msk [vmem:[%s342 + $0x623] sm:$0xff] %vm728, %v649
    %786 = vst.msk [vmem:[%s342 + $0x633] sm:$0xff] %vm728, %v651
    %787 = vst.msk [vmem:[%s342 + $0x643] sm:$0xff] %vm728, %v653
    %788 = vst.msk [vmem:[%s342 + $0x653] sm:$0xff] %vm728, %v655
    %789 = vst.msk [vmem:[%s342 + $0x663] sm:$0xff] %vm728, %v657
    %790 = vst.msk [vmem:[%s342 + $0x673] sm:$0xff] %vm728, %v659
    %791 = vst.msk [vmem:[%s342 + $0x683] sm:$0xff] %vm728, %v661
    %792 = vst.msk [vmem:[%s342 + $0x693] sm:$0xff] %vm728, %v663
    %v793 = vld [vmem:[#allocation2] sm:$0xff]
    %v794 = vld [vmem:[#allocation2 + $0x8] sm:$0xff]
    %v795 = vld [vmem:[#allocation2 + $0x10] sm:$0xff]
    %v796 = vld [vmem:[#allocation2 + $0x18] sm:$0xff]
    %v797 = vld [vmem:[#allocation2 + $0x20] sm:$0xff]
    %v798 = vld [vmem:[#allocation2 + $0x28] sm:$0xff]
    %v799 = vld [vmem:[#allocation2 + $0x30] sm:$0xff]
    %v800 = vld [vmem:[#allocation2 + $0x38] sm:$0xff]
    %v801 = vld [vmem:[#allocation2 + $0x40] sm:$0xff]
    %v802 = vld [vmem:[#allocation2 + $0x48] sm:$0xff]
    %v803 = vld [vmem:[#allocation2 + $0x50] sm:$0xff]
    %v804 = vld [vmem:[#allocation2 + $0x58] sm:$0xff]
    %v805 = vld [vmem:[#allocation2 + $0x60] sm:$0xff]
    %v806 = vld [vmem:[#allocation2 + $0x68] sm:$0xff]
    %v807 = vld [vmem:[#allocation2 + $0x70] sm:$0xff]
    %v808 = vld [vmem:[#allocation2 + $0x78] sm:$0xff]
    %v809 = vld [vmem:[#allocation2 + $0x80] sm:$0xff]
    %v810 = vld [vmem:[#allocation2 + $0x88] sm:$0xff]
    %v811 = vld [vmem:[#allocation2 + $0x90] sm:$0xff]
    %v812 = vld [vmem:[#allocation2 + $0x98] sm:$0xff]
    %v813 = vld [vmem:[#allocation2 + $0xa0] sm:$0xff]
    %v814 = vld [vmem:[#allocation2 + $0xa8] sm:$0xff]
    %v815 = vld [vmem:[#allocation2 + $0xb0] sm:$0xff]
    %v816 = vld [vmem:[#allocation2 + $0xb8] sm:$0xff]
    %v817 = vld [vmem:[#allocation2 + $0xc0] sm:$0xff]
    %v818 = vld [vmem:[#allocation2 + $0xc8] sm:$0xff]
    %v819 = vld [vmem:[#allocation2 + $0xd0] sm:$0xff]
    %v820 = vld [vmem:[#allocation2 + $0xd8] sm:$0xff]
    %v821 = vld [vmem:[#allocation2 + $0xe0] sm:$0xff]
    %v822 = vld [vmem:[#allocation2 + $0xe8] sm:$0xff]
    %v823 = vld [vmem:[#allocation2 + $0xf0] sm:$0xff]
    %v824 = vld [vmem:[#allocation2 + $0xf8] sm:$0xff]
    %v825 = vld [vmem:[#allocation2 + $0x100] sm:$0xff]
    %v826 = vld [vmem:[#allocation2 + $0x108] sm:$0xff]
    %v827 = vld [vmem:[#allocation2 + $0x110] sm:$0xff]
    %v828 = vld [vmem:[#allocation2 + $0x118] sm:$0xff]
    %v829 = vld [vmem:[#allocation2 + $0x120] sm:$0xff]
    %v830 = vld [vmem:[#allocation2 + $0x128] sm:$0xff]
    %v831 = vld [vmem:[#allocation2 + $0x130] sm:$0xff]
    %v832 = vld [vmem:[#allocation2 + $0x138] sm:$0xff]
    %v833 = vld [vmem:[#allocation2 + $0x140] sm:$0xff]
    %v834 = vld [vmem:[#allocation2 + $0x148] sm:$0xff]
    %v835 = vld [vmem:[#allocation2 + $0x150] sm:$0xff]
    %v836 = vld [vmem:[#allocation2 + $0x158] sm:$0xff]
    %v837 = vld [vmem:[#allocation2 + $0x160] sm:$0xff]
    %v838 = vld [vmem:[#allocation2 + $0x168] sm:$0xff]
    %v839 = vld [vmem:[#allocation2 + $0x170] sm:$0xff]
    %v840 = vld [vmem:[#allocation2 + $0x178] sm:$0xff]
    %v841 = vld [vmem:[#allocation2 + $0x180] sm:$0xff]
    %v842 = vld [vmem:[#allocation2 + $0x188] sm:$0xff]
    %v843 = vld [vmem:[#allocation2 + $0x190] sm:$0xff]
    %v844 = vld [vmem:[#allocation2 + $0x198] sm:$0xff]
    %v845 = vld [vmem:[#allocation2 + $0x1a0] sm:$0xff]
    %v846 = vld [vmem:[#allocation2 + $0x1a8] sm:$0xff]
    %v847 = vld [vmem:[#allocation2 + $0x1b0] sm:$0xff]
    %v848 = vld [vmem:[#allocation2 + $0x1b8] sm:$0xff]
    %v849 = vld [vmem:[#allocation2 + $0x1c0] sm:$0xff]
    %v850 = vld [vmem:[#allocation2 + $0x1c8] sm:$0xff]
    %v851 = vld [vmem:[#allocation2 + $0x1d0] sm:$0xff]
    %v852 = vld [vmem:[#allocation2 + $0x1d8] sm:$0xff]
    %v853 = vld [vmem:[#allocation2 + $0x1e0] sm:$0xff]
    %v854 = vld [vmem:[#allocation2 + $0x1e8] sm:$0xff]
    %v855 = vld [vmem:[#allocation2 + $0x1f0] sm:$0xff]
    %v856 = vld [vmem:[#allocation2 + $0x1f8] sm:$0xff]
    %921 = vrot.lane.b32.xlu0 %v793, 127
    %v922 = vpop.permute.xlu0 %921
    %923 = vrot.lane.b32.xlu0 %v794, 127
    %v924 = vpop.permute.xlu0 %923
    %925 = vrot.lane.b32.xlu0 %v795, 127
    %v926 = vpop.permute.xlu0 %925
    %927 = vrot.lane.b32.xlu0 %v796, 127
    %v928 = vpop.permute.xlu0 %927
    %929 = vrot.lane.b32.xlu0 %v797, 127
    %v930 = vpop.permute.xlu0 %929
    %931 = vrot.lane.b32.xlu0 %v798, 127
    %v932 = vpop.permute.xlu0 %931
    %933 = vrot.lane.b32.xlu0 %v799, 127
    %v934 = vpop.permute.xlu0 %933
    %935 = vrot.lane.b32.xlu0 %v800, 127
    %v936 = vpop.permute.xlu0 %935
    %937 = vrot.lane.b32.xlu0 %v801, 127
    %v938 = vpop.permute.xlu0 %937
    %939 = vrot.lane.b32.xlu0 %v802, 127
    %v940 = vpop.permute.xlu0 %939
    %941 = vrot.lane.b32.xlu0 %v803, 127
    %v942 = vpop.permute.xlu0 %941
    %943 = vrot.lane.b32.xlu0 %v804, 127
    %v944 = vpop.permute.xlu0 %943
    %945 = vrot.lane.b32.xlu0 %v805, 127
    %v946 = vpop.permute.xlu0 %945
    %947 = vrot.lane.b32.xlu0 %v806, 127
    %v948 = vpop.permute.xlu0 %947
    %949 = vrot.lane.b32.xlu0 %v807, 127
    %v950 = vpop.permute.xlu0 %949
    %951 = vrot.lane.b32.xlu0 %v808, 127
    %v952 = vpop.permute.xlu0 %951
    %953 = vrot.lane.b32.xlu0 %v809, 127
    %v954 = vpop.permute.xlu0 %953
    %955 = vrot.lane.b32.xlu0 %v810, 127
    %v956 = vpop.permute.xlu0 %955
    %957 = vrot.lane.b32.xlu0 %v811, 127
    %v958 = vpop.permute.xlu0 %957
    %959 = vrot.lane.b32.xlu0 %v812, 127
    %v960 = vpop.permute.xlu0 %959
    %961 = vrot.lane.b32.xlu0 %v813, 127
    %v962 = vpop.permute.xlu0 %961
    %963 = vrot.lane.b32.xlu0 %v814, 127
    %v964 = vpop.permute.xlu0 %963
    %965 = vrot.lane.b32.xlu0 %v815, 127
    %v966 = vpop.permute.xlu0 %965
    %967 = vrot.lane.b32.xlu0 %v816, 127
    %v968 = vpop.permute.xlu0 %967
    %969 = vrot.lane.b32.xlu0 %v817, 127
    %v970 = vpop.permute.xlu0 %969
    %971 = vrot.lane.b32.xlu0 %v818, 127
    %v972 = vpop.permute.xlu0 %971
    %973 = vrot.lane.b32.xlu0 %v819, 127
    %v974 = vpop.permute.xlu0 %973
    %975 = vrot.lane.b32.xlu0 %v820, 127
    %v976 = vpop.permute.xlu0 %975
    %977 = vrot.lane.b32.xlu0 %v821, 127
    %v978 = vpop.permute.xlu0 %977
    %979 = vrot.lane.b32.xlu0 %v822, 127
    %v980 = vpop.permute.xlu0 %979
    %981 = vrot.lane.b32.xlu0 %v823, 127
    %v982 = vpop.permute.xlu0 %981
    %983 = vrot.lane.b32.xlu0 %v824, 127
    %v984 = vpop.permute.xlu0 %983
    %985 = vrot.lane.b32.xlu0 %v825, 127
    %v986 = vpop.permute.xlu0 %985
    %987 = vrot.lane.b32.xlu0 %v826, 127
    %v988 = vpop.permute.xlu0 %987
    %989 = vrot.lane.b32.xlu0 %v827, 127
    %v990 = vpop.permute.xlu0 %989
    %991 = vrot.lane.b32.xlu0 %v828, 127
    %v992 = vpop.permute.xlu0 %991
    %993 = vrot.lane.b32.xlu0 %v829, 127
    %v994 = vpop.permute.xlu0 %993
    %995 = vrot.lane.b32.xlu0 %v830, 127
    %v996 = vpop.permute.xlu0 %995
    %997 = vrot.lane.b32.xlu0 %v831, 127
    %v998 = vpop.permute.xlu0 %997
    %999 = vrot.lane.b32.xlu0 %v832, 127
    %v1000 = vpop.permute.xlu0 %999
    %1001 = vrot.lane.b32.xlu0 %v833, 127
    %v1002 = vpop.permute.xlu0 %1001
    %1003 = vrot.lane.b32.xlu0 %v834, 127
    %v1004 = vpop.permute.xlu0 %1003
    %1005 = vrot.lane.b32.xlu0 %v835, 127
    %v1006 = vpop.permute.xlu0 %1005
    %1007 = vrot.lane.b32.xlu0 %v836, 127
    %v1008 = vpop.permute.xlu0 %1007
    %1009 = vrot.lane.b32.xlu0 %v837, 127
    %v1010 = vpop.permute.xlu0 %1009
    %1011 = vrot.lane.b32.xlu0 %v838, 127
    %v1012 = vpop.permute.xlu0 %1011
    %1013 = vrot.lane.b32.xlu0 %v839, 127
    %v1014 = vpop.permute.xlu0 %1013
    %1015 = vrot.lane.b32.xlu0 %v840, 127
    %v1016 = vpop.permute.xlu0 %1015
    %1017 = vrot.lane.b32.xlu0 %v841, 127
    %v1018 = vpop.permute.xlu0 %1017
    %1019 = vrot.lane.b32.xlu0 %v842, 127
    %v1020 = vpop.permute.xlu0 %1019
    %1021 = vrot.lane.b32.xlu0 %v843, 127
    %v1022 = vpop.permute.xlu0 %1021
    %1023 = vrot.lane.b32.xlu0 %v844, 127
    %v1024 = vpop.permute.xlu0 %1023
    %1025 = vrot.lane.b32.xlu0 %v845, 127
    %v1026 = vpop.permute.xlu0 %1025
    %1027 = vrot.lane.b32.xlu0 %v846, 127
    %v1028 = vpop.permute.xlu0 %1027
    %1029 = vrot.lane.b32.xlu0 %v847, 127
    %v1030 = vpop.permute.xlu0 %1029
    %1031 = vrot.lane.b32.xlu0 %v848, 127
    %v1032 = vpop.permute.xlu0 %1031
    %1033 = vrot.lane.b32.xlu0 %v849, 127
    %v1034 = vpop.permute.xlu0 %1033
    %1035 = vrot.lane.b32.xlu0 %v850, 127
    %v1036 = vpop.permute.xlu0 %1035
    %1037 = vrot.lane.b32.xlu0 %v851, 127
    %v1038 = vpop.permute.xlu0 %1037
    %1039 = vrot.lane.b32.xlu0 %v852, 127
    %v1040 = vpop.permute.xlu0 %1039
    %1041 = vrot.lane.b32.xlu0 %v853, 127
    %v1042 = vpop.permute.xlu0 %1041
    %1043 = vrot.lane.b32.xlu0 %v854, 127
    %v1044 = vpop.permute.xlu0 %1043
    %1045 = vrot.lane.b32.xlu0 %v855, 127
    %v1046 = vpop.permute.xlu0 %1045
    %1047 = vrot.lane.b32.xlu0 %v856, 127
    %v1048 = vpop.permute.xlu0 %1047
    %vm1113 = vcmask 15368
    %1114 = vst.msk [vmem:[%s342 + $0x3] sm:$0xff] %vm1113, %v922
    %1115 = vst.msk [vmem:[%s342 + $0x13] sm:$0xff] %vm1113, %v924
    %1116 = vst.msk [vmem:[%s342 + $0x23] sm:$0xff] %vm1113, %v926
    %1117 = vst.msk [vmem:[%s342 + $0x33] sm:$0xff] %vm1113, %v928
    %1118 = vst.msk [vmem:[%s342 + $0x43] sm:$0xff] %vm1113, %v930
    %1119 = vst.msk [vmem:[%s342 + $0x53] sm:$0xff] %vm1113, %v932
    %1120 = vst.msk [vmem:[%s342 + $0x63] sm:$0xff] %vm1113, %v934
    %1121 = vst.msk [vmem:[%s342 + $0x73] sm:$0xff] %vm1113, %v936
    %1122 = vst.msk [vmem:[%s342 + $0xe3] sm:$0xff] %vm1113, %v938
    %1123 = vst.msk [vmem:[%s342 + $0xf3] sm:$0xff] %vm1113, %v940
    %1124 = vst.msk [vmem:[%s342 + $0x103] sm:$0xff] %vm1113, %v942
    %1125 = vst.msk [vmem:[%s342 + $0x113] sm:$0xff] %vm1113, %v944
    %1126 = vst.msk [vmem:[%s342 + $0x123] sm:$0xff] %vm1113, %v946
    %1127 = vst.msk [vmem:[%s342 + $0x133] sm:$0xff] %vm1113, %v948
    %1128 = vst.msk [vmem:[%s342 + $0x143] sm:$0xff] %vm1113, %v950
    %1129 = vst.msk [vmem:[%s342 + $0x153] sm:$0xff] %vm1113, %v952
    %1130 = vst.msk [vmem:[%s342 + $0x1c3] sm:$0xff] %vm1113, %v954
    %1131 = vst.msk [vmem:[%s342 + $0x1d3] sm:$0xff] %vm1113, %v956
    %1132 = vst.msk [vmem:[%s342 + $0x1e3] sm:$0xff] %vm1113, %v958
    %1133 = vst.msk [vmem:[%s342 + $0x1f3] sm:$0xff] %vm1113, %v960
    %1134 = vst.msk [vmem:[%s342 + $0x203] sm:$0xff] %vm1113, %v962
    %1135 = vst.msk [vmem:[%s342 + $0x213] sm:$0xff] %vm1113, %v964
    %1136 = vst.msk [vmem:[%s342 + $0x223] sm:$0xff] %vm1113, %v966
    %1137 = vst.msk [vmem:[%s342 + $0x233] sm:$0xff] %vm1113, %v968
    %1138 = vst.msk [vmem:[%s342 + $0x2a3] sm:$0xff] %vm1113, %v970
    %1139 = vst.msk [vmem:[%s342 + $0x2b3] sm:$0xff] %vm1113, %v972
    %1140 = vst.msk [vmem:[%s342 + $0x2c3] sm:$0xff] %vm1113, %v974
    %1141 = vst.msk [vmem:[%s342 + $0x2d3] sm:$0xff] %vm1113, %v976
    %1142 = vst.msk [vmem:[%s342 + $0x2e3] sm:$0xff] %vm1113, %v978
    %1143 = vst.msk [vmem:[%s342 + $0x2f3] sm:$0xff] %vm1113, %v980
    %1144 = vst.msk [vmem:[%s342 + $0x303] sm:$0xff] %vm1113, %v982
    %1145 = vst.msk [vmem:[%s342 + $0x313] sm:$0xff] %vm1113, %v984
    %1146 = vst.msk [vmem:[%s342 + $0x383] sm:$0xff] %vm1113, %v986
    %1147 = vst.msk [vmem:[%s342 + $0x393] sm:$0xff] %vm1113, %v988
    %1148 = vst.msk [vmem:[%s342 + $0x3a3] sm:$0xff] %vm1113, %v990
    %1149 = vst.msk [vmem:[%s342 + $0x3b3] sm:$0xff] %vm1113, %v992
    %1150 = vst.msk [vmem:[%s342 + $0x3c3] sm:$0xff] %vm1113, %v994
    %1151 = vst.msk [vmem:[%s342 + $0x3d3] sm:$0xff] %vm1113, %v996
    %1152 = vst.msk [vmem:[%s342 + $0x3e3] sm:$0xff] %vm1113, %v998
    %1153 = vst.msk [vmem:[%s342 + $0x3f3] sm:$0xff] %vm1113, %v1000
    %1154 = vst.msk [vmem:[%s342 + $0x463] sm:$0xff] %vm1113, %v1002
    %1155 = vst.msk [vmem:[%s342 + $0x473] sm:$0xff] %vm1113, %v1004
    %1156 = vst.msk [vmem:[%s342 + $0x483] sm:$0xff] %vm1113, %v1006
    %1157 = vst.msk [vmem:[%s342 + $0x493] sm:$0xff] %vm1113, %v1008
    %1158 = vst.msk [vmem:[%s342 + $0x4a3] sm:$0xff] %vm1113, %v1010
    %1159 = vst.msk [vmem:[%s342 + $0x4b3] sm:$0xff] %vm1113, %v1012
    %1160 = vst.msk [vmem:[%s342 + $0x4c3] sm:$0xff] %vm1113, %v1014
    %1161 = vst.msk [vmem:[%s342 + $0x4d3] sm:$0xff] %vm1113, %v1016
    %1162 = vst.msk [vmem:[%s342 + $0x543] sm:$0xff] %vm1113, %v1018
    %1163 = vst.msk [vmem:[%s342 + $0x553] sm:$0xff] %vm1113, %v1020
    %1164 = vst.msk [vmem:[%s342 + $0x563] sm:$0xff] %vm1113, %v1022
    %1165 = vst.msk [vmem:[%s342 + $0x573] sm:$0xff] %vm1113, %v1024
    %1166 = vst.msk [vmem:[%s342 + $0x583] sm:$0xff] %vm1113, %v1026
    %1167 = vst.msk [vmem:[%s342 + $0x593] sm:$0xff] %vm1113, %v1028
    %1168 = vst.msk [vmem:[%s342 + $0x5a3] sm:$0xff] %vm1113, %v1030
    %1169 = vst.msk [vmem:[%s342 + $0x5b3] sm:$0xff] %vm1113, %v1032
    %1170 = vst.msk [vmem:[%s342 + $0x623] sm:$0xff] %vm1113, %v1034
    %1171 = vst.msk [vmem:[%s342 + $0x633] sm:$0xff] %vm1113, %v1036
    %1172 = vst.msk [vmem:[%s342 + $0x643] sm:$0xff] %vm1113, %v1038
    %1173 = vst.msk [vmem:[%s342 + $0x653] sm:$0xff] %vm1113, %v1040
    %1174 = vst.msk [vmem:[%s342 + $0x663] sm:$0xff] %vm1113, %v1042
    %1175 = vst.msk [vmem:[%s342 + $0x673] sm:$0xff] %vm1113, %v1044
    %1176 = vst.msk [vmem:[%s342 + $0x683] sm:$0xff] %vm1113, %v1046
    %1177 = vst.msk [vmem:[%s342 + $0x693] sm:$0xff] %vm1113, %v1048
    %v1178 = vld [vmem:[#allocation2] sm:$0xff]
    %v1179 = vld [vmem:[#allocation2 + $0x8] sm:$0xff]
    %v1180 = vld [vmem:[#allocation2 + $0x10] sm:$0xff]
    %v1181 = vld [vmem:[#allocation2 + $0x18] sm:$0xff]
    %v1182 = vld [vmem:[#allocation2 + $0x20] sm:$0xff]
    %v1183 = vld [vmem:[#allocation2 + $0x28] sm:$0xff]
    %v1184 = vld [vmem:[#allocation2 + $0x30] sm:$0xff]
    %v1185 = vld [vmem:[#allocation2 + $0x38] sm:$0xff]
    %v1186 = vld [vmem:[#allocation2 + $0x40] sm:$0xff]
    %v1187 = vld [vmem:[#allocation2 + $0x48] sm:$0xff]
    %v1188 = vld [vmem:[#allocation2 + $0x50] sm:$0xff]
    %v1189 = vld [vmem:[#allocation2 + $0x58] sm:$0xff]
    %v1190 = vld [vmem:[#allocation2 + $0x60] sm:$0xff]
    %v1191 = vld [vmem:[#allocation2 + $0x68] sm:$0xff]
    %v1192 = vld [vmem:[#allocation2 + $0x70] sm:$0xff]
    %v1193 = vld [vmem:[#allocation2 + $0x78] sm:$0xff]
    %v1194 = vld [vmem:[#allocation2 + $0x80] sm:$0xff]
    %v1195 = vld [vmem:[#allocation2 + $0x88] sm:$0xff]
    %v1196 = vld [vmem:[#allocation2 + $0x90] sm:$0xff]
    %v1197 = vld [vmem:[#allocation2 + $0x98] sm:$0xff]
    %v1198 = vld [vmem:[#allocation2 + $0xa0] sm:$0xff]
    %v1199 = vld [vmem:[#allocation2 + $0xa8] sm:$0xff]
    %v1200 = vld [vmem:[#allocation2 + $0xb0] sm:$0xff]
    %v1201 = vld [vmem:[#allocation2 + $0xb8] sm:$0xff]
    %v1202 = vld [vmem:[#allocation2 + $0xc0] sm:$0xff]
    %v1203 = vld [vmem:[#allocation2 + $0xc8] sm:$0xff]
    %v1204 = vld [vmem:[#allocation2 + $0xd0] sm:$0xff]
    %v1205 = vld [vmem:[#allocation2 + $0xd8] sm:$0xff]
    %v1206 = vld [vmem:[#allocation2 + $0xe0] sm:$0xff]
    %v1207 = vld [vmem:[#allocation2 + $0xe8] sm:$0xff]
    %v1208 = vld [vmem:[#allocation2 + $0xf0] sm:$0xff]
    %v1209 = vld [vmem:[#allocation2 + $0xf8] sm:$0xff]
    %v1210 = vld [vmem:[#allocation2 + $0x100] sm:$0xff]
    %v1211 = vld [vmem:[#allocation2 + $0x108] sm:$0xff]
    %v1212 = vld [vmem:[#allocation2 + $0x110] sm:$0xff]
    %v1213 = vld [vmem:[#allocation2 + $0x118] sm:$0xff]
    %v1214 = vld [vmem:[#allocation2 + $0x120] sm:$0xff]
    %v1215 = vld [vmem:[#allocation2 + $0x128] sm:$0xff]
    %v1216 = vld [vmem:[#allocation2 + $0x130] sm:$0xff]
    %v1217 = vld [vmem:[#allocation2 + $0x138] sm:$0xff]
    %v1218 = vld [vmem:[#allocation2 + $0x140] sm:$0xff]
    %v1219 = vld [vmem:[#allocation2 + $0x148] sm:$0xff]
    %v1220 = vld [vmem:[#allocation2 + $0x150] sm:$0xff]
    %v1221 = vld [vmem:[#allocation2 + $0x158] sm:$0xff]
    %v1222 = vld [vmem:[#allocation2 + $0x160] sm:$0xff]
    %v1223 = vld [vmem:[#allocation2 + $0x168] sm:$0xff]
    %v1224 = vld [vmem:[#allocation2 + $0x170] sm:$0xff]
    %v1225 = vld [vmem:[#allocation2 + $0x178] sm:$0xff]
    %v1226 = vld [vmem:[#allocation2 + $0x180] sm:$0xff]
    %v1227 = vld [vmem:[#allocation2 + $0x188] sm:$0xff]
    %v1228 = vld [vmem:[#allocation2 + $0x190] sm:$0xff]
    %v1229 = vld [vmem:[#allocation2 + $0x198] sm:$0xff]
    %v1230 = vld [vmem:[#allocation2 + $0x1a0] sm:$0xff]
    %v1231 = vld [vmem:[#allocation2 + $0x1a8] sm:$0xff]
    %v1232 = vld [vmem:[#allocation2 + $0x1b0] sm:$0xff]
    %v1233 = vld [vmem:[#allocation2 + $0x1b8] sm:$0xff]
    %v1234 = vld [vmem:[#allocation2 + $0x1c0] sm:$0xff]
    %v1235 = vld [vmem:[#allocation2 + $0x1c8] sm:$0xff]
    %v1236 = vld [vmem:[#allocation2 + $0x1d0] sm:$0xff]
    %v1237 = vld [vmem:[#allocation2 + $0x1d8] sm:$0xff]
    %v1238 = vld [vmem:[#allocation2 + $0x1e0] sm:$0xff]
    %v1239 = vld [vmem:[#allocation2 + $0x1e8] sm:$0xff]
    %v1240 = vld [vmem:[#allocation2 + $0x1f0] sm:$0xff]
    %v1241 = vld [vmem:[#allocation2 + $0x1f8] sm:$0xff]
    %1306 = vrot.lane.b32.xlu0 %v1178, 125
    %v1307 = vpop.permute.xlu0 %1306
    %1308 = vrot.lane.b32.xlu0 %v1179, 125
    %v1309 = vpop.permute.xlu0 %1308
    %1310 = vrot.lane.b32.xlu0 %v1180, 125
    %v1311 = vpop.permute.xlu0 %1310
    %1312 = vrot.lane.b32.xlu0 %v1181, 125
    %v1313 = vpop.permute.xlu0 %1312
    %1314 = vrot.lane.b32.xlu0 %v1182, 125
    %v1315 = vpop.permute.xlu0 %1314
    %1316 = vrot.lane.b32.xlu0 %v1183, 125
    %v1317 = vpop.permute.xlu0 %1316
    %1318 = vrot.lane.b32.xlu0 %v1184, 125
    %v1319 = vpop.permute.xlu0 %1318
    %1320 = vrot.lane.b32.xlu0 %v1185, 125
    %v1321 = vpop.permute.xlu0 %1320
    %1322 = vrot.lane.b32.xlu0 %v1186, 125
    %v1323 = vpop.permute.xlu0 %1322
    %1324 = vrot.lane.b32.xlu0 %v1187, 125
    %v1325 = vpop.permute.xlu0 %1324
    %1326 = vrot.lane.b32.xlu0 %v1188, 125
    %v1327 = vpop.permute.xlu0 %1326
    %1328 = vrot.lane.b32.xlu0 %v1189, 125
    %v1329 = vpop.permute.xlu0 %1328
    %1330 = vrot.lane.b32.xlu0 %v1190, 125
    %v1331 = vpop.permute.xlu0 %1330
    %1332 = vrot.lane.b32.xlu0 %v1191, 125
    %v1333 = vpop.permute.xlu0 %1332
    %1334 = vrot.lane.b32.xlu0 %v1192, 125
    %v1335 = vpop.permute.xlu0 %1334
    %1336 = vrot.lane.b32.xlu0 %v1193, 125
    %v1337 = vpop.permute.xlu0 %1336
    %1338 = vrot.lane.b32.xlu0 %v1194, 125
    %v1339 = vpop.permute.xlu0 %1338
    %1340 = vrot.lane.b32.xlu0 %v1195, 125
    %v1341 = vpop.permute.xlu0 %1340
    %1342 = vrot.lane.b32.xlu0 %v1196, 125
    %v1343 = vpop.permute.xlu0 %1342
    %1344 = vrot.lane.b32.xlu0 %v1197, 125
    %v1345 = vpop.permute.xlu0 %1344
    %1346 = vrot.lane.b32.xlu0 %v1198, 125
    %v1347 = vpop.permute.xlu0 %1346
    %1348 = vrot.lane.b32.xlu0 %v1199, 125
    %v1349 = vpop.permute.xlu0 %1348
    %1350 = vrot.lane.b32.xlu0 %v1200, 125
    %v1351 = vpop.permute.xlu0 %1350
    %1352 = vrot.lane.b32.xlu0 %v1201, 125
    %v1353 = vpop.permute.xlu0 %1352
    %1354 = vrot.lane.b32.xlu0 %v1202, 125
    %v1355 = vpop.permute.xlu0 %1354
    %1356 = vrot.lane.b32.xlu0 %v1203, 125
    %v1357 = vpop.permute.xlu0 %1356
    %1358 = vrot.lane.b32.xlu0 %v1204, 125
    %v1359 = vpop.permute.xlu0 %1358
    %1360 = vrot.lane.b32.xlu0 %v1205, 125
    %v1361 = vpop.permute.xlu0 %1360
    %1362 = vrot.lane.b32.xlu0 %v1206, 125
    %v1363 = vpop.permute.xlu0 %1362
    %1364 = vrot.lane.b32.xlu0 %v1207, 125
    %v1365 = vpop.permute.xlu0 %1364
    %1366 = vrot.lane.b32.xlu0 %v1208, 125
    %v1367 = vpop.permute.xlu0 %1366
    %1368 = vrot.lane.b32.xlu0 %v1209, 125
    %v1369 = vpop.permute.xlu0 %1368
    %1370 = vrot.lane.b32.xlu0 %v1210, 125
    %v1371 = vpop.permute.xlu0 %1370
    %1372 = vrot.lane.b32.xlu0 %v1211, 125
    %v1373 = vpop.permute.xlu0 %1372
    %1374 = vrot.lane.b32.xlu0 %v1212, 125
    %v1375 = vpop.permute.xlu0 %1374
    %1376 = vrot.lane.b32.xlu0 %v1213, 125
    %v1377 = vpop.permute.xlu0 %1376
    %1378 = vrot.lane.b32.xlu0 %v1214, 125
    %v1379 = vpop.permute.xlu0 %1378
    %1380 = vrot.lane.b32.xlu0 %v1215, 125
    %v1381 = vpop.permute.xlu0 %1380
    %1382 = vrot.lane.b32.xlu0 %v1216, 125
    %v1383 = vpop.permute.xlu0 %1382
    %1384 = vrot.lane.b32.xlu0 %v1217, 125
    %v1385 = vpop.permute.xlu0 %1384
    %1386 = vrot.lane.b32.xlu0 %v1218, 125
    %v1387 = vpop.permute.xlu0 %1386
    %1388 = vrot.lane.b32.xlu0 %v1219, 125
    %v1389 = vpop.permute.xlu0 %1388
    %1390 = vrot.lane.b32.xlu0 %v1220, 125
    %v1391 = vpop.permute.xlu0 %1390
    %1392 = vrot.lane.b32.xlu0 %v1221, 125
    %v1393 = vpop.permute.xlu0 %1392
    %1394 = vrot.lane.b32.xlu0 %v1222, 125
    %v1395 = vpop.permute.xlu0 %1394
    %1396 = vrot.lane.b32.xlu0 %v1223, 125
    %v1397 = vpop.permute.xlu0 %1396
    %1398 = vrot.lane.b32.xlu0 %v1224, 125
    %v1399 = vpop.permute.xlu0 %1398
    %1400 = vrot.lane.b32.xlu0 %v1225, 125
    %v1401 = vpop.permute.xlu0 %1400
    %1402 = vrot.lane.b32.xlu0 %v1226, 125
    %v1403 = vpop.permute.xlu0 %1402
    %1404 = vrot.lane.b32.xlu0 %v1227, 125
    %v1405 = vpop.permute.xlu0 %1404
    %1406 = vrot.lane.b32.xlu0 %v1228, 125
    %v1407 = vpop.permute.xlu0 %1406
    %1408 = vrot.lane.b32.xlu0 %v1229, 125
    %v1409 = vpop.permute.xlu0 %1408
    %1410 = vrot.lane.b32.xlu0 %v1230, 125
    %v1411 = vpop.permute.xlu0 %1410
    %1412 = vrot.lane.b32.xlu0 %v1231, 125
    %v1413 = vpop.permute.xlu0 %1412
    %1414 = vrot.lane.b32.xlu0 %v1232, 125
    %v1415 = vpop.permute.xlu0 %1414
    %1416 = vrot.lane.b32.xlu0 %v1233, 125
    %v1417 = vpop.permute.xlu0 %1416
    %1418 = vrot.lane.b32.xlu0 %v1234, 125
    %v1419 = vpop.permute.xlu0 %1418
    %1420 = vrot.lane.b32.xlu0 %v1235, 125
    %v1421 = vpop.permute.xlu0 %1420
    %1422 = vrot.lane.b32.xlu0 %v1236, 125
    %v1423 = vpop.permute.xlu0 %1422
    %1424 = vrot.lane.b32.xlu0 %v1237, 125
    %v1425 = vpop.permute.xlu0 %1424
    %1426 = vrot.lane.b32.xlu0 %v1238, 125
    %v1427 = vpop.permute.xlu0 %1426
    %1428 = vrot.lane.b32.xlu0 %v1239, 125
    %v1429 = vpop.permute.xlu0 %1428
    %1430 = vrot.lane.b32.xlu0 %v1240, 125
    %v1431 = vpop.permute.xlu0 %1430
    %1432 = vrot.lane.b32.xlu0 %v1241, 125
    %v1433 = vpop.permute.xlu0 %1432
    %vm1498 = vcmask 7168
    %1499 = vst.msk [vmem:[%s342 + $0x3] sm:$0xff] %vm1498, %v1307
    %1500 = vst.msk [vmem:[%s342 + $0x13] sm:$0xff] %vm1498, %v1309
    %1501 = vst.msk [vmem:[%s342 + $0x23] sm:$0xff] %vm1498, %v1311
    %1502 = vst.msk [vmem:[%s342 + $0x33] sm:$0xff] %vm1498, %v1313
    %1503 = vst.msk [vmem:[%s342 + $0x43] sm:$0xff] %vm1498, %v1315
    %1504 = vst.msk [vmem:[%s342 + $0x53] sm:$0xff] %vm1498, %v1317
    %1505 = vst.msk [vmem:[%s342 + $0x63] sm:$0xff] %vm1498, %v1319
    %1506 = vst.msk [vmem:[%s342 + $0x73] sm:$0xff] %vm1498, %v1321
    %1507 = vst.msk [vmem:[%s342 + $0xe3] sm:$0xff] %vm1498, %v1323
    %1508 = vst.msk [vmem:[%s342 + $0xf3] sm:$0xff] %vm1498, %v1325
    %1509 = vst.msk [vmem:[%s342 + $0x103] sm:$0xff] %vm1498, %v1327
    %1510 = vst.msk [vmem:[%s342 + $0x113] sm:$0xff] %vm1498, %v1329
    %1511 = vst.msk [vmem:[%s342 + $0x123] sm:$0xff] %vm1498, %v1331
    %1512 = vst.msk [vmem:[%s342 + $0x133] sm:$0xff] %vm1498, %v1333
    %1513 = vst.msk [vmem:[%s342 + $0x143] sm:$0xff] %vm1498, %v1335
    %1514 = vst.msk [vmem:[%s342 + $0x153] sm:$0xff] %vm1498, %v1337
    %1515 = vst.msk [vmem:[%s342 + $0x1c3] sm:$0xff] %vm1498, %v1339
    %1516 = vst.msk [vmem:[%s342 + $0x1d3] sm:$0xff] %vm1498, %v1341
    %1517 = vst.msk [vmem:[%s342 + $0x1e3] sm:$0xff] %vm1498, %v1343
    %1518 = vst.msk [vmem:[%s342 + $0x1f3] sm:$0xff] %vm1498, %v1345
    %1519 = vst.msk [vmem:[%s342 + $0x203] sm:$0xff] %vm1498, %v1347
    %1520 = vst.msk [vmem:[%s342 + $0x213] sm:$0xff] %vm1498, %v1349
    %1521 = vst.msk [vmem:[%s342 + $0x223] sm:$0xff] %vm1498, %v1351
    %1522 = vst.msk [vmem:[%s342 + $0x233] sm:$0xff] %vm1498, %v1353
    %1523 = vst.msk [vmem:[%s342 + $0x2a3] sm:$0xff] %vm1498, %v1355
    %1524 = vst.msk [vmem:[%s342 + $0x2b3] sm:$0xff] %vm1498, %v1357
    %1525 = vst.msk [vmem:[%s342 + $0x2c3] sm:$0xff] %vm1498, %v1359
    %1526 = vst.msk [vmem:[%s342 + $0x2d3] sm:$0xff] %vm1498, %v1361
    %1527 = vst.msk [vmem:[%s342 + $0x2e3] sm:$0xff] %vm1498, %v1363
    %1528 = vst.msk [vmem:[%s342 + $0x2f3] sm:$0xff] %vm1498, %v1365
    %1529 = vst.msk [vmem:[%s342 + $0x303] sm:$0xff] %vm1498, %v1367
    %1530 = vst.msk [vmem:[%s342 + $0x313] sm:$0xff] %vm1498, %v1369
    %1531 = vst.msk [vmem:[%s342 + $0x383] sm:$0xff] %vm1498, %v1371
    %1532 = vst.msk [vmem:[%s342 + $0x393] sm:$0xff] %vm1498, %v1373
    %1533 = vst.msk [vmem:[%s342 + $0x3a3] sm:$0xff] %vm1498, %v1375
    %1534 = vst.msk [vmem:[%s342 + $0x3b3] sm:$0xff] %vm1498, %v1377
    %1535 = vst.msk [vmem:[%s342 + $0x3c3] sm:$0xff] %vm1498, %v1379
    %1536 = vst.msk [vmem:[%s342 + $0x3d3] sm:$0xff] %vm1498, %v1381
    %1537 = vst.msk [vmem:[%s342 + $0x3e3] sm:$0xff] %vm1498, %v1383
    %1538 = vst.msk [vmem:[%s342 + $0x3f3] sm:$0xff] %vm1498, %v1385
    %1539 = vst.msk [vmem:[%s342 + $0x463] sm:$0xff] %vm1498, %v1387
    %1540 = vst.msk [vmem:[%s342 + $0x473] sm:$0xff] %vm1498, %v1389
    %1541 = vst.msk [vmem:[%s342 + $0x483] sm:$0xff] %vm1498, %v1391
    %1542 = vst.msk [vmem:[%s342 + $0x493] sm:$0xff] %vm1498, %v1393
    %1543 = vst.msk [vmem:[%s342 + $0x4a3] sm:$0xff] %vm1498, %v1395
    %1544 = vst.msk [vmem:[%s342 + $0x4b3] sm:$0xff] %vm1498, %v1397
    %1545 = vst.msk [vmem:[%s342 + $0x4c3] sm:$0xff] %vm1498, %v1399
    %1546 = vst.msk [vmem:[%s342 + $0x4d3] sm:$0xff] %vm1498, %v1401
    %1547 = vst.msk [vmem:[%s342 + $0x543] sm:$0xff] %vm1498, %v1403
    %1548 = vst.msk [vmem:[%s342 + $0x553] sm:$0xff] %vm1498, %v1405
    %1549 = vst.msk [vmem:[%s342 + $0x563] sm:$0xff] %vm1498, %v1407
    %1550 = vst.msk [vmem:[%s342 + $0x573] sm:$0xff] %vm1498, %v1409
    %1551 = vst.msk [vmem:[%s342 + $0x583] sm:$0xff] %vm1498, %v1411
    %1552 = vst.msk [vmem:[%s342 + $0x593] sm:$0xff] %vm1498, %v1413
    %1553 = vst.msk [vmem:[%s342 + $0x5a3] sm:$0xff] %vm1498, %v1415
    %1554 = vst.msk [vmem:[%s342 + $0x5b3] sm:$0xff] %vm1498, %v1417
    %1555 = vst.msk [vmem:[%s342 + $0x623] sm:$0xff] %vm1498, %v1419
    %1556 = vst.msk [vmem:[%s342 + $0x633] sm:$0xff] %vm1498, %v1421
    %1557 = vst.msk [vmem:[%s342 + $0x643] sm:$0xff] %vm1498, %v1423
    %1558 = vst.msk [vmem:[%s342 + $0x653] sm:$0xff] %vm1498, %v1425
    %1559 = vst.msk [vmem:[%s342 + $0x663] sm:$0xff] %vm1498, %v1427
    %1560 = vst.msk [vmem:[%s342 + $0x673] sm:$0xff] %vm1498, %v1429
    %1561 = vst.msk [vmem:[%s342 + $0x683] sm:$0xff] %vm1498, %v1431
    %1562 = vst.msk [vmem:[%s342 + $0x693] sm:$0xff] %vm1498, %v1433
    %v1563 = vld [vmem:[#allocation2] sm:$0xff]
    %v1564 = vld [vmem:[#allocation2 + $0x8] sm:$0xff]
    %v1565 = vld [vmem:[#allocation2 + $0x10] sm:$0xff]
    %v1566 = vld [vmem:[#allocation2 + $0x18] sm:$0xff]
    %v1567 = vld [vmem:[#allocation2 + $0x20] sm:$0xff]
    %v1568 = vld [vmem:[#allocation2 + $0x28] sm:$0xff]
    %v1569 = vld [vmem:[#allocation2 + $0x30] sm:$0xff]
    %v1570 = vld [vmem:[#allocation2 + $0x38] sm:$0xff]
    %v1571 = vld [vmem:[#allocation2 + $0x40] sm:$0xff]
    %v1572 = vld [vmem:[#allocation2 + $0x48] sm:$0xff]
    %v1573 = vld [vmem:[#allocation2 + $0x50] sm:$0xff]
    %v1574 = vld [vmem:[#allocation2 + $0x58] sm:$0xff]
    %v1575 = vld [vmem:[#allocation2 + $0x60] sm:$0xff]
    %v1576 = vld [vmem:[#allocation2 + $0x68] sm:$0xff]
    %v1577 = vld [vmem:[#allocation2 + $0x70] sm:$0xff]
    %v1578 = vld [vmem:[#allocation2 + $0x78] sm:$0xff]
    %v1579 = vld [vmem:[#allocation2 + $0x80] sm:$0xff]
    %v1580 = vld [vmem:[#allocation2 + $0x88] sm:$0xff]
    %v1581 = vld [vmem:[#allocation2 + $0x90] sm:$0xff]
    %v1582 = vld [vmem:[#allocation2 + $0x98] sm:$0xff]
    %v1583 = vld [vmem:[#allocation2 + $0xa0] sm:$0xff]
    %v1584 = vld [vmem:[#allocation2 + $0xa8] sm:$0xff]
    %v1585 = vld [vmem:[#allocation2 + $0xb0] sm:$0xff]
    %v1586 = vld [vmem:[#allocation2 + $0xb8] sm:$0xff]
    %v1587 = vld [vmem:[#allocation2 + $0xc0] sm:$0xff]
    %v1588 = vld [vmem:[#allocation2 + $0xc8] sm:$0xff]
    %v1589 = vld [vmem:[#allocation2 + $0xd0] sm:$0xff]
    %v1590 = vld [vmem:[#allocation2 + $0xd8] sm:$0xff]
    %v1591 = vld [vmem:[#allocation2 + $0xe0] sm:$0xff]
    %v1592 = vld [vmem:[#allocation2 + $0xe8] sm:$0xff]
    %v1593 = vld [vmem:[#allocation2 + $0xf0] sm:$0xff]
    %v1594 = vld [vmem:[#allocation2 + $0xf8] sm:$0xff]
    %v1595 = vld [vmem:[#allocation2 + $0x100] sm:$0xff]
    %v1596 = vld [vmem:[#allocation2 + $0x108] sm:$0xff]
    %v1597 = vld [vmem:[#allocation2 + $0x110] sm:$0xff]
    %v1598 = vld [vmem:[#allocation2 + $0x118] sm:$0xff]
    %v1599 = vld [vmem:[#allocation2 + $0x120] sm:$0xff]
    %v1600 = vld [vmem:[#allocation2 + $0x128] sm:$0xff]
    %v1601 = vld [vmem:[#allocation2 + $0x130] sm:$0xff]
    %v1602 = vld [vmem:[#allocation2 + $0x138] sm:$0xff]
    %v1603 = vld [vmem:[#allocation2 + $0x140] sm:$0xff]
    %v1604 = vld [vmem:[#allocation2 + $0x148] sm:$0xff]
    %v1605 = vld [vmem:[#allocation2 + $0x150] sm:$0xff]
    %v1606 = vld [vmem:[#allocation2 + $0x158] sm:$0xff]
    %v1607 = vld [vmem:[#allocation2 + $0x160] sm:$0xff]
    %v1608 = vld [vmem:[#allocation2 + $0x168] sm:$0xff]
    %v1609 = vld [vmem:[#allocation2 + $0x170] sm:$0xff]
    %v1610 = vld [vmem:[#allocation2 + $0x178] sm:$0xff]
    %v1611 = vld [vmem:[#allocation2 + $0x180] sm:$0xff]
    %v1612 = vld [vmem:[#allocation2 + $0x188] sm:$0xff]
    %v1613 = vld [vmem:[#allocation2 + $0x190] sm:$0xff]
    %v1614 = vld [vmem:[#allocation2 + $0x198] sm:$0xff]
    %v1615 = vld [vmem:[#allocation2 + $0x1a0] sm:$0xff]
    %v1616 = vld [vmem:[#allocation2 + $0x1a8] sm:$0xff]
    %v1617 = vld [vmem:[#allocation2 + $0x1b0] sm:$0xff]
    %v1618 = vld [vmem:[#allocation2 + $0x1b8] sm:$0xff]
    %v1619 = vld [vmem:[#allocation2 + $0x1c0] sm:$0xff]
    %v1620 = vld [vmem:[#allocation2 + $0x1c8] sm:$0xff]
    %v1621 = vld [vmem:[#allocation2 + $0x1d0] sm:$0xff]
    %v1622 = vld [vmem:[#allocation2 + $0x1d8] sm:$0xff]
    %v1623 = vld [vmem:[#allocation2 + $0x1e0] sm:$0xff]
    %v1624 = vld [vmem:[#allocation2 + $0x1e8] sm:$0xff]
    %v1625 = vld [vmem:[#allocation2 + $0x1f0] sm:$0xff]
    %v1626 = vld [vmem:[#allocation2 + $0x1f8] sm:$0xff]
    %1691 = vrot.lane.b32.xlu0 %v1563, 5
    %v1692 = vpop.permute.xlu0 %1691
    %1693 = vrot.lane.b32.xlu0 %v1564, 5
    %v1694 = vpop.permute.xlu0 %1693
    %1695 = vrot.lane.b32.xlu0 %v1565, 5
    %v1696 = vpop.permute.xlu0 %1695
    %1697 = vrot.lane.b32.xlu0 %v1566, 5
    %v1698 = vpop.permute.xlu0 %1697
    %1699 = vrot.lane.b32.xlu0 %v1567, 5
    %v1700 = vpop.permute.xlu0 %1699
    %1701 = vrot.lane.b32.xlu0 %v1568, 5
    %v1702 = vpop.permute.xlu0 %1701
    %1703 = vrot.lane.b32.xlu0 %v1569, 5
    %v1704 = vpop.permute.xlu0 %1703
    %1705 = vrot.lane.b32.xlu0 %v1570, 5
    %v1706 = vpop.permute.xlu0 %1705
    %1707 = vrot.lane.b32.xlu0 %v1571, 5
    %v1708 = vpop.permute.xlu0 %1707
    %1709 = vrot.lane.b32.xlu0 %v1572, 5
    %v1710 = vpop.permute.xlu0 %1709
    %1711 = vrot.lane.b32.xlu0 %v1573, 5
    %v1712 = vpop.permute.xlu0 %1711
    %1713 = vrot.lane.b32.xlu0 %v1574, 5
    %v1714 = vpop.permute.xlu0 %1713
    %1715 = vrot.lane.b32.xlu0 %v1575, 5
    %v1716 = vpop.permute.xlu0 %1715
    %1717 = vrot.lane.b32.xlu0 %v1576, 5
    %v1718 = vpop.permute.xlu0 %1717
    %1719 = vrot.lane.b32.xlu0 %v1577, 5
    %v1720 = vpop.permute.xlu0 %1719
    %1721 = vrot.lane.b32.xlu0 %v1578, 5
    %v1722 = vpop.permute.xlu0 %1721
    %1723 = vrot.lane.b32.xlu0 %v1579, 5
    %v1724 = vpop.permute.xlu0 %1723
    %1725 = vrot.lane.b32.xlu0 %v1580, 5
    %v1726 = vpop.permute.xlu0 %1725
    %1727 = vrot.lane.b32.xlu0 %v1581, 5
    %v1728 = vpop.permute.xlu0 %1727
    %1729 = vrot.lane.b32.xlu0 %v1582, 5
    %v1730 = vpop.permute.xlu0 %1729
    %1731 = vrot.lane.b32.xlu0 %v1583, 5
    %v1732 = vpop.permute.xlu0 %1731
    %1733 = vrot.lane.b32.xlu0 %v1584, 5
    %v1734 = vpop.permute.xlu0 %1733
    %1735 = vrot.lane.b32.xlu0 %v1585, 5
    %v1736 = vpop.permute.xlu0 %1735
    %1737 = vrot.lane.b32.xlu0 %v1586, 5
    %v1738 = vpop.permute.xlu0 %1737
    %1739 = vrot.lane.b32.xlu0 %v1587, 5
    %v1740 = vpop.permute.xlu0 %1739
    %1741 = vrot.lane.b32.xlu0 %v1588, 5
    %v1742 = vpop.permute.xlu0 %1741
    %1743 = vrot.lane.b32.xlu0 %v1589, 5
    %v1744 = vpop.permute.xlu0 %1743
    %1745 = vrot.lane.b32.xlu0 %v1590, 5
    %v1746 = vpop.permute.xlu0 %1745
    %1747 = vrot.lane.b32.xlu0 %v1591, 5
    %v1748 = vpop.permute.xlu0 %1747
    %1749 = vrot.lane.b32.xlu0 %v1592, 5
    %v1750 = vpop.permute.xlu0 %1749
    %1751 = vrot.lane.b32.xlu0 %v1593, 5
    %v1752 = vpop.permute.xlu0 %1751
    %1753 = vrot.lane.b32.xlu0 %v1594, 5
    %v1754 = vpop.permute.xlu0 %1753
    %1755 = vrot.lane.b32.xlu0 %v1595, 5
    %v1756 = vpop.permute.xlu0 %1755
    %1757 = vrot.lane.b32.xlu0 %v1596, 5
    %v1758 = vpop.permute.xlu0 %1757
    %1759 = vrot.lane.b32.xlu0 %v1597, 5
    %v1760 = vpop.permute.xlu0 %1759
    %1761 = vrot.lane.b32.xlu0 %v1598, 5
    %v1762 = vpop.permute.xlu0 %1761
    %1763 = vrot.lane.b32.xlu0 %v1599, 5
    %v1764 = vpop.permute.xlu0 %1763
    %1765 = vrot.lane.b32.xlu0 %v1600, 5
    %v1766 = vpop.permute.xlu0 %1765
    %1767 = vrot.lane.b32.xlu0 %v1601, 5
    %v1768 = vpop.permute.xlu0 %1767
    %1769 = vrot.lane.b32.xlu0 %v1602, 5
    %v1770 = vpop.permute.xlu0 %1769
    %1771 = vrot.lane.b32.xlu0 %v1603, 5
    %v1772 = vpop.permute.xlu0 %1771
    %1773 = vrot.lane.b32.xlu0 %v1604, 5
    %v1774 = vpop.permute.xlu0 %1773
    %1775 = vrot.lane.b32.xlu0 %v1605, 5
    %v1776 = vpop.permute.xlu0 %1775
    %1777 = vrot.lane.b32.xlu0 %v1606, 5
    %v1778 = vpop.permute.xlu0 %1777
    %1779 = vrot.lane.b32.xlu0 %v1607, 5
    %v1780 = vpop.permute.xlu0 %1779
    %1781 = vrot.lane.b32.xlu0 %v1608, 5
    %v1782 = vpop.permute.xlu0 %1781
    %1783 = vrot.lane.b32.xlu0 %v1609, 5
    %v1784 = vpop.permute.xlu0 %1783
    %1785 = vrot.lane.b32.xlu0 %v1610, 5
    %v1786 = vpop.permute.xlu0 %1785
    %1787 = vrot.lane.b32.xlu0 %v1611, 5
    %v1788 = vpop.permute.xlu0 %1787
    %1789 = vrot.lane.b32.xlu0 %v1612, 5
    %v1790 = vpop.permute.xlu0 %1789
    %1791 = vrot.lane.b32.xlu0 %v1613, 5
    %v1792 = vpop.permute.xlu0 %1791
    %1793 = vrot.lane.b32.xlu0 %v1614, 5
    %v1794 = vpop.permute.xlu0 %1793
    %1795 = vrot.lane.b32.xlu0 %v1615, 5
    %v1796 = vpop.permute.xlu0 %1795
    %1797 = vrot.lane.b32.xlu0 %v1616, 5
    %v1798 = vpop.permute.xlu0 %1797
    %1799 = vrot.lane.b32.xlu0 %v1617, 5
    %v1800 = vpop.permute.xlu0 %1799
    %1801 = vrot.lane.b32.xlu0 %v1618, 5
    %v1802 = vpop.permute.xlu0 %1801
    %1803 = vrot.lane.b32.xlu0 %v1619, 5
    %v1804 = vpop.permute.xlu0 %1803
    %1805 = vrot.lane.b32.xlu0 %v1620, 5
    %v1806 = vpop.permute.xlu0 %1805
    %1807 = vrot.lane.b32.xlu0 %v1621, 5
    %v1808 = vpop.permute.xlu0 %1807
    %1809 = vrot.lane.b32.xlu0 %v1622, 5
    %v1810 = vpop.permute.xlu0 %1809
    %1811 = vrot.lane.b32.xlu0 %v1623, 5
    %v1812 = vpop.permute.xlu0 %1811
    %1813 = vrot.lane.b32.xlu0 %v1624, 5
    %v1814 = vpop.permute.xlu0 %1813
    %1815 = vrot.lane.b32.xlu0 %v1625, 5
    %v1816 = vpop.permute.xlu0 %1815
    %1817 = vrot.lane.b32.xlu0 %v1626, 5
    %v1818 = vpop.permute.xlu0 %1817
    %vm1883 = vcmask 97368
    %1884 = vst.msk [vmem:[%s342 + $0x3] sm:$0xff] %vm1883, %v1692
    %1885 = vst.msk [vmem:[%s342 + $0x13] sm:$0xff] %vm1883, %v1694
    %1886 = vst.msk [vmem:[%s342 + $0x23] sm:$0xff] %vm1883, %v1696
    %1887 = vst.msk [vmem:[%s342 + $0x33] sm:$0xff] %vm1883, %v1698
    %1888 = vst.msk [vmem:[%s342 + $0x43] sm:$0xff] %vm1883, %v1700
    %1889 = vst.msk [vmem:[%s342 + $0x53] sm:$0xff] %vm1883, %v1702
    %1890 = vst.msk [vmem:[%s342 + $0x63] sm:$0xff] %vm1883, %v1704
    %1891 = vst.msk [vmem:[%s342 + $0x73] sm:$0xff] %vm1883, %v1706
    %1892 = vst.msk [vmem:[%s342 + $0xe3] sm:$0xff] %vm1883, %v1708
    %1893 = vst.msk [vmem:[%s342 + $0xf3] sm:$0xff] %vm1883, %v1710
    %1894 = vst.msk [vmem:[%s342 + $0x103] sm:$0xff] %vm1883, %v1712
    %1895 = vst.msk [vmem:[%s342 + $0x113] sm:$0xff] %vm1883, %v1714
    %1896 = vst.msk [vmem:[%s342 + $0x123] sm:$0xff] %vm1883, %v1716
    %1897 = vst.msk [vmem:[%s342 + $0x133] sm:$0xff] %vm1883, %v1718
    %1898 = vst.msk [vmem:[%s342 + $0x143] sm:$0xff] %vm1883, %v1720
    %1899 = vst.msk [vmem:[%s342 + $0x153] sm:$0xff] %vm1883, %v1722
    %1900 = vst.msk [vmem:[%s342 + $0x1c3] sm:$0xff] %vm1883, %v1724
    %1901 = vst.msk [vmem:[%s342 + $0x1d3] sm:$0xff] %vm1883, %v1726
    %1902 = vst.msk [vmem:[%s342 + $0x1e3] sm:$0xff] %vm1883, %v1728
    %1903 = vst.msk [vmem:[%s342 + $0x1f3] sm:$0xff] %vm1883, %v1730
    %1904 = vst.msk [vmem:[%s342 + $0x203] sm:$0xff] %vm1883, %v1732
    %1905 = vst.msk [vmem:[%s342 + $0x213] sm:$0xff] %vm1883, %v1734
    %1906 = vst.msk [vmem:[%s342 + $0x223] sm:$0xff] %vm1883, %v1736
    %1907 = vst.msk [vmem:[%s342 + $0x233] sm:$0xff] %vm1883, %v1738
    %1908 = vst.msk [vmem:[%s342 + $0x2a3] sm:$0xff] %vm1883, %v1740
    %1909 = vst.msk [vmem:[%s342 + $0x2b3] sm:$0xff] %vm1883, %v1742
    %1910 = vst.msk [vmem:[%s342 + $0x2c3] sm:$0xff] %vm1883, %v1744
    %1911 = vst.msk [vmem:[%s342 + $0x2d3] sm:$0xff] %vm1883, %v1746
    %1912 = vst.msk [vmem:[%s342 + $0x2e3] sm:$0xff] %vm1883, %v1748
    %1913 = vst.msk [vmem:[%s342 + $0x2f3] sm:$0xff] %vm1883, %v1750
    %1914 = vst.msk [vmem:[%s342 + $0x303] sm:$0xff] %vm1883, %v1752
    %1915 = vst.msk [vmem:[%s342 + $0x313] sm:$0xff] %vm1883, %v1754
    %1916 = vst.msk [vmem:[%s342 + $0x383] sm:$0xff] %vm1883, %v1756
    %1917 = vst.msk [vmem:[%s342 + $0x393] sm:$0xff] %vm1883, %v1758
    %1918 = vst.msk [vmem:[%s342 + $0x3a3] sm:$0xff] %vm1883, %v1760
    %1919 = vst.msk [vmem:[%s342 + $0x3b3] sm:$0xff] %vm1883, %v1762
    %1920 = vst.msk [vmem:[%s342 + $0x3c3] sm:$0xff] %vm1883, %v1764
    %1921 = vst.msk [vmem:[%s342 + $0x3d3] sm:$0xff] %vm1883, %v1766
    %1922 = vst.msk [vmem:[%s342 + $0x3e3] sm:$0xff] %vm1883, %v1768
    %1923 = vst.msk [vmem:[%s342 + $0x3f3] sm:$0xff] %vm1883, %v1770
    %1924 = vst.msk [vmem:[%s342 + $0x463] sm:$0xff] %vm1883, %v1772
    %1925 = vst.msk [vmem:[%s342 + $0x473] sm:$0xff] %vm1883, %v1774
    %1926 = vst.msk [vmem:[%s342 + $0x483] sm:$0xff] %vm1883, %v1776
    %1927 = vst.msk [vmem:[%s342 + $0x493] sm:$0xff] %vm1883, %v1778
    %1928 = vst.msk [vmem:[%s342 + $0x4a3] sm:$0xff] %vm1883, %v1780
    %1929 = vst.msk [vmem:[%s342 + $0x4b3] sm:$0xff] %vm1883, %v1782
    %1930 = vst.msk [vmem:[%s342 + $0x4c3] sm:$0xff] %vm1883, %v1784
    %1931 = vst.msk [vmem:[%s342 + $0x4d3] sm:$0xff] %vm1883, %v1786
    %1932 = vst.msk [vmem:[%s342 + $0x543] sm:$0xff] %vm1883, %v1788
    %1933 = vst.msk [vmem:[%s342 + $0x553] sm:$0xff] %vm1883, %v1790
    %1934 = vst.msk [vmem:[%s342 + $0x563] sm:$0xff] %vm1883, %v1792
    %1935 = vst.msk [vmem:[%s342 + $0x573] sm:$0xff] %vm1883, %v1794
    %1936 = vst.msk [vmem:[%s342 + $0x583] sm:$0xff] %vm1883, %v1796
    %1937 = vst.msk [vmem:[%s342 + $0x593] sm:$0xff] %vm1883, %v1798
    %1938 = vst.msk [vmem:[%s342 + $0x5a3] sm:$0xff] %vm1883, %v1800
    %1939 = vst.msk [vmem:[%s342 + $0x5b3] sm:$0xff] %vm1883, %v1802
    %1940 = vst.msk [vmem:[%s342 + $0x623] sm:$0xff] %vm1883, %v1804
    %1941 = vst.msk [vmem:[%s342 + $0x633] sm:$0xff] %vm1883, %v1806
    %1942 = vst.msk [vmem:[%s342 + $0x643] sm:$0xff] %vm1883, %v1808
    %1943 = vst.msk [vmem:[%s342 + $0x653] sm:$0xff] %vm1883, %v1810
    %1944 = vst.msk [vmem:[%s342 + $0x663] sm:$0xff] %vm1883, %v1812
    %1945 = vst.msk [vmem:[%s342 + $0x673] sm:$0xff] %vm1883, %v1814
    %1946 = vst.msk [vmem:[%s342 + $0x683] sm:$0xff] %vm1883, %v1816
    %1947 = vst.msk [vmem:[%s342 + $0x693] sm:$0xff] %vm1883, %v1818
    %v1948 = vld [vmem:[#allocation2] sm:$0xff]
    %v1949 = vld [vmem:[#allocation2 + $0x8] sm:$0xff]
    %v1950 = vld [vmem:[#allocation2 + $0x10] sm:$0xff]
    %v1951 = vld [vmem:[#allocation2 + $0x18] sm:$0xff]
    %v1952 = vld [vmem:[#allocation2 + $0x20] sm:$0xff]
    %v1953 = vld [vmem:[#allocation2 + $0x28] sm:$0xff]
    %v1954 = vld [vmem:[#allocation2 + $0x30] sm:$0xff]
    %v1955 = vld [vmem:[#allocation2 + $0x38] sm:$0xff]
    %v1956 = vld [vmem:[#allocation2 + $0x40] sm:$0xff]
    %v1957 = vld [vmem:[#allocation2 + $0x48] sm:$0xff]
    %v1958 = vld [vmem:[#allocation2 + $0x50] sm:$0xff]
    %v1959 = vld [vmem:[#allocation2 + $0x58] sm:$0xff]
    %v1960 = vld [vmem:[#allocation2 + $0x60] sm:$0xff]
    %v1961 = vld [vmem:[#allocation2 + $0x68] sm:$0xff]
    %v1962 = vld [vmem:[#allocation2 + $0x70] sm:$0xff]
    %v1963 = vld [vmem:[#allocation2 + $0x78] sm:$0xff]
    %v1964 = vld [vmem:[#allocation2 + $0x80] sm:$0xff]
    %v1965 = vld [vmem:[#allocation2 + $0x88] sm:$0xff]
    %v1966 = vld [vmem:[#allocation2 + $0x90] sm:$0xff]
    %v1967 = vld [vmem:[#allocation2 + $0x98] sm:$0xff]
    %v1968 = vld [vmem:[#allocation2 + $0xa0] sm:$0xff]
    %v1969 = vld [vmem:[#allocation2 + $0xa8] sm:$0xff]
    %v1970 = vld [vmem:[#allocation2 + $0xb0] sm:$0xff]
    %v1971 = vld [vmem:[#allocation2 + $0xb8] sm:$0xff]
    %v1972 = vld [vmem:[#allocation2 + $0xc0] sm:$0xff]
    %v1973 = vld [vmem:[#allocation2 + $0xc8] sm:$0xff]
    %v1974 = vld [vmem:[#allocation2 + $0xd0] sm:$0xff]
    %v1975 = vld [vmem:[#allocation2 + $0xd8] sm:$0xff]
    %v1976 = vld [vmem:[#allocation2 + $0xe0] sm:$0xff]
    %v1977 = vld [vmem:[#allocation2 + $0xe8] sm:$0xff]
    %v1978 = vld [vmem:[#allocation2 + $0xf0] sm:$0xff]
    %v1979 = vld [vmem:[#allocation2 + $0xf8] sm:$0xff]
    %v1980 = vld [vmem:[#allocation2 + $0x100] sm:$0xff]
    %v1981 = vld [vmem:[#allocation2 + $0x108] sm:$0xff]
    %v1982 = vld [vmem:[#allocation2 + $0x110] sm:$0xff]
    %v1983 = vld [vmem:[#allocation2 + $0x118] sm:$0xff]
    %v1984 = vld [vmem:[#allocation2 + $0x120] sm:$0xff]
    %v1985 = vld [vmem:[#allocation2 + $0x128] sm:$0xff]
    %v1986 = vld [vmem:[#allocation2 + $0x130] sm:$0xff]
    %v1987 = vld [vmem:[#allocation2 + $0x138] sm:$0xff]
    %v1988 = vld [vmem:[#allocation2 + $0x140] sm:$0xff]
    %v1989 = vld [vmem:[#allocation2 + $0x148] sm:$0xff]
    %v1990 = vld [vmem:[#allocation2 + $0x150] sm:$0xff]
    %v1991 = vld [vmem:[#allocation2 + $0x158] sm:$0xff]
    %v1992 = vld [vmem:[#allocation2 + $0x160] sm:$0xff]
    %v1993 = vld [vmem:[#allocation2 + $0x168] sm:$0xff]
    %v1994 = vld [vmem:[#allocation2 + $0x170] sm:$0xff]
    %v1995 = vld [vmem:[#allocation2 + $0x178] sm:$0xff]
    %v1996 = vld [vmem:[#allocation2 + $0x180] sm:$0xff]
    %v1997 = vld [vmem:[#allocation2 + $0x188] sm:$0xff]
    %v1998 = vld [vmem:[#allocation2 + $0x190] sm:$0xff]
    %v1999 = vld [vmem:[#allocation2 + $0x198] sm:$0xff]
    %v2000 = vld [vmem:[#allocation2 + $0x1a0] sm:$0xff]
    %v2001 = vld [vmem:[#allocation2 + $0x1a8] sm:$0xff]
    %v2002 = vld [vmem:[#allocation2 + $0x1b0] sm:$0xff]
    %v2003 = vld [vmem:[#allocation2 + $0x1b8] sm:$0xff]
    %v2004 = vld [vmem:[#allocation2 + $0x1c0] sm:$0xff]
    %v2005 = vld [vmem:[#allocation2 + $0x1c8] sm:$0xff]
    %v2006 = vld [vmem:[#allocation2 + $0x1d0] sm:$0xff]
    %v2007 = vld [vmem:[#allocation2 + $0x1d8] sm:$0xff]
    %v2008 = vld [vmem:[#allocation2 + $0x1e0] sm:$0xff]
    %v2009 = vld [vmem:[#allocation2 + $0x1e8] sm:$0xff]
    %v2010 = vld [vmem:[#allocation2 + $0x1f0] sm:$0xff]
    %v2011 = vld [vmem:[#allocation2 + $0x1f8] sm:$0xff]
    %2076 = vrot.lane.b32.xlu0 %v1948, 7
    %v2077 = vpop.permute.xlu0 %2076
    %2078 = vrot.lane.b32.xlu0 %v1949, 7
    %v2079 = vpop.permute.xlu0 %2078
    %2080 = vrot.lane.b32.xlu0 %v1950, 7
    %v2081 = vpop.permute.xlu0 %2080
    %2082 = vrot.lane.b32.xlu0 %v1951, 7
    %v2083 = vpop.permute.xlu0 %2082
    %2084 = vrot.lane.b32.xlu0 %v1952, 7
    %v2085 = vpop.permute.xlu0 %2084
    %2086 = vrot.lane.b32.xlu0 %v1953, 7
    %v2087 = vpop.permute.xlu0 %2086
    %2088 = vrot.lane.b32.xlu0 %v1954, 7
    %v2089 = vpop.permute.xlu0 %2088
    %2090 = vrot.lane.b32.xlu0 %v1955, 7
    %v2091 = vpop.permute.xlu0 %2090
    %2092 = vrot.lane.b32.xlu0 %v1956, 7
    %v2093 = vpop.permute.xlu0 %2092
    %2094 = vrot.lane.b32.xlu0 %v1957, 7
    %v2095 = vpop.permute.xlu0 %2094
    %2096 = vrot.lane.b32.xlu0 %v1958, 7
    %v2097 = vpop.permute.xlu0 %2096
    %2098 = vrot.lane.b32.xlu0 %v1959, 7
    %v2099 = vpop.permute.xlu0 %2098
    %2100 = vrot.lane.b32.xlu0 %v1960, 7
    %v2101 = vpop.permute.xlu0 %2100
    %2102 = vrot.lane.b32.xlu0 %v1961, 7
    %v2103 = vpop.permute.xlu0 %2102
    %2104 = vrot.lane.b32.xlu0 %v1962, 7
    %v2105 = vpop.permute.xlu0 %2104
    %2106 = vrot.lane.b32.xlu0 %v1963, 7
    %v2107 = vpop.permute.xlu0 %2106
    %2108 = vrot.lane.b32.xlu0 %v1964, 7
    %v2109 = vpop.permute.xlu0 %2108
    %2110 = vrot.lane.b32.xlu0 %v1965, 7
    %v2111 = vpop.permute.xlu0 %2110
    %2112 = vrot.lane.b32.xlu0 %v1966, 7
    %v2113 = vpop.permute.xlu0 %2112
    %2114 = vrot.lane.b32.xlu0 %v1967, 7
    %v2115 = vpop.permute.xlu0 %2114
    %2116 = vrot.lane.b32.xlu0 %v1968, 7
    %v2117 = vpop.permute.xlu0 %2116
    %2118 = vrot.lane.b32.xlu0 %v1969, 7
    %v2119 = vpop.permute.xlu0 %2118
    %2120 = vrot.lane.b32.xlu0 %v1970, 7
    %v2121 = vpop.permute.xlu0 %2120
    %2122 = vrot.lane.b32.xlu0 %v1971, 7
    %v2123 = vpop.permute.xlu0 %2122
    %2124 = vrot.lane.b32.xlu0 %v1972, 7
    %v2125 = vpop.permute.xlu0 %2124
    %2126 = vrot.lane.b32.xlu0 %v1973, 7
    %v2127 = vpop.permute.xlu0 %2126
    %2128 = vrot.lane.b32.xlu0 %v1974, 7
    %v2129 = vpop.permute.xlu0 %2128
    %2130 = vrot.lane.b32.xlu0 %v1975, 7
    %v2131 = vpop.permute.xlu0 %2130
    %2132 = vrot.lane.b32.xlu0 %v1976, 7
    %v2133 = vpop.permute.xlu0 %2132
    %2134 = vrot.lane.b32.xlu0 %v1977, 7
    %v2135 = vpop.permute.xlu0 %2134
    %2136 = vrot.lane.b32.xlu0 %v1978, 7
    %v2137 = vpop.permute.xlu0 %2136
    %2138 = vrot.lane.b32.xlu0 %v1979, 7
    %v2139 = vpop.permute.xlu0 %2138
    %2140 = vrot.lane.b32.xlu0 %v1980, 7
    %v2141 = vpop.permute.xlu0 %2140
    %2142 = vrot.lane.b32.xlu0 %v1981, 7
    %v2143 = vpop.permute.xlu0 %2142
    %2144 = vrot.lane.b32.xlu0 %v1982, 7
    %v2145 = vpop.permute.xlu0 %2144
    %2146 = vrot.lane.b32.xlu0 %v1983, 7
    %v2147 = vpop.permute.xlu0 %2146
    %2148 = vrot.lane.b32.xlu0 %v1984, 7
    %v2149 = vpop.permute.xlu0 %2148
    %2150 = vrot.lane.b32.xlu0 %v1985, 7
    %v2151 = vpop.permute.xlu0 %2150
    %2152 = vrot.lane.b32.xlu0 %v1986, 7
    %v2153 = vpop.permute.xlu0 %2152
    %2154 = vrot.lane.b32.xlu0 %v1987, 7
    %v2155 = vpop.permute.xlu0 %2154
    %2156 = vrot.lane.b32.xlu0 %v1988, 7
    %v2157 = vpop.permute.xlu0 %2156
    %2158 = vrot.lane.b32.xlu0 %v1989, 7
    %v2159 = vpop.permute.xlu0 %2158
    %2160 = vrot.lane.b32.xlu0 %v1990, 7
    %v2161 = vpop.permute.xlu0 %2160
    %2162 = vrot.lane.b32.xlu0 %v1991, 7
    %v2163 = vpop.permute.xlu0 %2162
    %2164 = vrot.lane.b32.xlu0 %v1992, 7
    %v2165 = vpop.permute.xlu0 %2164
    %2166 = vrot.lane.b32.xlu0 %v1993, 7
    %v2167 = vpop.permute.xlu0 %2166
    %2168 = vrot.lane.b32.xlu0 %v1994, 7
    %v2169 = vpop.permute.xlu0 %2168
    %2170 = vrot.lane.b32.xlu0 %v1995, 7
    %v2171 = vpop.permute.xlu0 %2170
    %2172 = vrot.lane.b32.xlu0 %v1996, 7
    %v2173 = vpop.permute.xlu0 %2172
    %2174 = vrot.lane.b32.xlu0 %v1997, 7
    %v2175 = vpop.permute.xlu0 %2174
    %2176 = vrot.lane.b32.xlu0 %v1998, 7
    %v2177 = vpop.permute.xlu0 %2176
    %2178 = vrot.lane.b32.xlu0 %v1999, 7
    %v2179 = vpop.permute.xlu0 %2178
    %2180 = vrot.lane.b32.xlu0 %v2000, 7
    %v2181 = vpop.permute.xlu0 %2180
    %2182 = vrot.lane.b32.xlu0 %v2001, 7
    %v2183 = vpop.permute.xlu0 %2182
    %2184 = vrot.lane.b32.xlu0 %v2002, 7
    %v2185 = vpop.permute.xlu0 %2184
    %2186 = vrot.lane.b32.xlu0 %v2003, 7
    %v2187 = vpop.permute.xlu0 %2186
    %2188 = vrot.lane.b32.xlu0 %v2004, 7
    %v2189 = vpop.permute.xlu0 %2188
    %2190 = vrot.lane.b32.xlu0 %v2005, 7
    %v2191 = vpop.permute.xlu0 %2190
    %2192 = vrot.lane.b32.xlu0 %v2006, 7
    %v2193 = vpop.permute.xlu0 %2192
    %2194 = vrot.lane.b32.xlu0 %v2007, 7
    %v2195 = vpop.permute.xlu0 %2194
    %2196 = vrot.lane.b32.xlu0 %v2008, 7
    %v2197 = vpop.permute.xlu0 %2196
    %2198 = vrot.lane.b32.xlu0 %v2009, 7
    %v2199 = vpop.permute.xlu0 %2198
    %2200 = vrot.lane.b32.xlu0 %v2010, 7
    %v2201 = vpop.permute.xlu0 %2200
    %2202 = vrot.lane.b32.xlu0 %v2011, 7
    %v2203 = vpop.permute.xlu0 %2202
    %vm2268 = vcmask 105568
    %2269 = vst.msk [vmem:[%s342 + $0x3] sm:$0xff] %vm2268, %v2077
    %2270 = vst.msk [vmem:[%s342 + $0x13] sm:$0xff] %vm2268, %v2079
    %2271 = vst.msk [vmem:[%s342 + $0x23] sm:$0xff] %vm2268, %v2081
    %2272 = vst.msk [vmem:[%s342 + $0x33] sm:$0xff] %vm2268, %v2083
    %2273 = vst.msk [vmem:[%s342 + $0x43] sm:$0xff] %vm2268, %v2085
    %2274 = vst.msk [vmem:[%s342 + $0x53] sm:$0xff] %vm2268, %v2087
    %2275 = vst.msk [vmem:[%s342 + $0x63] sm:$0xff] %vm2268, %v2089
    %2276 = vst.msk [vmem:[%s342 + $0x73] sm:$0xff] %vm2268, %v2091
    %2277 = vst.msk [vmem:[%s342 + $0xe3] sm:$0xff] %vm2268, %v2093
    %2278 = vst.msk [vmem:[%s342 + $0xf3] sm:$0xff] %vm2268, %v2095
    %2279 = vst.msk [vmem:[%s342 + $0x103] sm:$0xff] %vm2268, %v2097
    %2280 = vst.msk [vmem:[%s342 + $0x113] sm:$0xff] %vm2268, %v2099
    %2281 = vst.msk [vmem:[%s342 + $0x123] sm:$0xff] %vm2268, %v2101
    %2282 = vst.msk [vmem:[%s342 + $0x133] sm:$0xff] %vm2268, %v2103
    %2283 = vst.msk [vmem:[%s342 + $0x143] sm:$0xff] %vm2268, %v2105
    %2284 = vst.msk [vmem:[%s342 + $0x153] sm:$0xff] %vm2268, %v2107
    %2285 = vst.msk [vmem:[%s342 + $0x1c3] sm:$0xff] %vm2268, %v2109
    %2286 = vst.msk [vmem:[%s342 + $0x1d3] sm:$0xff] %vm2268, %v2111
    %2287 = vst.msk [vmem:[%s342 + $0x1e3] sm:$0xff] %vm2268, %v2113
    %2288 = vst.msk [vmem:[%s342 + $0x1f3] sm:$0xff] %vm2268, %v2115
    %2289 = vst.msk [vmem:[%s342 + $0x203] sm:$0xff] %vm2268, %v2117
    %2290 = vst.msk [vmem:[%s342 + $0x213] sm:$0xff] %vm2268, %v2119
    %2291 = vst.msk [vmem:[%s342 + $0x223] sm:$0xff] %vm2268, %v2121
    %2292 = vst.msk [vmem:[%s342 + $0x233] sm:$0xff] %vm2268, %v2123
    %2293 = vst.msk [vmem:[%s342 + $0x2a3] sm:$0xff] %vm2268, %v2125
    %2294 = vst.msk [vmem:[%s342 + $0x2b3] sm:$0xff] %vm2268, %v2127
    %2295 = vst.msk [vmem:[%s342 + $0x2c3] sm:$0xff] %vm2268, %v2129
    %2296 = vst.msk [vmem:[%s342 + $0x2d3] sm:$0xff] %vm2268, %v2131
    %2297 = vst.msk [vmem:[%s342 + $0x2e3] sm:$0xff] %vm2268, %v2133
    %2298 = vst.msk [vmem:[%s342 + $0x2f3] sm:$0xff] %vm2268, %v2135
    %2299 = vst.msk [vmem:[%s342 + $0x303] sm:$0xff] %vm2268, %v2137
    %2300 = vst.msk [vmem:[%s342 + $0x313] sm:$0xff] %vm2268, %v2139
    %2301 = vst.msk [vmem:[%s342 + $0x383] sm:$0xff] %vm2268, %v2141
    %2302 = vst.msk [vmem:[%s342 + $0x393] sm:$0xff] %vm2268, %v2143
    %2303 = vst.msk [vmem:[%s342 + $0x3a3] sm:$0xff] %vm2268, %v2145
    %2304 = vst.msk [vmem:[%s342 + $0x3b3] sm:$0xff] %vm2268, %v2147
    %2305 = vst.msk [vmem:[%s342 + $0x3c3] sm:$0xff] %vm2268, %v2149
    %2306 = vst.msk [vmem:[%s342 + $0x3d3] sm:$0xff] %vm2268, %v2151
    %2307 = vst.msk [vmem:[%s342 + $0x3e3] sm:$0xff] %vm2268, %v2153
    %2308 = vst.msk [vmem:[%s342 + $0x3f3] sm:$0xff] %vm2268, %v2155
    %2309 = vst.msk [vmem:[%s342 + $0x463] sm:$0xff] %vm2268, %v2157
    %2310 = vst.msk [vmem:[%s342 + $0x473] sm:$0xff] %vm2268, %v2159
    %2311 = vst.msk [vmem:[%s342 + $0x483] sm:$0xff] %vm2268, %v2161
    %2312 = vst.msk [vmem:[%s342 + $0x493] sm:$0xff] %vm2268, %v2163
    %2313 = vst.msk [vmem:[%s342 + $0x4a3] sm:$0xff] %vm2268, %v2165
    %2314 = vst.msk [vmem:[%s342 + $0x4b3] sm:$0xff] %vm2268, %v2167
    %2315 = vst.msk [vmem:[%s342 + $0x4c3] sm:$0xff] %vm2268, %v2169
    %2316 = vst.msk [vmem:[%s342 + $0x4d3] sm:$0xff] %vm2268, %v2171
    %2317 = vst.msk [vmem:[%s342 + $0x543] sm:$0xff] %vm2268, %v2173
    %2318 = vst.msk [vmem:[%s342 + $0x553] sm:$0xff] %vm2268, %v2175
    %2319 = vst.msk [vmem:[%s342 + $0x563] sm:$0xff] %vm2268, %v2177
    %2320 = vst.msk [vmem:[%s342 + $0x573] sm:$0xff] %vm2268, %v2179
    %2321 = vst.msk [vmem:[%s342 + $0x583] sm:$0xff] %vm2268, %v2181
    %2322 = vst.msk [vmem:[%s342 + $0x593] sm:$0xff] %vm2268, %v2183
    %2323 = vst.msk [vmem:[%s342 + $0x5a3] sm:$0xff] %vm2268, %v2185
    %2324 = vst.msk [vmem:[%s342 + $0x5b3] sm:$0xff] %vm2268, %v2187
    %2325 = vst.msk [vmem:[%s342 + $0x623] sm:$0xff] %vm2268, %v2189
    %2326 = vst.msk [vmem:[%s342 + $0x633] sm:$0xff] %vm2268, %v2191
    %2327 = vst.msk [vmem:[%s342 + $0x643] sm:$0xff] %vm2268, %v2193
    %2328 = vst.msk [vmem:[%s342 + $0x653] sm:$0xff] %vm2268, %v2195
    %2329 = vst.msk [vmem:[%s342 + $0x663] sm:$0xff] %vm2268, %v2197
    %2330 = vst.msk [vmem:[%s342 + $0x673] sm:$0xff] %vm2268, %v2199
    %2331 = vst.msk [vmem:[%s342 + $0x683] sm:$0xff] %vm2268, %v2201
    %2332 = vst.msk [vmem:[%s342 + $0x693] sm:$0xff] %vm2268, %v2203
    %v2333 = vld [vmem:[#allocation2] sm:$0xff]
    %v2334 = vld [vmem:[#allocation2 + $0x8] sm:$0xff]
    %v2335 = vld [vmem:[#allocation2 + $0x10] sm:$0xff]
    %v2336 = vld [vmem:[#allocation2 + $0x18] sm:$0xff]
    %v2337 = vld [vmem:[#allocation2 + $0x20] sm:$0xff]
    %v2338 = vld [vmem:[#allocation2 + $0x28] sm:$0xff]
    %v2339 = vld [vmem:[#allocation2 + $0x30] sm:$0xff]
    %v2340 = vld [vmem:[#allocation2 + $0x38] sm:$0xff]
    %v2341 = vld [vmem:[#allocation2 + $0x40] sm:$0xff]
    %v2342 = vld [vmem:[#allocation2 + $0x48] sm:$0xff]
    %v2343 = vld [vmem:[#allocation2 + $0x50] sm:$0xff]
    %v2344 = vld [vmem:[#allocation2 + $0x58] sm:$0xff]
    %v2345 = vld [vmem:[#allocation2 + $0x60] sm:$0xff]
    %v2346 = vld [vmem:[#allocation2 + $0x68] sm:$0xff]
    %v2347 = vld [vmem:[#allocation2 + $0x70] sm:$0xff]
    %v2348 = vld [vmem:[#allocation2 + $0x78] sm:$0xff]
    %v2349 = vld [vmem:[#allocation2 + $0x80] sm:$0xff]
    %v2350 = vld [vmem:[#allocation2 + $0x88] sm:$0xff]
    %v2351 = vld [vmem:[#allocation2 + $0x90] sm:$0xff]
    %v2352 = vld [vmem:[#allocation2 + $0x98] sm:$0xff]
    %v2353 = vld [vmem:[#allocation2 + $0xa0] sm:$0xff]
    %v2354 = vld [vmem:[#allocation2 + $0xa8] sm:$0xff]
    %v2355 = vld [vmem:[#allocation2 + $0xb0] sm:$0xff]
    %v2356 = vld [vmem:[#allocation2 + $0xb8] sm:$0xff]
    %v2357 = vld [vmem:[#allocation2 + $0xc0] sm:$0xff]
    %v2358 = vld [vmem:[#allocation2 + $0xc8] sm:$0xff]
    %v2359 = vld [vmem:[#allocation2 + $0xd0] sm:$0xff]
    %v2360 = vld [vmem:[#allocation2 + $0xd8] sm:$0xff]
    %v2361 = vld [vmem:[#allocation2 + $0xe0] sm:$0xff]
    %v2362 = vld [vmem:[#allocation2 + $0xe8] sm:$0xff]
    %v2363 = vld [vmem:[#allocation2 + $0xf0] sm:$0xff]
    %v2364 = vld [vmem:[#allocation2 + $0xf8] sm:$0xff]
    %v2365 = vld [vmem:[#allocation2 + $0x100] sm:$0xff]
    %v2366 = vld [vmem:[#allocation2 + $0x108] sm:$0xff]
    %v2367 = vld [vmem:[#allocation2 + $0x110] sm:$0xff]
    %v2368 = vld [vmem:[#allocation2 + $0x118] sm:$0xff]
    %v2369 = vld [vmem:[#allocation2 + $0x120] sm:$0xff]
    %v2370 = vld [vmem:[#allocation2 + $0x128] sm:$0xff]
    %v2371 = vld [vmem:[#allocation2 + $0x130] sm:$0xff]
    %v2372 = vld [vmem:[#allocation2 + $0x138] sm:$0xff]
    %v2373 = vld [vmem:[#allocation2 + $0x140] sm:$0xff]
    %v2374 = vld [vmem:[#allocation2 + $0x148] sm:$0xff]
    %v2375 = vld [vmem:[#allocation2 + $0x150] sm:$0xff]
    %v2376 = vld [vmem:[#allocation2 + $0x158] sm:$0xff]
    %v2377 = vld [vmem:[#allocation2 + $0x160] sm:$0xff]
    %v2378 = vld [vmem:[#allocation2 + $0x168] sm:$0xff]
    %v2379 = vld [vmem:[#allocation2 + $0x170] sm:$0xff]
    %v2380 = vld [vmem:[#allocation2 + $0x178] sm:$0xff]
    %v2381 = vld [vmem:[#allocation2 + $0x180] sm:$0xff]
    %v2382 = vld [vmem:[#allocation2 + $0x188] sm:$0xff]
    %v2383 = vld [vmem:[#allocation2 + $0x190] sm:$0xff]
    %v2384 = vld [vmem:[#allocation2 + $0x198] sm:$0xff]
    %v2385 = vld [vmem:[#allocation2 + $0x1a0] sm:$0xff]
    %v2386 = vld [vmem:[#allocation2 + $0x1a8] sm:$0xff]
    %v2387 = vld [vmem:[#allocation2 + $0x1b0] sm:$0xff]
    %v2388 = vld [vmem:[#allocation2 + $0x1b8] sm:$0xff]
    %v2389 = vld [vmem:[#allocation2 + $0x1c0] sm:$0xff]
    %v2390 = vld [vmem:[#allocation2 + $0x1c8] sm:$0xff]
    %v2391 = vld [vmem:[#allocation2 + $0x1d0] sm:$0xff]
    %v2392 = vld [vmem:[#allocation2 + $0x1d8] sm:$0xff]
    %v2393 = vld [vmem:[#allocation2 + $0x1e0] sm:$0xff]
    %v2394 = vld [vmem:[#allocation2 + $0x1e8] sm:$0xff]
    %v2395 = vld [vmem:[#allocation2 + $0x1f0] sm:$0xff]
    %v2396 = vld [vmem:[#allocation2 + $0x1f8] sm:$0xff]
    %2461 = vrot.lane.b32.xlu0 %v2333, 9
    %v2462 = vpop.permute.xlu0 %2461
    %2463 = vrot.lane.b32.xlu0 %v2334, 9
    %v2464 = vpop.permute.xlu0 %2463
    %2465 = vrot.lane.b32.xlu0 %v2335, 9
    %v2466 = vpop.permute.xlu0 %2465
    %2467 = vrot.lane.b32.xlu0 %v2336, 9
    %v2468 = vpop.permute.xlu0 %2467
    %2469 = vrot.lane.b32.xlu0 %v2337, 9
    %v2470 = vpop.permute.xlu0 %2469
    %2471 = vrot.lane.b32.xlu0 %v2338, 9
    %v2472 = vpop.permute.xlu0 %2471
    %2473 = vrot.lane.b32.xlu0 %v2339, 9
    %v2474 = vpop.permute.xlu0 %2473
    %2475 = vrot.lane.b32.xlu0 %v2340, 9
    %v2476 = vpop.permute.xlu0 %2475
    %2477 = vrot.lane.b32.xlu0 %v2341, 9
    %v2478 = vpop.permute.xlu0 %2477
    %2479 = vrot.lane.b32.xlu0 %v2342, 9
    %v2480 = vpop.permute.xlu0 %2479
    %2481 = vrot.lane.b32.xlu0 %v2343, 9
    %v2482 = vpop.permute.xlu0 %2481
    %2483 = vrot.lane.b32.xlu0 %v2344, 9
    %v2484 = vpop.permute.xlu0 %2483
    %2485 = vrot.lane.b32.xlu0 %v2345, 9
    %v2486 = vpop.permute.xlu0 %2485
    %2487 = vrot.lane.b32.xlu0 %v2346, 9
    %v2488 = vpop.permute.xlu0 %2487
    %2489 = vrot.lane.b32.xlu0 %v2347, 9
    %v2490 = vpop.permute.xlu0 %2489
    %2491 = vrot.lane.b32.xlu0 %v2348, 9
    %v2492 = vpop.permute.xlu0 %2491
    %2493 = vrot.lane.b32.xlu0 %v2349, 9
    %v2494 = vpop.permute.xlu0 %2493
    %2495 = vrot.lane.b32.xlu0 %v2350, 9
    %v2496 = vpop.permute.xlu0 %2495
    %2497 = vrot.lane.b32.xlu0 %v2351, 9
    %v2498 = vpop.permute.xlu0 %2497
    %2499 = vrot.lane.b32.xlu0 %v2352, 9
    %v2500 = vpop.permute.xlu0 %2499
    %2501 = vrot.lane.b32.xlu0 %v2353, 9
    %v2502 = vpop.permute.xlu0 %2501
    %2503 = vrot.lane.b32.xlu0 %v2354, 9
    %v2504 = vpop.permute.xlu0 %2503
    %2505 = vrot.lane.b32.xlu0 %v2355, 9
    %v2506 = vpop.permute.xlu0 %2505
    %2507 = vrot.lane.b32.xlu0 %v2356, 9
    %v2508 = vpop.permute.xlu0 %2507
    %2509 = vrot.lane.b32.xlu0 %v2357, 9
    %v2510 = vpop.permute.xlu0 %2509
    %2511 = vrot.lane.b32.xlu0 %v2358, 9
    %v2512 = vpop.permute.xlu0 %2511
    %2513 = vrot.lane.b32.xlu0 %v2359, 9
    %v2514 = vpop.permute.xlu0 %2513
    %2515 = vrot.lane.b32.xlu0 %v2360, 9
    %v2516 = vpop.permute.xlu0 %2515
    %2517 = vrot.lane.b32.xlu0 %v2361, 9
    %v2518 = vpop.permute.xlu0 %2517
    %2519 = vrot.lane.b32.xlu0 %v2362, 9
    %v2520 = vpop.permute.xlu0 %2519
    %2521 = vrot.lane.b32.xlu0 %v2363, 9
    %v2522 = vpop.permute.xlu0 %2521
    %2523 = vrot.lane.b32.xlu0 %v2364, 9
    %v2524 = vpop.permute.xlu0 %2523
    %2525 = vrot.lane.b32.xlu0 %v2365, 9
    %v2526 = vpop.permute.xlu0 %2525
    %2527 = vrot.lane.b32.xlu0 %v2366, 9
    %v2528 = vpop.permute.xlu0 %2527
    %2529 = vrot.lane.b32.xlu0 %v2367, 9
    %v2530 = vpop.permute.xlu0 %2529
    %2531 = vrot.lane.b32.xlu0 %v2368, 9
    %v2532 = vpop.permute.xlu0 %2531
    %2533 = vrot.lane.b32.xlu0 %v2369, 9
    %v2534 = vpop.permute.xlu0 %2533
    %2535 = vrot.lane.b32.xlu0 %v2370, 9
    %v2536 = vpop.permute.xlu0 %2535
    %2537 = vrot.lane.b32.xlu0 %v2371, 9
    %v2538 = vpop.permute.xlu0 %2537
    %2539 = vrot.lane.b32.xlu0 %v2372, 9
    %v2540 = vpop.permute.xlu0 %2539
    %2541 = vrot.lane.b32.xlu0 %v2373, 9
    %v2542 = vpop.permute.xlu0 %2541
    %2543 = vrot.lane.b32.xlu0 %v2374, 9
    %v2544 = vpop.permute.xlu0 %2543
    %2545 = vrot.lane.b32.xlu0 %v2375, 9
    %v2546 = vpop.permute.xlu0 %2545
    %2547 = vrot.lane.b32.xlu0 %v2376, 9
    %v2548 = vpop.permute.xlu0 %2547
    %2549 = vrot.lane.b32.xlu0 %v2377, 9
    %v2550 = vpop.permute.xlu0 %2549
    %2551 = vrot.lane.b32.xlu0 %v2378, 9
    %v2552 = vpop.permute.xlu0 %2551
    %2553 = vrot.lane.b32.xlu0 %v2379, 9
    %v2554 = vpop.permute.xlu0 %2553
    %2555 = vrot.lane.b32.xlu0 %v2380, 9
    %v2556 = vpop.permute.xlu0 %2555
    %2557 = vrot.lane.b32.xlu0 %v2381, 9
    %v2558 = vpop.permute.xlu0 %2557
    %2559 = vrot.lane.b32.xlu0 %v2382, 9
    %v2560 = vpop.permute.xlu0 %2559
    %2561 = vrot.lane.b32.xlu0 %v2383, 9
    %v2562 = vpop.permute.xlu0 %2561
    %2563 = vrot.lane.b32.xlu0 %v2384, 9
    %v2564 = vpop.permute.xlu0 %2563
    %2565 = vrot.lane.b32.xlu0 %v2385, 9
    %v2566 = vpop.permute.xlu0 %2565
    %2567 = vrot.lane.b32.xlu0 %v2386, 9
    %v2568 = vpop.permute.xlu0 %2567
    %2569 = vrot.lane.b32.xlu0 %v2387, 9
    %v2570 = vpop.permute.xlu0 %2569
    %2571 = vrot.lane.b32.xlu0 %v2388, 9
    %v2572 = vpop.permute.xlu0 %2571
    %2573 = vrot.lane.b32.xlu0 %v2389, 9
    %v2574 = vpop.permute.xlu0 %2573
    %2575 = vrot.lane.b32.xlu0 %v2390, 9
    %v2576 = vpop.permute.xlu0 %2575
    %2577 = vrot.lane.b32.xlu0 %v2391, 9
    %v2578 = vpop.permute.xlu0 %2577
    %2579 = vrot.lane.b32.xlu0 %v2392, 9
    %v2580 = vpop.permute.xlu0 %2579
    %2581 = vrot.lane.b32.xlu0 %v2393, 9
    %v2582 = vpop.permute.xlu0 %2581
    %2583 = vrot.lane.b32.xlu0 %v2394, 9
    %v2584 = vpop.permute.xlu0 %2583
    %2585 = vrot.lane.b32.xlu0 %v2395, 9
    %v2586 = vpop.permute.xlu0 %2585
    %2587 = vrot.lane.b32.xlu0 %v2396, 9
    %v2588 = vpop.permute.xlu0 %2587
    %vm2653 = vcmask 113768
    %2654 = vst.msk [vmem:[%s342 + $0x3] sm:$0xff] %vm2653, %v2462
    %2655 = vst.msk [vmem:[%s342 + $0x13] sm:$0xff] %vm2653, %v2464
    %2656 = vst.msk [vmem:[%s342 + $0x23] sm:$0xff] %vm2653, %v2466
    %2657 = vst.msk [vmem:[%s342 + $0x33] sm:$0xff] %vm2653, %v2468
    %2658 = vst.msk [vmem:[%s342 + $0x43] sm:$0xff] %vm2653, %v2470
    %2659 = vst.msk [vmem:[%s342 + $0x53] sm:$0xff] %vm2653, %v2472
    %2660 = vst.msk [vmem:[%s342 + $0x63] sm:$0xff] %vm2653, %v2474
    %2661 = vst.msk [vmem:[%s342 + $0x73] sm:$0xff] %vm2653, %v2476
    %2662 = vst.msk [vmem:[%s342 + $0xe3] sm:$0xff] %vm2653, %v2478
    %2663 = vst.msk [vmem:[%s342 + $0xf3] sm:$0xff] %vm2653, %v2480
    %2664 = vst.msk [vmem:[%s342 + $0x103] sm:$0xff] %vm2653, %v2482
    %2665 = vst.msk [vmem:[%s342 + $0x113] sm:$0xff] %vm2653, %v2484
    %2666 = vst.msk [vmem:[%s342 + $0x123] sm:$0xff] %vm2653, %v2486
    %2667 = vst.msk [vmem:[%s342 + $0x133] sm:$0xff] %vm2653, %v2488
    %2668 = vst.msk [vmem:[%s342 + $0x143] sm:$0xff] %vm2653, %v2490
    %2669 = vst.msk [vmem:[%s342 + $0x153] sm:$0xff] %vm2653, %v2492
    %2670 = vst.msk [vmem:[%s342 + $0x1c3] sm:$0xff] %vm2653, %v2494
    %2671 = vst.msk [vmem:[%s342 + $0x1d3] sm:$0xff] %vm2653, %v2496
    %2672 = vst.msk [vmem:[%s342 + $0x1e3] sm:$0xff] %vm2653, %v2498
    %2673 = vst.msk [vmem:[%s342 + $0x1f3] sm:$0xff] %vm2653, %v2500
    %2674 = vst.msk [vmem:[%s342 + $0x203] sm:$0xff] %vm2653, %v2502
    %2675 = vst.msk [vmem:[%s342 + $0x213] sm:$0xff] %vm2653, %v2504
    %2676 = vst.msk [vmem:[%s342 + $0x223] sm:$0xff] %vm2653, %v2506
    %2677 = vst.msk [vmem:[%s342 + $0x233] sm:$0xff] %vm2653, %v2508
    %2678 = vst.msk [vmem:[%s342 + $0x2a3] sm:$0xff] %vm2653, %v2510
    %2679 = vst.msk [vmem:[%s342 + $0x2b3] sm:$0xff] %vm2653, %v2512
    %2680 = vst.msk [vmem:[%s342 + $0x2c3] sm:$0xff] %vm2653, %v2514
    %2681 = vst.msk [vmem:[%s342 + $0x2d3] sm:$0xff] %vm2653, %v2516
    %2682 = vst.msk [vmem:[%s342 + $0x2e3] sm:$0xff] %vm2653, %v2518
    %2683 = vst.msk [vmem:[%s342 + $0x2f3] sm:$0xff] %vm2653, %v2520
    %2684 = vst.msk [vmem:[%s342 + $0x303] sm:$0xff] %vm2653, %v2522
    %2685 = vst.msk [vmem:[%s342 + $0x313] sm:$0xff] %vm2653, %v2524
    %2686 = vst.msk [vmem:[%s342 + $0x383] sm:$0xff] %vm2653, %v2526
    %2687 = vst.msk [vmem:[%s342 + $0x393] sm:$0xff] %vm2653, %v2528
    %2688 = vst.msk [vmem:[%s342 + $0x3a3] sm:$0xff] %vm2653, %v2530
    %2689 = vst.msk [vmem:[%s342 + $0x3b3] sm:$0xff] %vm2653, %v2532
    %2690 = vst.msk [vmem:[%s342 + $0x3c3] sm:$0xff] %vm2653, %v2534
    %2691 = vst.msk [vmem:[%s342 + $0x3d3] sm:$0xff] %vm2653, %v2536
    %2692 = vst.msk [vmem:[%s342 + $0x3e3] sm:$0xff] %vm2653, %v2538
    %2693 = vst.msk [vmem:[%s342 + $0x3f3] sm:$0xff] %vm2653, %v2540
    %2694 = vst.msk [vmem:[%s342 + $0x463] sm:$0xff] %vm2653, %v2542
    %2695 = vst.msk [vmem:[%s342 + $0x473] sm:$0xff] %vm2653, %v2544
    %2696 = vst.msk [vmem:[%s342 + $0x483] sm:$0xff] %vm2653, %v2546
    %2697 = vst.msk [vmem:[%s342 + $0x493] sm:$0xff] %vm2653, %v2548
    %2698 = vst.msk [vmem:[%s342 + $0x4a3] sm:$0xff] %vm2653, %v2550
    %2699 = vst.msk [vmem:[%s342 + $0x4b3] sm:$0xff] %vm2653, %v2552
    %2700 = vst.msk [vmem:[%s342 + $0x4c3] sm:$0xff] %vm2653, %v2554
    %2701 = vst.msk [vmem:[%s342 + $0x4d3] sm:$0xff] %vm2653, %v2556
    %2702 = vst.msk [vmem:[%s342 + $0x543] sm:$0xff] %vm2653, %v2558
    %2703 = vst.msk [vmem:[%s342 + $0x553] sm:$0xff] %vm2653, %v2560
    %2704 = vst.msk [vmem:[%s342 + $0x563] sm:$0xff] %vm2653, %v2562
    %2705 = vst.msk [vmem:[%s342 + $0x573] sm:$0xff] %vm2653, %v2564
    %2706 = vst.msk [vmem:[%s342 + $0x583] sm:$0xff] %vm2653, %v2566
    %2707 = vst.msk [vmem:[%s342 + $0x593] sm:$0xff] %vm2653, %v2568
    %2708 = vst.msk [vmem:[%s342 + $0x5a3] sm:$0xff] %vm2653, %v2570
    %2709 = vst.msk [vmem:[%s342 + $0x5b3] sm:$0xff] %vm2653, %v2572
    %2710 = vst.msk [vmem:[%s342 + $0x623] sm:$0xff] %vm2653, %v2574
    %2711 = vst.msk [vmem:[%s342 + $0x633] sm:$0xff] %vm2653, %v2576
    %2712 = vst.msk [vmem:[%s342 + $0x643] sm:$0xff] %vm2653, %v2578
    %2713 = vst.msk [vmem:[%s342 + $0x653] sm:$0xff] %vm2653, %v2580
    %2714 = vst.msk [vmem:[%s342 + $0x663] sm:$0xff] %vm2653, %v2582
    %2715 = vst.msk [vmem:[%s342 + $0x673] sm:$0xff] %vm2653, %v2584
    %2716 = vst.msk [vmem:[%s342 + $0x683] sm:$0xff] %vm2653, %v2586
    %2717 = vst.msk [vmem:[%s342 + $0x693] sm:$0xff] %vm2653, %v2588
    %v2718 = vld [vmem:[%s342 + $0x4] sm:$0x1]
    %v2719 = vld [vmem:[%s342 + $0x14] sm:$0x1]
    %v2720 = vld [vmem:[%s342 + $0x24] sm:$0x1]
    %v2721 = vld [vmem:[%s342 + $0x34] sm:$0x1]
    %v2722 = vld [vmem:[%s342 + $0x44] sm:$0x1]
    %v2723 = vld [vmem:[%s342 + $0x54] sm:$0x1]
    %v2724 = vld [vmem:[%s342 + $0x64] sm:$0x1]
    %v2725 = vld [vmem:[%s342 + $0x74] sm:$0x1]
    %v2726 = vld [vmem:[%s342 + $0xe4] sm:$0x1]
    %v2727 = vld [vmem:[%s342 + $0xf4] sm:$0x1]
    %v2728 = vld [vmem:[%s342 + $0x104] sm:$0x1]
    %v2729 = vld [vmem:[%s342 + $0x114] sm:$0x1]
    %v2730 = vld [vmem:[%s342 + $0x124] sm:$0x1]
    %v2731 = vld [vmem:[%s342 + $0x134] sm:$0x1]
    %v2732 = vld [vmem:[%s342 + $0x144] sm:$0x1]
    %v2733 = vld [vmem:[%s342 + $0x154] sm:$0x1]
    %v2734 = vld [vmem:[%s342 + $0x1c4] sm:$0x1]
    %v2735 = vld [vmem:[%s342 + $0x1d4] sm:$0x1]
    %v2736 = vld [vmem:[%s342 + $0x1e4] sm:$0x1]
    %v2737 = vld [vmem:[%s342 + $0x1f4] sm:$0x1]
    %v2738 = vld [vmem:[%s342 + $0x204] sm:$0x1]
    %v2739 = vld [vmem:[%s342 + $0x214] sm:$0x1]
    %v2740 = vld [vmem:[%s342 + $0x224] sm:$0x1]
    %v2741 = vld [vmem:[%s342 + $0x234] sm:$0x1]
    %v2742 = vld [vmem:[%s342 + $0x2a4] sm:$0x1]
    %v2743 = vld [vmem:[%s342 + $0x2b4] sm:$0x1]
    %v2744 = vld [vmem:[%s342 + $0x2c4] sm:$0x1]
    %v2745 = vld [vmem:[%s342 + $0x2d4] sm:$0x1]
    %v2746 = vld [vmem:[%s342 + $0x2e4] sm:$0x1]
    %v2747 = vld [vmem:[%s342 + $0x2f4] sm:$0x1]
    %v2748 = vld [vmem:[%s342 + $0x304] sm:$0x1]
    %v2749 = vld [vmem:[%s342 + $0x314] sm:$0x1]
    %v2750 = vld [vmem:[%s342 + $0x384] sm:$0x1]
    %v2751 = vld [vmem:[%s342 + $0x394] sm:$0x1]
    %v2752 = vld [vmem:[%s342 + $0x3a4] sm:$0x1]
    %v2753 = vld [vmem:[%s342 + $0x3b4] sm:$0x1]
    %v2754 = vld [vmem:[%s342 + $0x3c4] sm:$0x1]
    %v2755 = vld [vmem:[%s342 + $0x3d4] sm:$0x1]
    %v2756 = vld [vmem:[%s342 + $0x3e4] sm:$0x1]
    %v2757 = vld [vmem:[%s342 + $0x3f4] sm:$0x1]
    %v2758 = vld [vmem:[%s342 + $0x464] sm:$0x1]
    %v2759 = vld [vmem:[%s342 + $0x474] sm:$0x1]
    %v2760 = vld [vmem:[%s342 + $0x484] sm:$0x1]
    %v2761 = vld [vmem:[%s342 + $0x494] sm:$0x1]
    %v2762 = vld [vmem:[%s342 + $0x4a4] sm:$0x1]
    %v2763 = vld [vmem:[%s342 + $0x4b4] sm:$0x1]
    %v2764 = vld [vmem:[%s342 + $0x4c4] sm:$0x1]
    %v2765 = vld [vmem:[%s342 + $0x4d4] sm:$0x1]
    %v2766 = vld [vmem:[%s342 + $0x544] sm:$0x1]
    %v2767 = vld [vmem:[%s342 + $0x554] sm:$0x1]
    %v2768 = vld [vmem:[%s342 + $0x564] sm:$0x1]
    %v2769 = vld [vmem:[%s342 + $0x574] sm:$0x1]
    %v2770 = vld [vmem:[%s342 + $0x584] sm:$0x1]
    %v2771 = vld [vmem:[%s342 + $0x594] sm:$0x1]
    %v2772 = vld [vmem:[%s342 + $0x5a4] sm:$0x1]
    %v2773 = vld [vmem:[%s342 + $0x5b4] sm:$0x1]
    %v2774 = vld [vmem:[%s342 + $0x624] sm:$0x1]
    %v2775 = vld [vmem:[%s342 + $0x634] sm:$0x1]
    %v2776 = vld [vmem:[%s342 + $0x644] sm:$0x1]
    %v2777 = vld [vmem:[%s342 + $0x654] sm:$0x1]
    %v2778 = vld [vmem:[%s342 + $0x664] sm:$0x1]
    %v2779 = vld [vmem:[%s342 + $0x674] sm:$0x1]
    %v2780 = vld [vmem:[%s342 + $0x684] sm:$0x1]
    %v2781 = vld [vmem:[%s342 + $0x694] sm:$0x1]
    %vm2782 = vcmask 106496
    %2783 = vst.msk [vmem:[%s342 + $0x2] sm:$0x1] %vm2782, %v2718
    %2784 = vst.msk [vmem:[%s342 + $0x12] sm:$0x1] %vm2782, %v2719
    %2785 = vst.msk [vmem:[%s342 + $0x22] sm:$0x1] %vm2782, %v2720
    %2786 = vst.msk [vmem:[%s342 + $0x32] sm:$0x1] %vm2782, %v2721
    %2787 = vst.msk [vmem:[%s342 + $0x42] sm:$0x1] %vm2782, %v2722
    %2788 = vst.msk [vmem:[%s342 + $0x52] sm:$0x1] %vm2782, %v2723
    %2789 = vst.msk [vmem:[%s342 + $0x62] sm:$0x1] %vm2782, %v2724
    %2790 = vst.msk [vmem:[%s342 + $0x72] sm:$0x1] %vm2782, %v2725
    %2791 = vst.msk [vmem:[%s342 + $0xe2] sm:$0x1] %vm2782, %v2726
    %2792 = vst.msk [vmem:[%s342 + $0xf2] sm:$0x1] %vm2782, %v2727
    %2793 = vst.msk [vmem:[%s342 + $0x102] sm:$0x1] %vm2782, %v2728
    %2794 = vst.msk [vmem:[%s342 + $0x112] sm:$0x1] %vm2782, %v2729
    %2795 = vst.msk [vmem:[%s342 + $0x122] sm:$0x1] %vm2782, %v2730
    %2796 = vst.msk [vmem:[%s342 + $0x132] sm:$0x1] %vm2782, %v2731
    %2797 = vst.msk [vmem:[%s342 + $0x142] sm:$0x1] %vm2782, %v2732
    %2798 = vst.msk [vmem:[%s342 + $0x152] sm:$0x1] %vm2782, %v2733
    %2799 = vst.msk [vmem:[%s342 + $0x1c2] sm:$0x1] %vm2782, %v2734
    %2800 = vst.msk [vmem:[%s342 + $0x1d2] sm:$0x1] %vm2782, %v2735
    %2801 = vst.msk [vmem:[%s342 + $0x1e2] sm:$0x1] %vm2782, %v2736
    %2802 = vst.msk [vmem:[%s342 + $0x1f2] sm:$0x1] %vm2782, %v2737
    %2803 = vst.msk [vmem:[%s342 + $0x202] sm:$0x1] %vm2782, %v2738
    %2804 = vst.msk [vmem:[%s342 + $0x212] sm:$0x1] %vm2782, %v2739
    %2805 = vst.msk [vmem:[%s342 + $0x222] sm:$0x1] %vm2782, %v2740
    %2806 = vst.msk [vmem:[%s342 + $0x232] sm:$0x1] %vm2782, %v2741
    %2807 = vst.msk [vmem:[%s342 + $0x2a2] sm:$0x1] %vm2782, %v2742
    %2808 = vst.msk [vmem:[%s342 + $0x2b2] sm:$0x1] %vm2782, %v2743
    %2809 = vst.msk [vmem:[%s342 + $0x2c2] sm:$0x1] %vm2782, %v2744
    %2810 = vst.msk [vmem:[%s342 + $0x2d2] sm:$0x1] %vm2782, %v2745
    %2811 = vst.msk [vmem:[%s342 + $0x2e2] sm:$0x1] %vm2782, %v2746
    %2812 = vst.msk [vmem:[%s342 + $0x2f2] sm:$0x1] %vm2782, %v2747
    %2813 = vst.msk [vmem:[%s342 + $0x302] sm:$0x1] %vm2782, %v2748
    %2814 = vst.msk [vmem:[%s342 + $0x312] sm:$0x1] %vm2782, %v2749
    %2815 = vst.msk [vmem:[%s342 + $0x382] sm:$0x1] %vm2782, %v2750
    %2816 = vst.msk [vmem:[%s342 + $0x392] sm:$0x1] %vm2782, %v2751
    %2817 = vst.msk [vmem:[%s342 + $0x3a2] sm:$0x1] %vm2782, %v2752
    %2818 = vst.msk [vmem:[%s342 + $0x3b2] sm:$0x1] %vm2782, %v2753
    %2819 = vst.msk [vmem:[%s342 + $0x3c2] sm:$0x1] %vm2782, %v2754
    %2820 = vst.msk [vmem:[%s342 + $0x3d2] sm:$0x1] %vm2782, %v2755
    %2821 = vst.msk [vmem:[%s342 + $0x3e2] sm:$0x1] %vm2782, %v2756
    %2822 = vst.msk [vmem:[%s342 + $0x3f2] sm:$0x1] %vm2782, %v2757
    %2823 = vst.msk [vmem:[%s342 + $0x462] sm:$0x1] %vm2782, %v2758
    %2824 = vst.msk [vmem:[%s342 + $0x472] sm:$0x1] %vm2782, %v2759
    %2825 = vst.msk [vmem:[%s342 + $0x482] sm:$0x1] %vm2782, %v2760
    %2826 = vst.msk [vmem:[%s342 + $0x492] sm:$0x1] %vm2782, %v2761
    %2827 = vst.msk [vmem:[%s342 + $0x4a2] sm:$0x1] %vm2782, %v2762
    %2828 = vst.msk [vmem:[%s342 + $0x4b2] sm:$0x1] %vm2782, %v2763
    %2829 = vst.msk [vmem:[%s342 + $0x4c2] sm:$0x1] %vm2782, %v2764
    %2830 = vst.msk [vmem:[%s342 + $0x4d2] sm:$0x1] %vm2782, %v2765
    %2831 = vst.msk [vmem:[%s342 + $0x542] sm:$0x1] %vm2782, %v2766
    %2832 = vst.msk [vmem:[%s342 + $0x552] sm:$0x1] %vm2782, %v2767
    %2833 = vst.msk [vmem:[%s342 + $0x562] sm:$0x1] %vm2782, %v2768
    %2834 = vst.msk [vmem:[%s342 + $0x572] sm:$0x1] %vm2782, %v2769
    %2835 = vst.msk [vmem:[%s342 + $0x582] sm:$0x1] %vm2782, %v2770
    %2836 = vst.msk [vmem:[%s342 + $0x592] sm:$0x1] %vm2782, %v2771
    %2837 = vst.msk [vmem:[%s342 + $0x5a2] sm:$0x1] %vm2782, %v2772
    %2838 = vst.msk [vmem:[%s342 + $0x5b2] sm:$0x1] %vm2782, %v2773
    %2839 = vst.msk [vmem:[%s342 + $0x622] sm:$0x1] %vm2782, %v2774
    %2840 = vst.msk [vmem:[%s342 + $0x632] sm:$0x1] %vm2782, %v2775
    %2841 = vst.msk [vmem:[%s342 + $0x642] sm:$0x1] %vm2782, %v2776
    %2842 = vst.msk [vmem:[%s342 + $0x652] sm:$0x1] %vm2782, %v2777
    %2843 = vst.msk [vmem:[%s342 + $0x662] sm:$0x1] %vm2782, %v2778
    %2844 = vst.msk [vmem:[%s342 + $0x672] sm:$0x1] %vm2782, %v2779
    %2845 = vst.msk [vmem:[%s342 + $0x682] sm:$0x1] %vm2782, %v2780
    %2846 = vst.msk [vmem:[%s342 + $0x692] sm:$0x1] %vm2782, %v2781
    %v2847 = vld [vmem:[%s342 + $0x5] sm:$0x1]
    %v2848 = vld [vmem:[%s342 + $0x15] sm:$0x1]
    %v2849 = vld [vmem:[%s342 + $0x25] sm:$0x1]
    %v2850 = vld [vmem:[%s342 + $0x35] sm:$0x1]
    %v2851 = vld [vmem:[%s342 + $0x45] sm:$0x1]
    %v2852 = vld [vmem:[%s342 + $0x55] sm:$0x1]
    %v2853 = vld [vmem:[%s342 + $0x65] sm:$0x1]
    %v2854 = vld [vmem:[%s342 + $0x75] sm:$0x1]
    %v2855 = vld [vmem:[%s342 + $0xe5] sm:$0x1]
    %v2856 = vld [vmem:[%s342 + $0xf5] sm:$0x1]
    %v2857 = vld [vmem:[%s342 + $0x105] sm:$0x1]
    %v2858 = vld [vmem:[%s342 + $0x115] sm:$0x1]
    %v2859 = vld [vmem:[%s342 + $0x125] sm:$0x1]
    %v2860 = vld [vmem:[%s342 + $0x135] sm:$0x1]
    %v2861 = vld [vmem:[%s342 + $0x145] sm:$0x1]
    %v2862 = vld [vmem:[%s342 + $0x155] sm:$0x1]
    %v2863 = vld [vmem:[%s342 + $0x1c5] sm:$0x1]
    %v2864 = vld [vmem:[%s342 + $0x1d5] sm:$0x1]
    %v2865 = vld [vmem:[%s342 + $0x1e5] sm:$0x1]
    %v2866 = vld [vmem:[%s342 + $0x1f5] sm:$0x1]
    %v2867 = vld [vmem:[%s342 + $0x205] sm:$0x1]
    %v2868 = vld [vmem:[%s342 + $0x215] sm:$0x1]
    %v2869 = vld [vmem:[%s342 + $0x225] sm:$0x1]
    %v2870 = vld [vmem:[%s342 + $0x235] sm:$0x1]
    %v2871 = vld [vmem:[%s342 + $0x2a5] sm:$0x1]
    %v2872 = vld [vmem:[%s342 + $0x2b5] sm:$0x1]
    %v2873 = vld [vmem:[%s342 + $0x2c5] sm:$0x1]
    %v2874 = vld [vmem:[%s342 + $0x2d5] sm:$0x1]
    %v2875 = vld [vmem:[%s342 + $0x2e5] sm:$0x1]
    %v2876 = vld [vmem:[%s342 + $0x2f5] sm:$0x1]
    %v2877 = vld [vmem:[%s342 + $0x305] sm:$0x1]
    %v2878 = vld [vmem:[%s342 + $0x315] sm:$0x1]
    %v2879 = vld [vmem:[%s342 + $0x385] sm:$0x1]
    %v2880 = vld [vmem:[%s342 + $0x395] sm:$0x1]
    %v2881 = vld [vmem:[%s342 + $0x3a5] sm:$0x1]
    %v2882 = vld [vmem:[%s342 + $0x3b5] sm:$0x1]
    %v2883 = vld [vmem:[%s342 + $0x3c5] sm:$0x1]
    %v2884 = vld [vmem:[%s342 + $0x3d5] sm:$0x1]
    %v2885 = vld [vmem:[%s342 + $0x3e5] sm:$0x1]
    %v2886 = vld [vmem:[%s342 + $0x3f5] sm:$0x1]
    %v2887 = vld [vmem:[%s342 + $0x465] sm:$0x1]
    %v2888 = vld [vmem:[%s342 + $0x475] sm:$0x1]
    %v2889 = vld [vmem:[%s342 + $0x485] sm:$0x1]
    %v2890 = vld [vmem:[%s342 + $0x495] sm:$0x1]
    %v2891 = vld [vmem:[%s342 + $0x4a5] sm:$0x1]
    %v2892 = vld [vmem:[%s342 + $0x4b5] sm:$0x1]
    %v2893 = vld [vmem:[%s342 + $0x4c5] sm:$0x1]
    %v2894 = vld [vmem:[%s342 + $0x4d5] sm:$0x1]
    %v2895 = vld [vmem:[%s342 + $0x545] sm:$0x1]
    %v2896 = vld [vmem:[%s342 + $0x555] sm:$0x1]
    %v2897 = vld [vmem:[%s342 + $0x565] sm:$0x1]
    %v2898 = vld [vmem:[%s342 + $0x575] sm:$0x1]
    %v2899 = vld [vmem:[%s342 + $0x585] sm:$0x1]
    %v2900 = vld [vmem:[%s342 + $0x595] sm:$0x1]
    %v2901 = vld [vmem:[%s342 + $0x5a5] sm:$0x1]
    %v2902 = vld [vmem:[%s342 + $0x5b5] sm:$0x1]
    %v2903 = vld [vmem:[%s342 + $0x625] sm:$0x1]
    %v2904 = vld [vmem:[%s342 + $0x635] sm:$0x1]
    %v2905 = vld [vmem:[%s342 + $0x645] sm:$0x1]
    %v2906 = vld [vmem:[%s342 + $0x655] sm:$0x1]
    %v2907 = vld [vmem:[%s342 + $0x665] sm:$0x1]
    %v2908 = vld [vmem:[%s342 + $0x675] sm:$0x1]
    %v2909 = vld [vmem:[%s342 + $0x685] sm:$0x1]
    %v2910 = vld [vmem:[%s342 + $0x695] sm:$0x1]
    %2911 = vst.msk [vmem:[%s342 + $0x1] sm:$0x1] %vm2782, %v2847
    %2912 = vst.msk [vmem:[%s342 + $0x11] sm:$0x1] %vm2782, %v2848
    %2913 = vst.msk [vmem:[%s342 + $0x21] sm:$0x1] %vm2782, %v2849
    %2914 = vst.msk [vmem:[%s342 + $0x31] sm:$0x1] %vm2782, %v2850
    %2915 = vst.msk [vmem:[%s342 + $0x41] sm:$0x1] %vm2782, %v2851
    %2916 = vst.msk [vmem:[%s342 + $0x51] sm:$0x1] %vm2782, %v2852
    %2917 = vst.msk [vmem:[%s342 + $0x61] sm:$0x1] %vm2782, %v2853
    %2918 = vst.msk [vmem:[%s342 + $0x71] sm:$0x1] %vm2782, %v2854
    %2919 = vst.msk [vmem:[%s342 + $0xe1] sm:$0x1] %vm2782, %v2855
    %2920 = vst.msk [vmem:[%s342 + $0xf1] sm:$0x1] %vm2782, %v2856
    %2921 = vst.msk [vmem:[%s342 + $0x101] sm:$0x1] %vm2782, %v2857
    %2922 = vst.msk [vmem:[%s342 + $0x111] sm:$0x1] %vm2782, %v2858
    %2923 = vst.msk [vmem:[%s342 + $0x121] sm:$0x1] %vm2782, %v2859
    %2924 = vst.msk [vmem:[%s342 + $0x131] sm:$0x1] %vm2782, %v2860
    %2925 = vst.msk [vmem:[%s342 + $0x141] sm:$0x1] %vm2782, %v2861
    %2926 = vst.msk [vmem:[%s342 + $0x151] sm:$0x1] %vm2782, %v2862
    %2927 = vst.msk [vmem:[%s342 + $0x1c1] sm:$0x1] %vm2782, %v2863
    %2928 = vst.msk [vmem:[%s342 + $0x1d1] sm:$0x1] %vm2782, %v2864
    %2929 = vst.msk [vmem:[%s342 + $0x1e1] sm:$0x1] %vm2782, %v2865
    %2930 = vst.msk [vmem:[%s342 + $0x1f1] sm:$0x1] %vm2782, %v2866
    %2931 = vst.msk [vmem:[%s342 + $0x201] sm:$0x1] %vm2782, %v2867
    %2932 = vst.msk [vmem:[%s342 + $0x211] sm:$0x1] %vm2782, %v2868
    %2933 = vst.msk [vmem:[%s342 + $0x221] sm:$0x1] %vm2782, %v2869
    %2934 = vst.msk [vmem:[%s342 + $0x231] sm:$0x1] %vm2782, %v2870
    %2935 = vst.msk [vmem:[%s342 + $0x2a1] sm:$0x1] %vm2782, %v2871
    %2936 = vst.msk [vmem:[%s342 + $0x2b1] sm:$0x1] %vm2782, %v2872
    %2937 = vst.msk [vmem:[%s342 + $0x2c1] sm:$0x1] %vm2782, %v2873
    %2938 = vst.msk [vmem:[%s342 + $0x2d1] sm:$0x1] %vm2782, %v2874
    %2939 = vst.msk [vmem:[%s342 + $0x2e1] sm:$0x1] %vm2782, %v2875
    %2940 = vst.msk [vmem:[%s342 + $0x2f1] sm:$0x1] %vm2782, %v2876
    %2941 = vst.msk [vmem:[%s342 + $0x301] sm:$0x1] %vm2782, %v2877
    %2942 = vst.msk [vmem:[%s342 + $0x311] sm:$0x1] %vm2782, %v2878
    %2943 = vst.msk [vmem:[%s342 + $0x381] sm:$0x1] %vm2782, %v2879
    %2944 = vst.msk [vmem:[%s342 + $0x391] sm:$0x1] %vm2782, %v2880
    %2945 = vst.msk [vmem:[%s342 + $0x3a1] sm:$0x1] %vm2782, %v2881
    %2946 = vst.msk [vmem:[%s342 + $0x3b1] sm:$0x1] %vm2782, %v2882
    %2947 = vst.msk [vmem:[%s342 + $0x3c1] sm:$0x1] %vm2782, %v2883
    %2948 = vst.msk [vmem:[%s342 + $0x3d1] sm:$0x1] %vm2782, %v2884
    %2949 = vst.msk [vmem:[%s342 + $0x3e1] sm:$0x1] %vm2782, %v2885
    %2950 = vst.msk [vmem:[%s342 + $0x3f1] sm:$0x1] %vm2782, %v2886
    %2951 = vst.msk [vmem:[%s342 + $0x461] sm:$0x1] %vm2782, %v2887
    %2952 = vst.msk [vmem:[%s342 + $0x471] sm:$0x1] %vm2782, %v2888
    %2953 = vst.msk [vmem:[%s342 + $0x481] sm:$0x1] %vm2782, %v2889
    %2954 = vst.msk [vmem:[%s342 + $0x491] sm:$0x1] %vm2782, %v2890
    %2955 = vst.msk [vmem:[%s342 + $0x4a1] sm:$0x1] %vm2782, %v2891
    %2956 = vst.msk [vmem:[%s342 + $0x4b1] sm:$0x1] %vm2782, %v2892
    %2957 = vst.msk [vmem:[%s342 + $0x4c1] sm:$0x1] %vm2782, %v2893
    %2958 = vst.msk [vmem:[%s342 + $0x4d1] sm:$0x1] %vm2782, %v2894
    %2959 = vst.msk [vmem:[%s342 + $0x541] sm:$0x1] %vm2782, %v2895
    %2960 = vst.msk [vmem:[%s342 + $0x551] sm:$0x1] %vm2782, %v2896
    %2961 = vst.msk [vmem:[%s342 + $0x561] sm:$0x1] %vm2782, %v2897
    %2962 = vst.msk [vmem:[%s342 + $0x571] sm:$0x1] %vm2782, %v2898
    %2963 = vst.msk [vmem:[%s342 + $0x581] sm:$0x1] %vm2782, %v2899
    %2964 = vst.msk [vmem:[%s342 + $0x591] sm:$0x1] %vm2782, %v2900
    %2965 = vst.msk [vmem:[%s342 + $0x5a1] sm:$0x1] %vm2782, %v2901
    %2966 = vst.msk [vmem:[%s342 + $0x5b1] sm:$0x1] %vm2782, %v2902
    %2967 = vst.msk [vmem:[%s342 + $0x621] sm:$0x1] %vm2782, %v2903
    %2968 = vst.msk [vmem:[%s342 + $0x631] sm:$0x1] %vm2782, %v2904
    %2969 = vst.msk [vmem:[%s342 + $0x641] sm:$0x1] %vm2782, %v2905
    %2970 = vst.msk [vmem:[%s342 + $0x651] sm:$0x1] %vm2782, %v2906
    %2971 = vst.msk [vmem:[%s342 + $0x661] sm:$0x1] %vm2782, %v2907
    %2972 = vst.msk [vmem:[%s342 + $0x671] sm:$0x1] %vm2782, %v2908
    %2973 = vst.msk [vmem:[%s342 + $0x681] sm:$0x1] %vm2782, %v2909
    %2974 = vst.msk [vmem:[%s342 + $0x691] sm:$0x1] %vm2782, %v2910
    %v2975 = vld [vmem:[%s342 + $0x6] sm:$0x1]
    %v2976 = vld [vmem:[%s342 + $0x16] sm:$0x1]
    %v2977 = vld [vmem:[%s342 + $0x26] sm:$0x1]
    %v2978 = vld [vmem:[%s342 + $0x36] sm:$0x1]
    %v2979 = vld [vmem:[%s342 + $0x46] sm:$0x1]
    %v2980 = vld [vmem:[%s342 + $0x56] sm:$0x1]
    %v2981 = vld [vmem:[%s342 + $0x66] sm:$0x1]
    %v2982 = vld [vmem:[%s342 + $0x76] sm:$0x1]
    %v2983 = vld [vmem:[%s342 + $0xe6] sm:$0x1]
    %v2984 = vld [vmem:[%s342 + $0xf6] sm:$0x1]
    %v2985 = vld [vmem:[%s342 + $0x106] sm:$0x1]
    %v2986 = vld [vmem:[%s342 + $0x116] sm:$0x1]
    %v2987 = vld [vmem:[%s342 + $0x126] sm:$0x1]
    %v2988 = vld [vmem:[%s342 + $0x136] sm:$0x1]
    %v2989 = vld [vmem:[%s342 + $0x146] sm:$0x1]
    %v2990 = vld [vmem:[%s342 + $0x156] sm:$0x1]
    %v2991 = vld [vmem:[%s342 + $0x1c6] sm:$0x1]
    %v2992 = vld [vmem:[%s342 + $0x1d6] sm:$0x1]
    %v2993 = vld [vmem:[%s342 + $0x1e6] sm:$0x1]
    %v2994 = vld [vmem:[%s342 + $0x1f6] sm:$0x1]
    %v2995 = vld [vmem:[%s342 + $0x206] sm:$0x1]
    %v2996 = vld [vmem:[%s342 + $0x216] sm:$0x1]
    %v2997 = vld [vmem:[%s342 + $0x226] sm:$0x1]
    %v2998 = vld [vmem:[%s342 + $0x236] sm:$0x1]
    %v2999 = vld [vmem:[%s342 + $0x2a6] sm:$0x1]
    %v3000 = vld [vmem:[%s342 + $0x2b6] sm:$0x1]
    %v3001 = vld [vmem:[%s342 + $0x2c6] sm:$0x1]
    %v3002 = vld [vmem:[%s342 + $0x2d6] sm:$0x1]
    %v3003 = vld [vmem:[%s342 + $0x2e6] sm:$0x1]
    %v3004 = vld [vmem:[%s342 + $0x2f6] sm:$0x1]
    %v3005 = vld [vmem:[%s342 + $0x306] sm:$0x1]
    %v3006 = vld [vmem:[%s342 + $0x316] sm:$0x1]
    %v3007 = vld [vmem:[%s342 + $0x386] sm:$0x1]
    %v3008 = vld [vmem:[%s342 + $0x396] sm:$0x1]
    %v3009 = vld [vmem:[%s342 + $0x3a6] sm:$0x1]
    %v3010 = vld [vmem:[%s342 + $0x3b6] sm:$0x1]
    %v3011 = vld [vmem:[%s342 + $0x3c6] sm:$0x1]
    %v3012 = vld [vmem:[%s342 + $0x3d6] sm:$0x1]
    %v3013 = vld [vmem:[%s342 + $0x3e6] sm:$0x1]
    %v3014 = vld [vmem:[%s342 + $0x3f6] sm:$0x1]
    %v3015 = vld [vmem:[%s342 + $0x466] sm:$0x1]
    %v3016 = vld [vmem:[%s342 + $0x476] sm:$0x1]
    %v3017 = vld [vmem:[%s342 + $0x486] sm:$0x1]
    %v3018 = vld [vmem:[%s342 + $0x496] sm:$0x1]
    %v3019 = vld [vmem:[%s342 + $0x4a6] sm:$0x1]
    %v3020 = vld [vmem:[%s342 + $0x4b6] sm:$0x1]
    %v3021 = vld [vmem:[%s342 + $0x4c6] sm:$0x1]
    %v3022 = vld [vmem:[%s342 + $0x4d6] sm:$0x1]
    %v3023 = vld [vmem:[%s342 + $0x546] sm:$0x1]
    %v3024 = vld [vmem:[%s342 + $0x556] sm:$0x1]
    %v3025 = vld [vmem:[%s342 + $0x566] sm:$0x1]
    %v3026 = vld [vmem:[%s342 + $0x576] sm:$0x1]
    %v3027 = vld [vmem:[%s342 + $0x586] sm:$0x1]
    %v3028 = vld [vmem:[%s342 + $0x596] sm:$0x1]
    %v3029 = vld [vmem:[%s342 + $0x5a6] sm:$0x1]
    %v3030 = vld [vmem:[%s342 + $0x5b6] sm:$0x1]
    %v3031 = vld [vmem:[%s342 + $0x626] sm:$0x1]
    %v3032 = vld [vmem:[%s342 + $0x636] sm:$0x1]
    %v3033 = vld [vmem:[%s342 + $0x646] sm:$0x1]
    %v3034 = vld [vmem:[%s342 + $0x656] sm:$0x1]
    %v3035 = vld [vmem:[%s342 + $0x666] sm:$0x1]
    %v3036 = vld [vmem:[%s342 + $0x676] sm:$0x1]
    %v3037 = vld [vmem:[%s342 + $0x686] sm:$0x1]
    %v3038 = vld [vmem:[%s342 + $0x696] sm:$0x1]
    %3039 = vst.msk [vmem:[%s342] sm:$0x1] %vm2782, %v2975
    %3040 = vst.msk [vmem:[%s342 + $0x10] sm:$0x1] %vm2782, %v2976
    %3041 = vst.msk [vmem:[%s342 + $0x20] sm:$0x1] %vm2782, %v2977
    %3042 = vst.msk [vmem:[%s342 + $0x30] sm:$0x1] %vm2782, %v2978
    %3043 = vst.msk [vmem:[%s342 + $0x40] sm:$0x1] %vm2782, %v2979
    %3044 = vst.msk [vmem:[%s342 + $0x50] sm:$0x1] %vm2782, %v2980
    %3045 = vst.msk [vmem:[%s342 + $0x60] sm:$0x1] %vm2782, %v2981
    %3046 = vst.msk [vmem:[%s342 + $0x70] sm:$0x1] %vm2782, %v2982
    %3047 = vst.msk [vmem:[%s342 + $0xe0] sm:$0x1] %vm2782, %v2983
    %3048 = vst.msk [vmem:[%s342 + $0xf0] sm:$0x1] %vm2782, %v2984
    %3049 = vst.msk [vmem:[%s342 + $0x100] sm:$0x1] %vm2782, %v2985
    %3050 = vst.msk [vmem:[%s342 + $0x110] sm:$0x1] %vm2782, %v2986
    %3051 = vst.msk [vmem:[%s342 + $0x120] sm:$0x1] %vm2782, %v2987
    %3052 = vst.msk [vmem:[%s342 + $0x130] sm:$0x1] %vm2782, %v2988
    %3053 = vst.msk [vmem:[%s342 + $0x140] sm:$0x1] %vm2782, %v2989
    %3054 = vst.msk [vmem:[%s342 + $0x150] sm:$0x1] %vm2782, %v2990
    %3055 = vst.msk [vmem:[%s342 + $0x1c0] sm:$0x1] %vm2782, %v2991
    %3056 = vst.msk [vmem:[%s342 + $0x1d0] sm:$0x1] %vm2782, %v2992
    %3057 = vst.msk [vmem:[%s342 + $0x1e0] sm:$0x1] %vm2782, %v2993
    %3058 = vst.msk [vmem:[%s342 + $0x1f0] sm:$0x1] %vm2782, %v2994
    %3059 = vst.msk [vmem:[%s342 + $0x200] sm:$0x1] %vm2782, %v2995
    %3060 = vst.msk [vmem:[%s342 + $0x210] sm:$0x1] %vm2782, %v2996
    %3061 = vst.msk [vmem:[%s342 + $0x220] sm:$0x1] %vm2782, %v2997
    %3062 = vst.msk [vmem:[%s342 + $0x230] sm:$0x1] %vm2782, %v2998
    %3063 = vst.msk [vmem:[%s342 + $0x2a0] sm:$0x1] %vm2782, %v2999
    %3064 = vst.msk [vmem:[%s342 + $0x2b0] sm:$0x1] %vm2782, %v3000
    %3065 = vst.msk [vmem:[%s342 + $0x2c0] sm:$0x1] %vm2782, %v3001
    %3066 = vst.msk [vmem:[%s342 + $0x2d0] sm:$0x1] %vm2782, %v3002
    %3067 = vst.msk [vmem:[%s342 + $0x2e0] sm:$0x1] %vm2782, %v3003
    %3068 = vst.msk [vmem:[%s342 + $0x2f0] sm:$0x1] %vm2782, %v3004
    %3069 = vst.msk [vmem:[%s342 + $0x300] sm:$0x1] %vm2782, %v3005
    %3070 = vst.msk [vmem:[%s342 + $0x310] sm:$0x1] %vm2782, %v3006
    %3071 = vst.msk [vmem:[%s342 + $0x380] sm:$0x1] %vm2782, %v3007
    %3072 = vst.msk [vmem:[%s342 + $0x390] sm:$0x1] %vm2782, %v3008
    %3073 = vst.msk [vmem:[%s342 + $0x3a0] sm:$0x1] %vm2782, %v3009
    %3074 = vst.msk [vmem:[%s342 + $0x3b0] sm:$0x1] %vm2782, %v3010
    %3075 = vst.msk [vmem:[%s342 + $0x3c0] sm:$0x1] %vm2782, %v3011
    %3076 = vst.msk [vmem:[%s342 + $0x3d0] sm:$0x1] %vm2782, %v3012
    %3077 = vst.msk [vmem:[%s342 + $0x3e0] sm:$0x1] %vm2782, %v3013
    %3078 = vst.msk [vmem:[%s342 + $0x3f0] sm:$0x1] %vm2782, %v3014
    %3079 = vst.msk [vmem:[%s342 + $0x460] sm:$0x1] %vm2782, %v3015
    %3080 = vst.msk [vmem:[%s342 + $0x470] sm:$0x1] %vm2782, %v3016
    %3081 = vst.msk [vmem:[%s342 + $0x480] sm:$0x1] %vm2782, %v3017
    %3082 = vst.msk [vmem:[%s342 + $0x490] sm:$0x1] %vm2782, %v3018
    %3083 = vst.msk [vmem:[%s342 + $0x4a0] sm:$0x1] %vm2782, %v3019
    %3084 = vst.msk [vmem:[%s342 + $0x4b0] sm:$0x1] %vm2782, %v3020
    %3085 = vst.msk [vmem:[%s342 + $0x4c0] sm:$0x1] %vm2782, %v3021
    %3086 = vst.msk [vmem:[%s342 + $0x4d0] sm:$0x1] %vm2782, %v3022
    %3087 = vst.msk [vmem:[%s342 + $0x540] sm:$0x1] %vm2782, %v3023
    %3088 = vst.msk [vmem:[%s342 + $0x550] sm:$0x1] %vm2782, %v3024
    %3089 = vst.msk [vmem:[%s342 + $0x560] sm:$0x1] %vm2782, %v3025
    %3090 = vst.msk [vmem:[%s342 + $0x570] sm:$0x1] %vm2782, %v3026
    %3091 = vst.msk [vmem:[%s342 + $0x580] sm:$0x1] %vm2782, %v3027
    %3092 = vst.msk [vmem:[%s342 + $0x590] sm:$0x1] %vm2782, %v3028
    %3093 = vst.msk [vmem:[%s342 + $0x5a0] sm:$0x1] %vm2782, %v3029
    %3094 = vst.msk [vmem:[%s342 + $0x5b0] sm:$0x1] %vm2782, %v3030
    %3095 = vst.msk [vmem:[%s342 + $0x620] sm:$0x1] %vm2782, %v3031
    %3096 = vst.msk [vmem:[%s342 + $0x630] sm:$0x1] %vm2782, %v3032
    %3097 = vst.msk [vmem:[%s342 + $0x640] sm:$0x1] %vm2782, %v3033
    %3098 = vst.msk [vmem:[%s342 + $0x650] sm:$0x1] %vm2782, %v3034
    %3099 = vst.msk [vmem:[%s342 + $0x660] sm:$0x1] %vm2782, %v3035
    %3100 = vst.msk [vmem:[%s342 + $0x670] sm:$0x1] %vm2782, %v3036
    %3101 = vst.msk [vmem:[%s342 + $0x680] sm:$0x1] %vm2782, %v3037
    %3102 = vst.msk [vmem:[%s342 + $0x690] sm:$0x1] %vm2782, %v3038
    %v3103 = vld [vmem:[%s342 + $0x9] sm:$0x1]
    %v3104 = vld [vmem:[%s342 + $0x19] sm:$0x1]
    %v3105 = vld [vmem:[%s342 + $0x29] sm:$0x1]
    %v3106 = vld [vmem:[%s342 + $0x39] sm:$0x1]
    %v3107 = vld [vmem:[%s342 + $0x49] sm:$0x1]
    %v3108 = vld [vmem:[%s342 + $0x59] sm:$0x1]
    %v3109 = vld [vmem:[%s342 + $0x69] sm:$0x1]
    %v3110 = vld [vmem:[%s342 + $0x79] sm:$0x1]
    %v3111 = vld [vmem:[%s342 + $0xe9] sm:$0x1]
    %v3112 = vld [vmem:[%s342 + $0xf9] sm:$0x1]
    %v3113 = vld [vmem:[%s342 + $0x109] sm:$0x1]
    %v3114 = vld [vmem:[%s342 + $0x119] sm:$0x1]
    %v3115 = vld [vmem:[%s342 + $0x129] sm:$0x1]
    %v3116 = vld [vmem:[%s342 + $0x139] sm:$0x1]
    %v3117 = vld [vmem:[%s342 + $0x149] sm:$0x1]
    %v3118 = vld [vmem:[%s342 + $0x159] sm:$0x1]
    %v3119 = vld [vmem:[%s342 + $0x1c9] sm:$0x1]
    %v3120 = vld [vmem:[%s342 + $0x1d9] sm:$0x1]
    %v3121 = vld [vmem:[%s342 + $0x1e9] sm:$0x1]
    %v3122 = vld [vmem:[%s342 + $0x1f9] sm:$0x1]
    %v3123 = vld [vmem:[%s342 + $0x209] sm:$0x1]
    %v3124 = vld [vmem:[%s342 + $0x219] sm:$0x1]
    %v3125 = vld [vmem:[%s342 + $0x229] sm:$0x1]
    %v3126 = vld [vmem:[%s342 + $0x239] sm:$0x1]
    %v3127 = vld [vmem:[%s342 + $0x2a9] sm:$0x1]
    %v3128 = vld [vmem:[%s342 + $0x2b9] sm:$0x1]
    %v3129 = vld [vmem:[%s342 + $0x2c9] sm:$0x1]
    %v3130 = vld [vmem:[%s342 + $0x2d9] sm:$0x1]
    %v3131 = vld [vmem:[%s342 + $0x2e9] sm:$0x1]
    %v3132 = vld [vmem:[%s342 + $0x2f9] sm:$0x1]
    %v3133 = vld [vmem:[%s342 + $0x309] sm:$0x1]
    %v3134 = vld [vmem:[%s342 + $0x319] sm:$0x1]
    %v3135 = vld [vmem:[%s342 + $0x389] sm:$0x1]
    %v3136 = vld [vmem:[%s342 + $0x399] sm:$0x1]
    %v3137 = vld [vmem:[%s342 + $0x3a9] sm:$0x1]
    %v3138 = vld [vmem:[%s342 + $0x3b9] sm:$0x1]
    %v3139 = vld [vmem:[%s342 + $0x3c9] sm:$0x1]
    %v3140 = vld [vmem:[%s342 + $0x3d9] sm:$0x1]
    %v3141 = vld [vmem:[%s342 + $0x3e9] sm:$0x1]
    %v3142 = vld [vmem:[%s342 + $0x3f9] sm:$0x1]
    %v3143 = vld [vmem:[%s342 + $0x469] sm:$0x1]
    %v3144 = vld [vmem:[%s342 + $0x479] sm:$0x1]
    %v3145 = vld [vmem:[%s342 + $0x489] sm:$0x1]
    %v3146 = vld [vmem:[%s342 + $0x499] sm:$0x1]
    %v3147 = vld [vmem:[%s342 + $0x4a9] sm:$0x1]
    %v3148 = vld [vmem:[%s342 + $0x4b9] sm:$0x1]
    %v3149 = vld [vmem:[%s342 + $0x4c9] sm:$0x1]
    %v3150 = vld [vmem:[%s342 + $0x4d9] sm:$0x1]
    %v3151 = vld [vmem:[%s342 + $0x549] sm:$0x1]
    %v3152 = vld [vmem:[%s342 + $0x559] sm:$0x1]
    %v3153 = vld [vmem:[%s342 + $0x569] sm:$0x1]
    %v3154 = vld [vmem:[%s342 + $0x579] sm:$0x1]
    %v3155 = vld [vmem:[%s342 + $0x589] sm:$0x1]
    %v3156 = vld [vmem:[%s342 + $0x599] sm:$0x1]
    %v3157 = vld [vmem:[%s342 + $0x5a9] sm:$0x1]
    %v3158 = vld [vmem:[%s342 + $0x5b9] sm:$0x1]
    %v3159 = vld [vmem:[%s342 + $0x629] sm:$0x1]
    %v3160 = vld [vmem:[%s342 + $0x639] sm:$0x1]
    %v3161 = vld [vmem:[%s342 + $0x649] sm:$0x1]
    %v3162 = vld [vmem:[%s342 + $0x659] sm:$0x1]
    %v3163 = vld [vmem:[%s342 + $0x669] sm:$0x1]
    %v3164 = vld [vmem:[%s342 + $0x679] sm:$0x1]
    %v3165 = vld [vmem:[%s342 + $0x689] sm:$0x1]
    %v3166 = vld [vmem:[%s342 + $0x699] sm:$0x1]
    %3167 = vst.msk [vmem:[%s342 + $0xb] sm:$0x1] %vm2782, %v3103
    %3168 = vst.msk [vmem:[%s342 + $0x1b] sm:$0x1] %vm2782, %v3104
    %3169 = vst.msk [vmem:[%s342 + $0x2b] sm:$0x1] %vm2782, %v3105
    %3170 = vst.msk [vmem:[%s342 + $0x3b] sm:$0x1] %vm2782, %v3106
    %3171 = vst.msk [vmem:[%s342 + $0x4b] sm:$0x1] %vm2782, %v3107
    %3172 = vst.msk [vmem:[%s342 + $0x5b] sm:$0x1] %vm2782, %v3108
    %3173 = vst.msk [vmem:[%s342 + $0x6b] sm:$0x1] %vm2782, %v3109
    %3174 = vst.msk [vmem:[%s342 + $0x7b] sm:$0x1] %vm2782, %v3110
    %3175 = vst.msk [vmem:[%s342 + $0xeb] sm:$0x1] %vm2782, %v3111
    %3176 = vst.msk [vmem:[%s342 + $0xfb] sm:$0x1] %vm2782, %v3112
    %3177 = vst.msk [vmem:[%s342 + $0x10b] sm:$0x1] %vm2782, %v3113
    %3178 = vst.msk [vmem:[%s342 + $0x11b] sm:$0x1] %vm2782, %v3114
    %3179 = vst.msk [vmem:[%s342 + $0x12b] sm:$0x1] %vm2782, %v3115
    %3180 = vst.msk [vmem:[%s342 + $0x13b] sm:$0x1] %vm2782, %v3116
    %3181 = vst.msk [vmem:[%s342 + $0x14b] sm:$0x1] %vm2782, %v3117
    %3182 = vst.msk [vmem:[%s342 + $0x15b] sm:$0x1] %vm2782, %v3118
    %3183 = vst.msk [vmem:[%s342 + $0x1cb] sm:$0x1] %vm2782, %v3119
    %3184 = vst.msk [vmem:[%s342 + $0x1db] sm:$0x1] %vm2782, %v3120
    %3185 = vst.msk [vmem:[%s342 + $0x1eb] sm:$0x1] %vm2782, %v3121
    %3186 = vst.msk [vmem:[%s342 + $0x1fb] sm:$0x1] %vm2782, %v3122
    %3187 = vst.msk [vmem:[%s342 + $0x20b] sm:$0x1] %vm2782, %v3123
    %3188 = vst.msk [vmem:[%s342 + $0x21b] sm:$0x1] %vm2782, %v3124
    %3189 = vst.msk [vmem:[%s342 + $0x22b] sm:$0x1] %vm2782, %v3125
    %3190 = vst.msk [vmem:[%s342 + $0x23b] sm:$0x1] %vm2782, %v3126
    %3191 = vst.msk [vmem:[%s342 + $0x2ab] sm:$0x1] %vm2782, %v3127
    %3192 = vst.msk [vmem:[%s342 + $0x2bb] sm:$0x1] %vm2782, %v3128
    %3193 = vst.msk [vmem:[%s342 + $0x2cb] sm:$0x1] %vm2782, %v3129
    %3194 = vst.msk [vmem:[%s342 + $0x2db] sm:$0x1] %vm2782, %v3130
    %3195 = vst.msk [vmem:[%s342 + $0x2eb] sm:$0x1] %vm2782, %v3131
    %3196 = vst.msk [vmem:[%s342 + $0x2fb] sm:$0x1] %vm2782, %v3132
    %3197 = vst.msk [vmem:[%s342 + $0x30b] sm:$0x1] %vm2782, %v3133
    %3198 = vst.msk [vmem:[%s342 + $0x31b] sm:$0x1] %vm2782, %v3134
    %3199 = vst.msk [vmem:[%s342 + $0x38b] sm:$0x1] %vm2782, %v3135
    %3200 = vst.msk [vmem:[%s342 + $0x39b] sm:$0x1] %vm2782, %v3136
    %3201 = vst.msk [vmem:[%s342 + $0x3ab] sm:$0x1] %vm2782, %v3137
    %3202 = vst.msk [vmem:[%s342 + $0x3bb] sm:$0x1] %vm2782, %v3138
    %3203 = vst.msk [vmem:[%s342 + $0x3cb] sm:$0x1] %vm2782, %v3139
    %3204 = vst.msk [vmem:[%s342 + $0x3db] sm:$0x1] %vm2782, %v3140
    %3205 = vst.msk [vmem:[%s342 + $0x3eb] sm:$0x1] %vm2782, %v3141
    %3206 = vst.msk [vmem:[%s342 + $0x3fb] sm:$0x1] %vm2782, %v3142
    %3207 = vst.msk [vmem:[%s342 + $0x46b] sm:$0x1] %vm2782, %v3143
    %3208 = vst.msk [vmem:[%s342 + $0x47b] sm:$0x1] %vm2782, %v3144
    %3209 = vst.msk [vmem:[%s342 + $0x48b] sm:$0x1] %vm2782, %v3145
    %3210 = vst.msk [vmem:[%s342 + $0x49b] sm:$0x1] %vm2782, %v3146
    %3211 = vst.msk [vmem:[%s342 + $0x4ab] sm:$0x1] %vm2782, %v3147
    %3212 = vst.msk [vmem:[%s342 + $0x4bb] sm:$0x1] %vm2782, %v3148
    %3213 = vst.msk [vmem:[%s342 + $0x4cb] sm:$0x1] %vm2782, %v3149
    %3214 = vst.msk [vmem:[%s342 + $0x4db] sm:$0x1] %vm2782, %v3150
    %3215 = vst.msk [vmem:[%s342 + $0x54b] sm:$0x1] %vm2782, %v3151
    %3216 = vst.msk [vmem:[%s342 + $0x55b] sm:$0x1] %vm2782, %v3152
    %3217 = vst.msk [vmem:[%s342 + $0x56b] sm:$0x1] %vm2782, %v3153
    %3218 = vst.msk [vmem:[%s342 + $0x57b] sm:$0x1] %vm2782, %v3154
    %3219 = vst.msk [vmem:[%s342 + $0x58b] sm:$0x1] %vm2782, %v3155
    %3220 = vst.msk [vmem:[%s342 + $0x59b] sm:$0x1] %vm2782, %v3156
    %3221 = vst.msk [vmem:[%s342 + $0x5ab] sm:$0x1] %vm2782, %v3157
    %3222 = vst.msk [vmem:[%s342 + $0x5bb] sm:$0x1] %vm2782, %v3158
    %3223 = vst.msk [vmem:[%s342 + $0x62b] sm:$0x1] %vm2782, %v3159
    %3224 = vst.msk [vmem:[%s342 + $0x63b] sm:$0x1] %vm2782, %v3160
    %3225 = vst.msk [vmem:[%s342 + $0x64b] sm:$0x1] %vm2782, %v3161
    %3226 = vst.msk [vmem:[%s342 + $0x65b] sm:$0x1] %vm2782, %v3162
    %3227 = vst.msk [vmem:[%s342 + $0x66b] sm:$0x1] %vm2782, %v3163
    %3228 = vst.msk [vmem:[%s342 + $0x67b] sm:$0x1] %vm2782, %v3164
    %3229 = vst.msk [vmem:[%s342 + $0x68b] sm:$0x1] %vm2782, %v3165
    %3230 = vst.msk [vmem:[%s342 + $0x69b] sm:$0x1] %vm2782, %v3166
    %v3231 = vld [vmem:[%s342 + $0x8] sm:$0x1]
    %v3232 = vld [vmem:[%s342 + $0x18] sm:$0x1]
    %v3233 = vld [vmem:[%s342 + $0x28] sm:$0x1]
    %v3234 = vld [vmem:[%s342 + $0x38] sm:$0x1]
    %v3235 = vld [vmem:[%s342 + $0x48] sm:$0x1]
    %v3236 = vld [vmem:[%s342 + $0x58] sm:$0x1]
    %v3237 = vld [vmem:[%s342 + $0x68] sm:$0x1]
    %v3238 = vld [vmem:[%s342 + $0x78] sm:$0x1]
    %v3239 = vld [vmem:[%s342 + $0xe8] sm:$0x1]
    %v3240 = vld [vmem:[%s342 + $0xf8] sm:$0x1]
    %v3241 = vld [vmem:[%s342 + $0x108] sm:$0x1]
    %v3242 = vld [vmem:[%s342 + $0x118] sm:$0x1]
    %v3243 = vld [vmem:[%s342 + $0x128] sm:$0x1]
    %v3244 = vld [vmem:[%s342 + $0x138] sm:$0x1]
    %v3245 = vld [vmem:[%s342 + $0x148] sm:$0x1]
    %v3246 = vld [vmem:[%s342 + $0x158] sm:$0x1]
    %v3247 = vld [vmem:[%s342 + $0x1c8] sm:$0x1]
    %v3248 = vld [vmem:[%s342 + $0x1d8] sm:$0x1]
    %v3249 = vld [vmem:[%s342 + $0x1e8] sm:$0x1]
    %v3250 = vld [vmem:[%s342 + $0x1f8] sm:$0x1]
    %v3251 = vld [vmem:[%s342 + $0x208] sm:$0x1]
    %v3252 = vld [vmem:[%s342 + $0x218] sm:$0x1]
    %v3253 = vld [vmem:[%s342 + $0x228] sm:$0x1]
    %v3254 = vld [vmem:[%s342 + $0x238] sm:$0x1]
    %v3255 = vld [vmem:[%s342 + $0x2a8] sm:$0x1]
    %v3256 = vld [vmem:[%s342 + $0x2b8] sm:$0x1]
    %v3257 = vld [vmem:[%s342 + $0x2c8] sm:$0x1]
    %v3258 = vld [vmem:[%s342 + $0x2d8] sm:$0x1]
    %v3259 = vld [vmem:[%s342 + $0x2e8] sm:$0x1]
    %v3260 = vld [vmem:[%s342 + $0x2f8] sm:$0x1]
    %v3261 = vld [vmem:[%s342 + $0x308] sm:$0x1]
    %v3262 = vld [vmem:[%s342 + $0x318] sm:$0x1]
    %v3263 = vld [vmem:[%s342 + $0x388] sm:$0x1]
    %v3264 = vld [vmem:[%s342 + $0x398] sm:$0x1]
    %v3265 = vld [vmem:[%s342 + $0x3a8] sm:$0x1]
    %v3266 = vld [vmem:[%s342 + $0x3b8] sm:$0x1]
    %v3267 = vld [vmem:[%s342 + $0x3c8] sm:$0x1]
    %v3268 = vld [vmem:[%s342 + $0x3d8] sm:$0x1]
    %v3269 = vld [vmem:[%s342 + $0x3e8] sm:$0x1]
    %v3270 = vld [vmem:[%s342 + $0x3f8] sm:$0x1]
    %v3271 = vld [vmem:[%s342 + $0x468] sm:$0x1]
    %v3272 = vld [vmem:[%s342 + $0x478] sm:$0x1]
    %v3273 = vld [vmem:[%s342 + $0x488] sm:$0x1]
    %v3274 = vld [vmem:[%s342 + $0x498] sm:$0x1]
    %v3275 = vld [vmem:[%s342 + $0x4a8] sm:$0x1]
    %v3276 = vld [vmem:[%s342 + $0x4b8] sm:$0x1]
    %v3277 = vld [vmem:[%s342 + $0x4c8] sm:$0x1]
    %v3278 = vld [vmem:[%s342 + $0x4d8] sm:$0x1]
    %v3279 = vld [vmem:[%s342 + $0x548] sm:$0x1]
    %v3280 = vld [vmem:[%s342 + $0x558] sm:$0x1]
    %v3281 = vld [vmem:[%s342 + $0x568] sm:$0x1]
    %v3282 = vld [vmem:[%s342 + $0x578] sm:$0x1]
    %v3283 = vld [vmem:[%s342 + $0x588] sm:$0x1]
    %v3284 = vld [vmem:[%s342 + $0x598] sm:$0x1]
    %v3285 = vld [vmem:[%s342 + $0x5a8] sm:$0x1]
    %v3286 = vld [vmem:[%s342 + $0x5b8] sm:$0x1]
    %v3287 = vld [vmem:[%s342 + $0x628] sm:$0x1]
    %v3288 = vld [vmem:[%s342 + $0x638] sm:$0x1]
    %v3289 = vld [vmem:[%s342 + $0x648] sm:$0x1]
    %v3290 = vld [vmem:[%s342 + $0x658] sm:$0x1]
    %v3291 = vld [vmem:[%s342 + $0x668] sm:$0x1]
    %v3292 = vld [vmem:[%s342 + $0x678] sm:$0x1]
    %v3293 = vld [vmem:[%s342 + $0x688] sm:$0x1]
    %v3294 = vld [vmem:[%s342 + $0x698] sm:$0x1]
    %3295 = vst.msk [vmem:[%s342 + $0xc] sm:$0x1] %vm2782, %v3231
    %3296 = vst.msk [vmem:[%s342 + $0x1c] sm:$0x1] %vm2782, %v3232
    %3297 = vst.msk [vmem:[%s342 + $0x2c] sm:$0x1] %vm2782, %v3233
    %3298 = vst.msk [vmem:[%s342 + $0x3c] sm:$0x1] %vm2782, %v3234
    %3299 = vst.msk [vmem:[%s342 + $0x4c] sm:$0x1] %vm2782, %v3235
    %3300 = vst.msk [vmem:[%s342 + $0x5c] sm:$0x1] %vm2782, %v3236
    %3301 = vst.msk [vmem:[%s342 + $0x6c] sm:$0x1] %vm2782, %v3237
    %3302 = vst.msk [vmem:[%s342 + $0x7c] sm:$0x1] %vm2782, %v3238
    %3303 = vst.msk [vmem:[%s342 + $0xec] sm:$0x1] %vm2782, %v3239
    %3304 = vst.msk [vmem:[%s342 + $0xfc] sm:$0x1] %vm2782, %v3240
    %3305 = vst.msk [vmem:[%s342 + $0x10c] sm:$0x1] %vm2782, %v3241
    %3306 = vst.msk [vmem:[%s342 + $0x11c] sm:$0x1] %vm2782, %v3242
    %3307 = vst.msk [vmem:[%s342 + $0x12c] sm:$0x1] %vm2782, %v3243
    %3308 = vst.msk [vmem:[%s342 + $0x13c] sm:$0x1] %vm2782, %v3244
    %3309 = vst.msk [vmem:[%s342 + $0x14c] sm:$0x1] %vm2782, %v3245
    %3310 = vst.msk [vmem:[%s342 + $0x15c] sm:$0x1] %vm2782, %v3246
    %3311 = vst.msk [vmem:[%s342 + $0x1cc] sm:$0x1] %vm2782, %v3247
    %3312 = vst.msk [vmem:[%s342 + $0x1dc] sm:$0x1] %vm2782, %v3248
    %3313 = vst.msk [vmem:[%s342 + $0x1ec] sm:$0x1] %vm2782, %v3249
    %3314 = vst.msk [vmem:[%s342 + $0x1fc] sm:$0x1] %vm2782, %v3250
    %3315 = vst.msk [vmem:[%s342 + $0x20c] sm:$0x1] %vm2782, %v3251
    %3316 = vst.msk [vmem:[%s342 + $0x21c] sm:$0x1] %vm2782, %v3252
    %3317 = vst.msk [vmem:[%s342 + $0x22c] sm:$0x1] %vm2782, %v3253
    %3318 = vst.msk [vmem:[%s342 + $0x23c] sm:$0x1] %vm2782, %v3254
    %3319 = vst.msk [vmem:[%s342 + $0x2ac] sm:$0x1] %vm2782, %v3255
    %3320 = vst.msk [vmem:[%s342 + $0x2bc] sm:$0x1] %vm2782, %v3256
    %3321 = vst.msk [vmem:[%s342 + $0x2cc] sm:$0x1] %vm2782, %v3257
    %3322 = vst.msk [vmem:[%s342 + $0x2dc] sm:$0x1] %vm2782, %v3258
    %3323 = vst.msk [vmem:[%s342 + $0x2ec] sm:$0x1] %vm2782, %v3259
    %3324 = vst.msk [vmem:[%s342 + $0x2fc] sm:$0x1] %vm2782, %v3260
    %3325 = vst.msk [vmem:[%s342 + $0x30c] sm:$0x1] %vm2782, %v3261
    %3326 = vst.msk [vmem:[%s342 + $0x31c] sm:$0x1] %vm2782, %v3262
    %3327 = vst.msk [vmem:[%s342 + $0x38c] sm:$0x1] %vm2782, %v3263
    %3328 = vst.msk [vmem:[%s342 + $0x39c] sm:$0x1] %vm2782, %v3264
    %3329 = vst.msk [vmem:[%s342 + $0x3ac] sm:$0x1] %vm2782, %v3265
    %3330 = vst.msk [vmem:[%s342 + $0x3bc] sm:$0x1] %vm2782, %v3266
    %3331 = vst.msk [vmem:[%s342 + $0x3cc] sm:$0x1] %vm2782, %v3267
    %3332 = vst.msk [vmem:[%s342 + $0x3dc] sm:$0x1] %vm2782, %v3268
    %3333 = vst.msk [vmem:[%s342 + $0x3ec] sm:$0x1] %vm2782, %v3269
    %3334 = vst.msk [vmem:[%s342 + $0x3fc] sm:$0x1] %vm2782, %v3270
    %3335 = vst.msk [vmem:[%s342 + $0x46c] sm:$0x1] %vm2782, %v3271
    %3336 = vst.msk [vmem:[%s342 + $0x47c] sm:$0x1] %vm2782, %v3272
    %3337 = vst.msk [vmem:[%s342 + $0x48c] sm:$0x1] %vm2782, %v3273
    %3338 = vst.msk [vmem:[%s342 + $0x49c] sm:$0x1] %vm2782, %v3274
    %3339 = vst.msk [vmem:[%s342 + $0x4ac] sm:$0x1] %vm2782, %v3275
    %3340 = vst.msk [vmem:[%s342 + $0x4bc] sm:$0x1] %vm2782, %v3276
    %3341 = vst.msk [vmem:[%s342 + $0x4cc] sm:$0x1] %vm2782, %v3277
    %3342 = vst.msk [vmem:[%s342 + $0x4dc] sm:$0x1] %vm2782, %v3278
    %3343 = vst.msk [vmem:[%s342 + $0x54c] sm:$0x1] %vm2782, %v3279
    %3344 = vst.msk [vmem:[%s342 + $0x55c] sm:$0x1] %vm2782, %v3280
    %3345 = vst.msk [vmem:[%s342 + $0x56c] sm:$0x1] %vm2782, %v3281
    %3346 = vst.msk [vmem:[%s342 + $0x57c] sm:$0x1] %vm2782, %v3282
    %3347 = vst.msk [vmem:[%s342 + $0x58c] sm:$0x1] %vm2782, %v3283
    %3348 = vst.msk [vmem:[%s342 + $0x59c] sm:$0x1] %vm2782, %v3284
    %3349 = vst.msk [vmem:[%s342 + $0x5ac] sm:$0x1] %vm2782, %v3285
    %3350 = vst.msk [vmem:[%s342 + $0x5bc] sm:$0x1] %vm2782, %v3286
    %3351 = vst.msk [vmem:[%s342 + $0x62c] sm:$0x1] %vm2782, %v3287
    %3352 = vst.msk [vmem:[%s342 + $0x63c] sm:$0x1] %vm2782, %v3288
    %3353 = vst.msk [vmem:[%s342 + $0x64c] sm:$0x1] %vm2782, %v3289
    %3354 = vst.msk [vmem:[%s342 + $0x65c] sm:$0x1] %vm2782, %v3290
    %3355 = vst.msk [vmem:[%s342 + $0x66c] sm:$0x1] %vm2782, %v3291
    %3356 = vst.msk [vmem:[%s342 + $0x67c] sm:$0x1] %vm2782, %v3292
    %3357 = vst.msk [vmem:[%s342 + $0x68c] sm:$0x1] %vm2782, %v3293
    %3358 = vst.msk [vmem:[%s342 + $0x69c] sm:$0x1] %vm2782, %v3294
    %v3359 = vld [vmem:[%s342 + $0x7] sm:$0x1]
    %v3360 = vld [vmem:[%s342 + $0x17] sm:$0x1]
    %v3361 = vld [vmem:[%s342 + $0x27] sm:$0x1]
    %v3362 = vld [vmem:[%s342 + $0x37] sm:$0x1]
    %v3363 = vld [vmem:[%s342 + $0x47] sm:$0x1]
    %v3364 = vld [vmem:[%s342 + $0x57] sm:$0x1]
    %v3365 = vld [vmem:[%s342 + $0x67] sm:$0x1]
    %v3366 = vld [vmem:[%s342 + $0x77] sm:$0x1]
    %v3367 = vld [vmem:[%s342 + $0xe7] sm:$0x1]
    %v3368 = vld [vmem:[%s342 + $0xf7] sm:$0x1]
    %v3369 = vld [vmem:[%s342 + $0x107] sm:$0x1]
    %v3370 = vld [vmem:[%s342 + $0x117] sm:$0x1]
    %v3371 = vld [vmem:[%s342 + $0x127] sm:$0x1]
    %v3372 = vld [vmem:[%s342 + $0x137] sm:$0x1]
    %v3373 = vld [vmem:[%s342 + $0x147] sm:$0x1]
    %v3374 = vld [vmem:[%s342 + $0x157] sm:$0x1]
    %v3375 = vld [vmem:[%s342 + $0x1c7] sm:$0x1]
    %v3376 = vld [vmem:[%s342 + $0x1d7] sm:$0x1]
    %v3377 = vld [vmem:[%s342 + $0x1e7] sm:$0x1]
    %v3378 = vld [vmem:[%s342 + $0x1f7] sm:$0x1]
    %v3379 = vld [vmem:[%s342 + $0x207] sm:$0x1]
    %v3380 = vld [vmem:[%s342 + $0x217] sm:$0x1]
    %v3381 = vld [vmem:[%s342 + $0x227] sm:$0x1]
    %v3382 = vld [vmem:[%s342 + $0x237] sm:$0x1]
    %v3383 = vld [vmem:[%s342 + $0x2a7] sm:$0x1]
    %v3384 = vld [vmem:[%s342 + $0x2b7] sm:$0x1]
    %v3385 = vld [vmem:[%s342 + $0x2c7] sm:$0x1]
    %v3386 = vld [vmem:[%s342 + $0x2d7] sm:$0x1]
    %v3387 = vld [vmem:[%s342 + $0x2e7] sm:$0x1]
    %v3388 = vld [vmem:[%s342 + $0x2f7] sm:$0x1]
    %v3389 = vld [vmem:[%s342 + $0x307] sm:$0x1]
    %v3390 = vld [vmem:[%s342 + $0x317] sm:$0x1]
    %v3391 = vld [vmem:[%s342 + $0x387] sm:$0x1]
    %v3392 = vld [vmem:[%s342 + $0x397] sm:$0x1]
    %v3393 = vld [vmem:[%s342 + $0x3a7] sm:$0x1]
    %v3394 = vld [vmem:[%s342 + $0x3b7] sm:$0x1]
    %v3395 = vld [vmem:[%s342 + $0x3c7] sm:$0x1]
    %v3396 = vld [vmem:[%s342 + $0x3d7] sm:$0x1]
    %v3397 = vld [vmem:[%s342 + $0x3e7] sm:$0x1]
    %v3398 = vld [vmem:[%s342 + $0x3f7] sm:$0x1]
    %v3399 = vld [vmem:[%s342 + $0x467] sm:$0x1]
    %v3400 = vld [vmem:[%s342 + $0x477] sm:$0x1]
    %v3401 = vld [vmem:[%s342 + $0x487] sm:$0x1]
    %v3402 = vld [vmem:[%s342 + $0x497] sm:$0x1]
    %v3403 = vld [vmem:[%s342 + $0x4a7] sm:$0x1]
    %v3404 = vld [vmem:[%s342 + $0x4b7] sm:$0x1]
    %v3405 = vld [vmem:[%s342 + $0x4c7] sm:$0x1]
    %v3406 = vld [vmem:[%s342 + $0x4d7] sm:$0x1]
    %v3407 = vld [vmem:[%s342 + $0x547] sm:$0x1]
    %v3408 = vld [vmem:[%s342 + $0x557] sm:$0x1]
    %v3409 = vld [vmem:[%s342 + $0x567] sm:$0x1]
    %v3410 = vld [vmem:[%s342 + $0x577] sm:$0x1]
    %v3411 = vld [vmem:[%s342 + $0x587] sm:$0x1]
    %v3412 = vld [vmem:[%s342 + $0x597] sm:$0x1]
    %v3413 = vld [vmem:[%s342 + $0x5a7] sm:$0x1]
    %v3414 = vld [vmem:[%s342 + $0x5b7] sm:$0x1]
    %v3415 = vld [vmem:[%s342 + $0x627] sm:$0x1]
    %v3416 = vld [vmem:[%s342 + $0x637] sm:$0x1]
    %v3417 = vld [vmem:[%s342 + $0x647] sm:$0x1]
    %v3418 = vld [vmem:[%s342 + $0x657] sm:$0x1]
    %v3419 = vld [vmem:[%s342 + $0x667] sm:$0x1]
    %v3420 = vld [vmem:[%s342 + $0x677] sm:$0x1]
    %v3421 = vld [vmem:[%s342 + $0x687] sm:$0x1]
    %v3422 = vld [vmem:[%s342 + $0x697] sm:$0x1]
    %3423 = vst.msk [vmem:[%s342 + $0xd] sm:$0x1] %vm2782, %v3359
    %3424 = vst.msk [vmem:[%s342 + $0x1d] sm:$0x1] %vm2782, %v3360
    %3425 = vst.msk [vmem:[%s342 + $0x2d] sm:$0x1] %vm2782, %v3361
    %3426 = vst.msk [vmem:[%s342 + $0x3d] sm:$0x1] %vm2782, %v3362
    %3427 = vst.msk [vmem:[%s342 + $0x4d] sm:$0x1] %vm2782, %v3363
    %3428 = vst.msk [vmem:[%s342 + $0x5d] sm:$0x1] %vm2782, %v3364
    %3429 = vst.msk [vmem:[%s342 + $0x6d] sm:$0x1] %vm2782, %v3365
    %3430 = vst.msk [vmem:[%s342 + $0x7d] sm:$0x1] %vm2782, %v3366
    %3431 = vst.msk [vmem:[%s342 + $0xed] sm:$0x1] %vm2782, %v3367
    %3432 = vst.msk [vmem:[%s342 + $0xfd] sm:$0x1] %vm2782, %v3368
    %3433 = vst.msk [vmem:[%s342 + $0x10d] sm:$0x1] %vm2782, %v3369
    %3434 = vst.msk [vmem:[%s342 + $0x11d] sm:$0x1] %vm2782, %v3370
    %3435 = vst.msk [vmem:[%s342 + $0x12d] sm:$0x1] %vm2782, %v3371
    %3436 = vst.msk [vmem:[%s342 + $0x13d] sm:$0x1] %vm2782, %v3372
    %3437 = vst.msk [vmem:[%s342 + $0x14d] sm:$0x1] %vm2782, %v3373
    %3438 = vst.msk [vmem:[%s342 + $0x15d] sm:$0x1] %vm2782, %v3374
    %3439 = vst.msk [vmem:[%s342 + $0x1cd] sm:$0x1] %vm2782, %v3375
    %3440 = vst.msk [vmem:[%s342 + $0x1dd] sm:$0x1] %vm2782, %v3376
    %3441 = vst.msk [vmem:[%s342 + $0x1ed] sm:$0x1] %vm2782, %v3377
    %3442 = vst.msk [vmem:[%s342 + $0x1fd] sm:$0x1] %vm2782, %v3378
    %3443 = vst.msk [vmem:[%s342 + $0x20d] sm:$0x1] %vm2782, %v3379
    %3444 = vst.msk [vmem:[%s342 + $0x21d] sm:$0x1] %vm2782, %v3380
    %3445 = vst.msk [vmem:[%s342 + $0x22d] sm:$0x1] %vm2782, %v3381
    %3446 = vst.msk [vmem:[%s342 + $0x23d] sm:$0x1] %vm2782, %v3382
    %3447 = vst.msk [vmem:[%s342 + $0x2ad] sm:$0x1] %vm2782, %v3383
    %3448 = vst.msk [vmem:[%s342 + $0x2bd] sm:$0x1] %vm2782, %v3384
    %3449 = vst.msk [vmem:[%s342 + $0x2cd] sm:$0x1] %vm2782, %v3385
    %3450 = vst.msk [vmem:[%s342 + $0x2dd] sm:$0x1] %vm2782, %v3386
    %3451 = vst.msk [vmem:[%s342 + $0x2ed] sm:$0x1] %vm2782, %v3387
    %3452 = vst.msk [vmem:[%s342 + $0x2fd] sm:$0x1] %vm2782, %v3388
    %3453 = vst.msk [vmem:[%s342 + $0x30d] sm:$0x1] %vm2782, %v3389
    %3454 = vst.msk [vmem:[%s342 + $0x31d] sm:$0x1] %vm2782, %v3390
    %3455 = vst.msk [vmem:[%s342 + $0x38d] sm:$0x1] %vm2782, %v3391
    %3456 = vst.msk [vmem:[%s342 + $0x39d] sm:$0x1] %vm2782, %v3392
    %3457 = vst.msk [vmem:[%s342 + $0x3ad] sm:$0x1] %vm2782, %v3393
    %3458 = vst.msk [vmem:[%s342 + $0x3bd] sm:$0x1] %vm2782, %v3394
    %3459 = vst.msk [vmem:[%s342 + $0x3cd] sm:$0x1] %vm2782, %v3395
    %3460 = vst.msk [vmem:[%s342 + $0x3dd] sm:$0x1] %vm2782, %v3396
    %3461 = vst.msk [vmem:[%s342 + $0x3ed] sm:$0x1] %vm2782, %v3397
    %3462 = vst.msk [vmem:[%s342 + $0x3fd] sm:$0x1] %vm2782, %v3398
    %3463 = vst.msk [vmem:[%s342 + $0x46d] sm:$0x1] %vm2782, %v3399
    %3464 = vst.msk [vmem:[%s342 + $0x47d] sm:$0x1] %vm2782, %v3400
    %3465 = vst.msk [vmem:[%s342 + $0x48d] sm:$0x1] %vm2782, %v3401
    %3466 = vst.msk [vmem:[%s342 + $0x49d] sm:$0x1] %vm2782, %v3402
    %3467 = vst.msk [vmem:[%s342 + $0x4ad] sm:$0x1] %vm2782, %v3403
    %3468 = vst.msk [vmem:[%s342 + $0x4bd] sm:$0x1] %vm2782, %v3404
    %3469 = vst.msk [vmem:[%s342 + $0x4cd] sm:$0x1] %vm2782, %v3405
    %3470 = vst.msk [vmem:[%s342 + $0x4dd] sm:$0x1] %vm2782, %v3406
    %3471 = vst.msk [vmem:[%s342 + $0x54d] sm:$0x1] %vm2782, %v3407
    %3472 = vst.msk [vmem:[%s342 + $0x55d] sm:$0x1] %vm2782, %v3408
    %3473 = vst.msk [vmem:[%s342 + $0x56d] sm:$0x1] %vm2782, %v3409
    %3474 = vst.msk [vmem:[%s342 + $0x57d] sm:$0x1] %vm2782, %v3410
    %3475 = vst.msk [vmem:[%s342 + $0x58d] sm:$0x1] %vm2782, %v3411
    %3476 = vst.msk [vmem:[%s342 + $0x59d] sm:$0x1] %vm2782, %v3412
    %3477 = vst.msk [vmem:[%s342 + $0x5ad] sm:$0x1] %vm2782, %v3413
    %3478 = vst.msk [vmem:[%s342 + $0x5bd] sm:$0x1] %vm2782, %v3414
    %3479 = vst.msk [vmem:[%s342 + $0x62d] sm:$0x1] %vm2782, %v3415
    %3480 = vst.msk [vmem:[%s342 + $0x63d] sm:$0x1] %vm2782, %v3416
    %3481 = vst.msk [vmem:[%s342 + $0x64d] sm:$0x1] %vm2782, %v3417
    %3482 = vst.msk [vmem:[%s342 + $0x65d] sm:$0x1] %vm2782, %v3418
    %3483 = vst.msk [vmem:[%s342 + $0x66d] sm:$0x1] %vm2782, %v3419
    %3484 = vst.msk [vmem:[%s342 + $0x67d] sm:$0x1] %vm2782, %v3420
    %3485 = vst.msk [vmem:[%s342 + $0x68d] sm:$0x1] %vm2782, %v3421
    %3486 = vst.msk [vmem:[%s342 + $0x69d] sm:$0x1] %vm2782, %v3422
    %s3487 = scalar_lea.vmem %s1, 64
    %v3488 = vld [vmem:[%s3487] sm:$0xff]
    %v3489 = vld [vmem:[%s3487 + $0x8] sm:$0x3f]
    %v3490 = vld [vmem:[%s3487 + $0xe0] sm:$0xff]
    %v3491 = vld [vmem:[%s3487 + $0xe8] sm:$0x3f]
    %v3492 = vld [vmem:[%s3487 + $0x1c0] sm:$0xff]
    %v3493 = vld [vmem:[%s3487 + $0x1c8] sm:$0x3f]
    %v3494 = vld [vmem:[%s3487 + $0x2a0] sm:$0xff]
    %v3495 = vld [vmem:[%s3487 + $0x2a8] sm:$0x3f]
    %v3496 = vld [vmem:[%s3487 + $0x380] sm:$0xff]
    %v3497 = vld [vmem:[%s3487 + $0x388] sm:$0x3f]
    %v3498 = vld [vmem:[%s3487 + $0x460] sm:$0xff]
    %v3499 = vld [vmem:[%s3487 + $0x468] sm:$0x3f]
    %v3500 = vld [vmem:[%s3487 + $0x540] sm:$0xff]
    %v3501 = vld [vmem:[%s3487 + $0x548] sm:$0x3f]
    %v3502 = vld [vmem:[%s3487 + $0x620] sm:$0xff]
    %v3503 = vld [vmem:[%s3487 + $0x628] sm:$0x3f]
    %s3504 = scalar_lea.vmem %s1, 32
    %vm3505 = vcmask 113664
    %3506 = vst.msk [vmem:[%s3504] sm:$0xff] %vm3505, %v3488
    %vm3507 = vcmask 111616
    %3508 = vst.msk [vmem:[%s3504 + $0x8] sm:$0x3f] %vm3507, %v3489
    %3509 = vst.msk [vmem:[%s3504 + $0xe0] sm:$0xff] %vm3505, %v3490
    %3510 = vst.msk [vmem:[%s3504 + $0xe8] sm:$0x3f] %vm3507, %v3491
    %3511 = vst.msk [vmem:[%s3504 + $0x1c0] sm:$0xff] %vm3505, %v3492
    %3512 = vst.msk [vmem:[%s3504 + $0x1c8] sm:$0x3f] %vm3507, %v3493
    %3513 = vst.msk [vmem:[%s3504 + $0x2a0] sm:$0xff] %vm3505, %v3494
    %3514 = vst.msk [vmem:[%s3504 + $0x2a8] sm:$0x3f] %vm3507, %v3495
    %3515 = vst.msk [vmem:[%s3504 + $0x380] sm:$0xff] %vm3505, %v3496
    %3516 = vst.msk [vmem:[%s3504 + $0x388] sm:$0x3f] %vm3507, %v3497
    %3517 = vst.msk [vmem:[%s3504 + $0x460] sm:$0xff] %vm3505, %v3498
    %3518 = vst.msk [vmem:[%s3504 + $0x468] sm:$0x3f] %vm3507, %v3499
    %3519 = vst.msk [vmem:[%s3504 + $0x540] sm:$0xff] %vm3505, %v3500
    %3520 = vst.msk [vmem:[%s3504 + $0x548] sm:$0x3f] %vm3507, %v3501
    %3521 = vst.msk [vmem:[%s3504 + $0x620] sm:$0xff] %vm3505, %v3502
    %3522 = vst.msk [vmem:[%s3504 + $0x628] sm:$0x3f] %vm3507, %v3503
    %s3523 = scalar_lea.vmem %s1, 80
    %v3524 = vld [vmem:[%s3523] sm:$0xff]
    %v3525 = vld [vmem:[%s3523 + $0x8] sm:$0x3f]
    %v3526 = vld [vmem:[%s3523 + $0xe0] sm:$0xff]
    %v3527 = vld [vmem:[%s3523 + $0xe8] sm:$0x3f]
    %v3528 = vld [vmem:[%s3523 + $0x1c0] sm:$0xff]
    %v3529 = vld [vmem:[%s3523 + $0x1c8] sm:$0x3f]
    %v3530 = vld [vmem:[%s3523 + $0x2a0] sm:$0xff]
    %v3531 = vld [vmem:[%s3523 + $0x2a8] sm:$0x3f]
    %v3532 = vld [vmem:[%s3523 + $0x380] sm:$0xff]
    %v3533 = vld [vmem:[%s3523 + $0x388] sm:$0x3f]
    %v3534 = vld [vmem:[%s3523 + $0x460] sm:$0xff]
    %v3535 = vld [vmem:[%s3523 + $0x468] sm:$0x3f]
    %v3536 = vld [vmem:[%s3523 + $0x540] sm:$0xff]
    %v3537 = vld [vmem:[%s3523 + $0x548] sm:$0x3f]
    %v3538 = vld [vmem:[%s3523 + $0x620] sm:$0xff]
    %v3539 = vld [vmem:[%s3523 + $0x628] sm:$0x3f]
    %s3540 = scalar_lea.vmem %s1, 16
    %3541 = vst.msk [vmem:[%s3540] sm:$0xff] %vm3505, %v3524
    %3542 = vst.msk [vmem:[%s3540 + $0x8] sm:$0x3f] %vm3507, %v3525
    %3543 = vst.msk [vmem:[%s3540 + $0xe0] sm:$0xff] %vm3505, %v3526
    %3544 = vst.msk [vmem:[%s3540 + $0xe8] sm:$0x3f] %vm3507, %v3527
    %3545 = vst.msk [vmem:[%s3540 + $0x1c0] sm:$0xff] %vm3505, %v3528
    %3546 = vst.msk [vmem:[%s3540 + $0x1c8] sm:$0x3f] %vm3507, %v3529
    %3547 = vst.msk [vmem:[%s3540 + $0x2a0] sm:$0xff] %vm3505, %v3530
    %3548 = vst.msk [vmem:[%s3540 + $0x2a8] sm:$0x3f] %vm3507, %v3531
    %3549 = vst.msk [vmem:[%s3540 + $0x380] sm:$0xff] %vm3505, %v3532
    %3550 = vst.msk [vmem:[%s3540 + $0x388] sm:$0x3f] %vm3507, %v3533
    %3551 = vst.msk [vmem:[%s3540 + $0x460] sm:$0xff] %vm3505, %v3534
    %3552 = vst.msk [vmem:[%s3540 + $0x468] sm:$0x3f] %vm3507, %v3535
    %3553 = vst.msk [vmem:[%s3540 + $0x540] sm:$0xff] %vm3505, %v3536
    %3554 = vst.msk [vmem:[%s3540 + $0x548] sm:$0x3f] %vm3507, %v3537
    %3555 = vst.msk [vmem:[%s3540 + $0x620] sm:$0xff] %vm3505, %v3538
    %3556 = vst.msk [vmem:[%s3540 + $0x628] sm:$0x3f] %vm3507, %v3539
    %s3557 = scalar_lea.vmem %s1, 96
    %v3558 = vld [vmem:[%s3557] sm:$0xff]
    %v3559 = vld [vmem:[%s3557 + $0x8] sm:$0x3f]
    %v3560 = vld [vmem:[%s3557 + $0xe0] sm:$0xff]
    %v3561 = vld [vmem:[%s3557 + $0xe8] sm:$0x3f]
    %v3562 = vld [vmem:[%s3557 + $0x1c0] sm:$0xff]
    %v3563 = vld [vmem:[%s3557 + $0x1c8] sm:$0x3f]
    %v3564 = vld [vmem:[%s3557 + $0x2a0] sm:$0xff]
    %v3565 = vld [vmem:[%s3557 + $0x2a8] sm:$0x3f]
    %v3566 = vld [vmem:[%s3557 + $0x380] sm:$0xff]
    %v3567 = vld [vmem:[%s3557 + $0x388] sm:$0x3f]
    %v3568 = vld [vmem:[%s3557 + $0x460] sm:$0xff]
    %v3569 = vld [vmem:[%s3557 + $0x468] sm:$0x3f]
    %v3570 = vld [vmem:[%s3557 + $0x540] sm:$0xff]
    %v3571 = vld [vmem:[%s3557 + $0x548] sm:$0x3f]
    %v3572 = vld [vmem:[%s3557 + $0x620] sm:$0xff]
    %v3573 = vld [vmem:[%s3557 + $0x628] sm:$0x3f]
    %3574 = vst.msk [vmem:[%s1] sm:$0xff] %vm3505, %v3558
    %3575 = vst.msk [vmem:[%s1 + $0x8] sm:$0x3f] %vm3507, %v3559
    %3576 = vst.msk [vmem:[%s1 + $0xe0] sm:$0xff] %vm3505, %v3560
    %3577 = vst.msk [vmem:[%s1 + $0xe8] sm:$0x3f] %vm3507, %v3561
    %3578 = vst.msk [vmem:[%s1 + $0x1c0] sm:$0xff] %vm3505, %v3562
    %3579 = vst.msk [vmem:[%s1 + $0x1c8] sm:$0x3f] %vm3507, %v3563
    %3580 = vst.msk [vmem:[%s1 + $0x2a0] sm:$0xff] %vm3505, %v3564
    %3581 = vst.msk [vmem:[%s1 + $0x2a8] sm:$0x3f] %vm3507, %v3565
    %3582 = vst.msk [vmem:[%s1 + $0x380] sm:$0xff] %vm3505, %v3566
    %3583 = vst.msk [vmem:[%s1 + $0x388] sm:$0x3f] %vm3507, %v3567
    %3584 = vst.msk [vmem:[%s1 + $0x460] sm:$0xff] %vm3505, %v3568
    %3585 = vst.msk [vmem:[%s1 + $0x468] sm:$0x3f] %vm3507, %v3569
    %3586 = vst.msk [vmem:[%s1 + $0x540] sm:$0xff] %vm3505, %v3570
    %3587 = vst.msk [vmem:[%s1 + $0x548] sm:$0x3f] %vm3507, %v3571
    %3588 = vst.msk [vmem:[%s1 + $0x620] sm:$0xff] %vm3505, %v3572
    %3589 = vst.msk [vmem:[%s1 + $0x628] sm:$0x3f] %vm3507, %v3573
    %s3590 = scalar_lea.vmem %s1, 144
    %v3591 = vld [vmem:[%s3590] sm:$0xff]
    %v3592 = vld [vmem:[%s3590 + $0x8] sm:$0x3f]
    %v3593 = vld [vmem:[%s3590 + $0xe0] sm:$0xff]
    %v3594 = vld [vmem:[%s3590 + $0xe8] sm:$0x3f]
    %v3595 = vld [vmem:[%s3590 + $0x1c0] sm:$0xff]
    %v3596 = vld [vmem:[%s3590 + $0x1c8] sm:$0x3f]
    %v3597 = vld [vmem:[%s3590 + $0x2a0] sm:$0xff]
    %v3598 = vld [vmem:[%s3590 + $0x2a8] sm:$0x3f]
    %v3599 = vld [vmem:[%s3590 + $0x380] sm:$0xff]
    %v3600 = vld [vmem:[%s3590 + $0x388] sm:$0x3f]
    %v3601 = vld [vmem:[%s3590 + $0x460] sm:$0xff]
    %v3602 = vld [vmem:[%s3590 + $0x468] sm:$0x3f]
    %v3603 = vld [vmem:[%s3590 + $0x540] sm:$0xff]
    %v3604 = vld [vmem:[%s3590 + $0x548] sm:$0x3f]
    %v3605 = vld [vmem:[%s3590 + $0x620] sm:$0xff]
    %v3606 = vld [vmem:[%s3590 + $0x628] sm:$0x3f]
    %s3607 = scalar_lea.vmem %s1, 176
    %3608 = vst.msk [vmem:[%s3607] sm:$0xff] %vm3505, %v3591
    %3609 = vst.msk [vmem:[%s3607 + $0x8] sm:$0x3f] %vm3507, %v3592
    %3610 = vst.msk [vmem:[%s3607 + $0xe0] sm:$0xff] %vm3505, %v3593
    %3611 = vst.msk [vmem:[%s3607 + $0xe8] sm:$0x3f] %vm3507, %v3594
    %3612 = vst.msk [vmem:[%s3607 + $0x1c0] sm:$0xff] %vm3505, %v3595
    %3613 = vst.msk [vmem:[%s3607 + $0x1c8] sm:$0x3f] %vm3507, %v3596
    %3614 = vst.msk [vmem:[%s3607 + $0x2a0] sm:$0xff] %vm3505, %v3597
    %3615 = vst.msk [vmem:[%s3607 + $0x2a8] sm:$0x3f] %vm3507, %v3598
    %3616 = vst.msk [vmem:[%s3607 + $0x380] sm:$0xff] %vm3505, %v3599
    %3617 = vst.msk [vmem:[%s3607 + $0x388] sm:$0x3f] %vm3507, %v3600
    %3618 = vst.msk [vmem:[%s3607 + $0x460] sm:$0xff] %vm3505, %v3601
    %3619 = vst.msk [vmem:[%s3607 + $0x468] sm:$0x3f] %vm3507, %v3602
    %3620 = vst.msk [vmem:[%s3607 + $0x540] sm:$0xff] %vm3505, %v3603
    %3621 = vst.msk [vmem:[%s3607 + $0x548] sm:$0x3f] %vm3507, %v3604
    %3622 = vst.msk [vmem:[%s3607 + $0x620] sm:$0xff] %vm3505, %v3605
    %3623 = vst.msk [vmem:[%s3607 + $0x628] sm:$0x3f] %vm3507, %v3606
    %s3624 = scalar_lea.vmem %s1, 128
    %v3625 = vld [vmem:[%s3624] sm:$0xff]
    %v3626 = vld [vmem:[%s3624 + $0x8] sm:$0x3f]
    %v3627 = vld [vmem:[%s3624 + $0xe0] sm:$0xff]
    %v3628 = vld [vmem:[%s3624 + $0xe8] sm:$0x3f]
    %v3629 = vld [vmem:[%s3624 + $0x1c0] sm:$0xff]
    %v3630 = vld [vmem:[%s3624 + $0x1c8] sm:$0x3f]
    %v3631 = vld [vmem:[%s3624 + $0x2a0] sm:$0xff]
    %v3632 = vld [vmem:[%s3624 + $0x2a8] sm:$0x3f]
    %v3633 = vld [vmem:[%s3624 + $0x380] sm:$0xff]
    %v3634 = vld [vmem:[%s3624 + $0x388] sm:$0x3f]
    %v3635 = vld [vmem:[%s3624 + $0x460] sm:$0xff]
    %v3636 = vld [vmem:[%s3624 + $0x468] sm:$0x3f]
    %v3637 = vld [vmem:[%s3624 + $0x540] sm:$0xff]
    %v3638 = vld [vmem:[%s3624 + $0x548] sm:$0x3f]
    %v3639 = vld [vmem:[%s3624 + $0x620] sm:$0xff]
    %v3640 = vld [vmem:[%s3624 + $0x628] sm:$0x3f]
    %s3641 = scalar_lea.vmem %s1, 192
    %3642 = vst.msk [vmem:[%s3641] sm:$0xff] %vm3505, %v3625
    %3643 = vst.msk [vmem:[%s3641 + $0x8] sm:$0x3f] %vm3507, %v3626
    %3644 = vst.msk [vmem:[%s3641 + $0xe0] sm:$0xff] %vm3505, %v3627
    %3645 = vst.msk [vmem:[%s3641 + $0xe8] sm:$0x3f] %vm3507, %v3628
    %3646 = vst.msk [vmem:[%s3641 + $0x1c0] sm:$0xff] %vm3505, %v3629
    %3647 = vst.msk [vmem:[%s3641 + $0x1c8] sm:$0x3f] %vm3507, %v3630
    %3648 = vst.msk [vmem:[%s3641 + $0x2a0] sm:$0xff] %vm3505, %v3631
    %3649 = vst.msk [vmem:[%s3641 + $0x2a8] sm:$0x3f] %vm3507, %v3632
    %3650 = vst.msk [vmem:[%s3641 + $0x380] sm:$0xff] %vm3505, %v3633
    %3651 = vst.msk [vmem:[%s3641 + $0x388] sm:$0x3f] %vm3507, %v3634
    %3652 = vst.msk [vmem:[%s3641 + $0x460] sm:$0xff] %vm3505, %v3635
    %3653 = vst.msk [vmem:[%s3641 + $0x468] sm:$0x3f] %vm3507, %v3636
    %3654 = vst.msk [vmem:[%s3641 + $0x540] sm:$0xff] %vm3505, %v3637
    %3655 = vst.msk [vmem:[%s3641 + $0x548] sm:$0x3f] %vm3507, %v3638
    %3656 = vst.msk [vmem:[%s3641 + $0x620] sm:$0xff] %vm3505, %v3639
    %3657 = vst.msk [vmem:[%s3641 + $0x628] sm:$0x3f] %vm3507, %v3640
    %s3658 = scalar_lea.vmem %s1, 112
    %v3659 = vld [vmem:[%s3658] sm:$0xff]
    %v3660 = vld [vmem:[%s3658 + $0x8] sm:$0x3f]
    %v3661 = vld [vmem:[%s3658 + $0xe0] sm:$0xff]
    %v3662 = vld [vmem:[%s3658 + $0xe8] sm:$0x3f]
    %v3663 = vld [vmem:[%s3658 + $0x1c0] sm:$0xff]
    %v3664 = vld [vmem:[%s3658 + $0x1c8] sm:$0x3f]
    %v3665 = vld [vmem:[%s3658 + $0x2a0] sm:$0xff]
    %v3666 = vld [vmem:[%s3658 + $0x2a8] sm:$0x3f]
    %v3667 = vld [vmem:[%s3658 + $0x380] sm:$0xff]
    %v3668 = vld [vmem:[%s3658 + $0x388] sm:$0x3f]
    %v3669 = vld [vmem:[%s3658 + $0x460] sm:$0xff]
    %v3670 = vld [vmem:[%s3658 + $0x468] sm:$0x3f]
    %v3671 = vld [vmem:[%s3658 + $0x540] sm:$0xff]
    %v3672 = vld [vmem:[%s3658 + $0x548] sm:$0x3f]
    %v3673 = vld [vmem:[%s3658 + $0x620] sm:$0xff]
    %v3674 = vld [vmem:[%s3658 + $0x628] sm:$0x3f]
    %s3675 = scalar_lea.vmem %s1, 208
    %3676 = vst.msk [vmem:[%s3675] sm:$0xff] %vm3505, %v3659
    %3677 = vst.msk [vmem:[%s3675 + $0x8] sm:$0x3f] %vm3507, %v3660
    %3678 = vst.msk [vmem:[%s3675 + $0xe0] sm:$0xff] %vm3505, %v3661
    %3679 = vst.msk [vmem:[%s3675 + $0xe8] sm:$0x3f] %vm3507, %v3662
    %3680 = vst.msk [vmem:[%s3675 + $0x1c0] sm:$0xff] %vm3505, %v3663
    %3681 = vst.msk [vmem:[%s3675 + $0x1c8] sm:$0x3f] %vm3507, %v3664
    %3682 = vst.msk [vmem:[%s3675 + $0x2a0] sm:$0xff] %vm3505, %v3665
    %3683 = vst.msk [vmem:[%s3675 + $0x2a8] sm:$0x3f] %vm3507, %v3666
    %3684 = vst.msk [vmem:[%s3675 + $0x380] sm:$0xff] %vm3505, %v3667
    %3685 = vst.msk [vmem:[%s3675 + $0x388] sm:$0x3f] %vm3507, %v3668
    %3686 = vst.msk [vmem:[%s3675 + $0x460] sm:$0xff] %vm3505, %v3669
    %3687 = vst.msk [vmem:[%s3675 + $0x468] sm:$0x3f] %vm3507, %v3670
    %3688 = vst.msk [vmem:[%s3675 + $0x540] sm:$0xff] %vm3505, %v3671
    %3689 = vst.msk [vmem:[%s3675 + $0x548] sm:$0x3f] %vm3507, %v3672
    %3690 = vst.msk [vmem:[%s3675 + $0x620] sm:$0xff] %vm3505, %v3673
    %3691 = vst.msk [vmem:[%s3675 + $0x628] sm:$0x3f] %vm3507, %v3674
    // Predicated region
    $region10: #{tpu_custom_call.1} parent=1 // pred_check
      _
    $region11: #{tpu_custom_call.1} parent=1 // pred_check_branch
      %3693 = sbr.rel (0) target = $region13
    $region12: #{tpu_custom_call.1} parent=1 // pred_region
      _
    $region13: #{tpu_custom_call.1} parent=1 // pred_fallthru
      _
    // Predicated region
    $region14: #{tpu_custom_call.1} parent=1 // pred_check
      _
    $region15: #{tpu_custom_call.1} parent=1 // pred_check_branch
      %3695 = sbr.rel (0) target = $region17
    $region16: #{tpu_custom_call.1} parent=1 // pred_region
      _
    $region17: #{tpu_custom_call.1} parent=1 // pred_fallthru
      _
    %3696 = vsyncpa [#allocation3], 1

</llo_original>
